<compile_context>
chip_gen: v5e
topology: v5e:2x2
jax: 0.10.0
libtpu: 0.0.40
codegen_flags: <defaults>
</compile_context>

<pallas_src>
import jax
import jax.numpy as jnp
import numpy as np
from jax.experimental import pallas as pl
from jax.experimental.pallas import tpu as pltpu

INPUT_SIZE = 75
HIDDEN_SIZE = 64
NUM_LAYERS = 4
NUM_CLASSES = 11
LANE = 128  # pad the 75-wide feature dim (and the 11-wide output) to full lanes


# ------------------------------ Pallas kernel -------------------------------

def _make_kernel(T, Bp):
    """Build the fused kernel for static (T, padded-batch) sizes."""
    H = HIDDEN_SIZE
    L = NUM_LAYERS
    G = 4 * H

    def kernel(*refs):
        # refs layout:
        #   [0]                 x2d        (T*Bp, 128)   row = t*Bp + b
        #   [1:4]               layer 0:   w_ih0 (128, 4H), w_hh0 (H, 4H), b0 (1, 4H)
        #   [4 : 4+2(L-1)]      layers 1..L-1: (w_cat_l (2H, 4H), b_l (1, 4H))
        #   [.. +0 / +1]        w_fc (H, 128), b_fc (1, 128)
        #   next                out (Bp, 128)
        #   last                xproj scratch (T*Bp, 4H)
        x_ref = refs[0]
        wih0_ref, whh0_ref, b0_ref = refs[1:4]
        cat_refs = refs[4:4 + 2 * (L - 1)]
        wfc_ref = refs[4 + 2 * (L - 1)]
        bfc_ref = refs[5 + 2 * (L - 1)]
        out_ref = refs[6 + 2 * (L - 1)]
        xproj_ref = refs[7 + 2 * (L - 1)]

        f32 = jnp.float32

        # Layer-0 input projection for ALL timesteps: one batched MXU matmul,
        # completely off the recurrent critical path (bias already folded).
        xproj_ref[...] = (
            jnp.dot(x_ref[...], wih0_ref[...], preferred_element_type=f32)
            + b0_ref[...]
        )

        # Hoist layer-1..3 bias broadcasts out of the wavefront loop
        # (JAX does not CSE broadcast_in_dim).
        b_bc = [None] + [
            jnp.broadcast_to(cat_refs[2 * (l - 1) + 1][...], (Bp, G))
            for l in range(1, L)
        ]

        zeros = jnp.zeros((Bp, H), f32)
        h = [zeros] * L            # vreg-resident carries (no VMEM round trips)
        c = [zeros] * L

        def cell(gates, c_prev):
            # gate column order (permuted host-side): [i, f, o, g]
            sfo = jax.nn.sigmoid(gates[:, : 3 * H])      # i, f, o in one shot
            g_g = jnp.tanh(gates[:, 3 * H:])
            i_g = sfo[:, 0 * H:1 * H]
            f_g = sfo[:, 1 * H:2 * H]
            o_g = sfo[:, 2 * H:3 * H]
            c_new = f_g * c_prev + i_g * g_g
            h_new = o_g * jnp.tanh(c_new)
            return h_new, c_new

        # Wavefront schedule: at step s, layer l processes timestep t = s - l.
        # Cells active within one step are independent -> up to 4-way ILP.
        for s in range(T + L - 1):
            h_old = list(h)                 # snapshot: read pre-step values
            for l in range(L):
                t = s - l
                if not (0 <= t < T):
                    continue
                if l == 0:
                    # hoisted x-projection + recurrent matmul (K = H)
                    gates = xproj_ref[t * Bp:(t + 1) * Bp, :] + jnp.dot(
                        h_old[0], whh0_ref[...], preferred_element_type=f32)
                else:
                    # fused [h_below ; h_prev] @ [[W_ih],[W_hh]]  (K = 2H = 128)
                    hx = jnp.concatenate([h_old[l - 1], h_old[l]], axis=-1)
                    gates = jnp.dot(
                        hx, cat_refs[2 * (l - 1)][...],
                        preferred_element_type=f32) + b_bc[l]
                h[l], c[l] = cell(gates, c[l])

        # Final Linear head on the last timestep's hidden state of the top layer.
        out_ref[...] = (
            jnp.dot(h[L - 1], wfc_ref[...], preferred_element_type=f32)
            + bfc_ref[...]
        ).astype(out_ref.dtype)

    return kernel


# --------------------------------- wrapper ----------------------------------

def _full_spec(shape):
    zeros = (0,) * len(shape)
    return pl.BlockSpec(shape, lambda *_: zeros)


def _permute_gate_cols(w):
    """Reorder gate column blocks from PyTorch's [i, f, g, o] to [i, f, o, g]."""
    H = HIDDEN_SIZE
    return jnp.concatenate([w[:, :2 * H], w[:, 3 * H:4 * H], w[:, 2 * H:3 * H]],
                           axis=1)


def _lstm_model_forward(x_bsd, params):
    """Reproduces LSTMModel.forward.  x_bsd: (B, T, input_size) -> (B, num_classes)."""
    B, T, D = x_bsd.shape
    H, C, L = HIDDEN_SIZE, NUM_CLASSES, NUM_LAYERS
    Bp = ((B + 7) // 8) * 8                       # full (8, 128) sublane tiles
    d_pad = LANE - D

    # Pad feature dim to 128 lanes, batch to Bp rows; flatten time-major
    # (row index of x2d is t * Bp + b).  Zero pad rows/lanes have no effect
    # on the real rows (batch rows are independent; padded W_ih rows are zero).
    x_p = jnp.pad(x_bsd, ((0, Bp - B), (0, 0), (0, d_pad)))
    x2d = jnp.transpose(x_p, (1, 0, 2)).reshape(T * Bp, LANE)

    p0 = params["lstm"][0]
    wih0 = jnp.pad(_permute_gate_cols(p0["w_ih_t"]), ((0, d_pad), (0, 0)))
    whh0 = _permute_gate_cols(p0["w_hh_t"])
    b0 = _permute_gate_cols(p0["b"])

    flat = [x2d, wih0, whh0, b0]
    for l in range(1, L):
        p = params["lstm"][l]
        w_cat = jnp.concatenate(
            [_permute_gate_cols(p["w_ih_t"]), _permute_gate_cols(p["w_hh_t"])],
            axis=0)                                           # (2H, 4H)
        flat += [w_cat, _permute_gate_cols(p["b"])]

    w_fc = jnp.pad(params["fc"]["w_t"], ((0, 0), (0, LANE - C)))   # (H, 128)
    b_fc = jnp.pad(params["fc"]["b"], ((0, 0), (0, LANE - C)))     # (1, 128)
    flat += [w_fc, b_fc]

    out = pl.pallas_call(
        _make_kernel(T, Bp),
        out_shape=jax.ShapeDtypeStruct((Bp, LANE), jnp.float32),
        in_specs=[_full_spec(a.shape) for a in flat],
        out_specs=_full_spec((Bp, LANE)),
        scratch_shapes=[
            pltpu.VMEM((T * Bp, 4 * H), jnp.float32),   # hoisted layer-0 x-projection
        ],
    )(*flat)
    return out[:B, :C]


lstm_model_forward = jax.jit(_lstm_model_forward)


# ------------------------- parameter initialization -------------------------

def init_params(key):
    """Deterministic params matching nn.LSTM / nn.Linear shapes (PyTorch-style
    uniform(-1/sqrt(H), 1/sqrt(H)) init).  Gate order stored as [i, f, g, o];
    the wrapper permutes/fuses as needed."""
    params = {"lstm": [], "fc": {}}
    bound = 1.0 / np.sqrt(HIDDEN_SIZE)
    for layer in range(NUM_LAYERS):
        d_in = INPUT_SIZE if layer == 0 else HIDDEN_SIZE
        key, k1, k2, k3, k4 = jax.random.split(key, 5)
        w_ih = jax.random.uniform(k1, (4 * HIDDEN_SIZE, d_in), jnp.float32,
                                  -bound, bound)
        w_hh = jax.random.uniform(k2, (4 * HIDDEN_SIZE, HIDDEN_SIZE),
                                  jnp.float32, -bound, bound)
        b_ih = jax.random.uniform(k3, (4 * HIDDEN_SIZE,), jnp.float32,
                                  -bound, bound)
        b_hh = jax.random.uniform(k4, (4 * HIDDEN_SIZE,), jnp.float32,
                                  -bound, bound)
        params["lstm"].append({
            "w_ih_t": w_ih.T,                           # (D, 4H)
            "w_hh_t": w_hh.T,                           # (H, 4H)
            "b": (b_ih + b_hh).reshape(1, 4 * HIDDEN_SIZE),
        })
    key, k1, k2 = jax.random.split(key, 3)
    fb = 1.0 / np.sqrt(HIDDEN_SIZE)
    w_fc = jax.random.uniform(k1, (NUM_CLASSES, HIDDEN_SIZE), jnp.float32,
                              -fb, fb)
    b_fc = jax.random.uniform(k2, (NUM_CLASSES,), jnp.float32, -fb, fb)
    params["fc"]["w_t"] = w_fc.T                        # (H, C)
    params["fc"]["b"] = b_fc.reshape(1, NUM_CLASSES)
    return params


# ------------------------------ reference -----------------------------------

def _ref_forward(x_bsd, params):
    """Pure-JAX reference with identical semantics (PyTorch LSTM equations)."""
    x = jnp.transpose(x_bsd, (1, 0, 2))  # (T, B, D)
    T, B, _ = x.shape
    H = HIDDEN_SIZE
    for layer in range(NUM_LAYERS):
        p = params["lstm"][layer]
        h = jnp.zeros((B, H), jnp.float32)
        c = jnp.zeros((B, H), jnp.float32)
        outs = []
        for t in range(T):
            gates = x[t] @ p["w_ih_t"] + h @ p["w_hh_t"] + p["b"]
            i = jax.nn.sigmoid(gates[:, 0:H])
            f = jax.nn.sigmoid(gates[:, H:2 * H])
            g = jnp.tanh(gates[:, 2 * H:3 * H])
            o = jax.nn.sigmoid(gates[:, 3 * H:4 * H])
            c = f * c + i * g
            h = o * jnp.tanh(c)
            outs.append(h)
        x = jnp.stack(outs, axis=0)
    return x[-1] @ params["fc"]["w_t"] + params["fc"]["b"]


# --------------------------------- main --------------------------------------

if __name__ == "__main__":
    key = jax.random.PRNGKey(0)
    k_param, k_x = jax.random.split(key)

    params = init_params(k_param)

    batch, seq = 4, 8
    x = jax.random.normal(k_x, (batch, seq, INPUT_SIZE), jnp.float32)

    out = lstm_model_forward(x, params)
    out = jax.block_until_ready(out)
    assert out.shape == (batch, NUM_CLASSES), out.shape

    ref = _ref_forward(x, params)
    np.testing.assert_allclose(np.asarray(out), np.asarray(ref),
                               rtol=1e-4, atol=1e-4)

    print("KERNEL_OK")
</pallas_src>

<mosaic_0001>
module attributes {stable_mosaic.version = 11 : i64} {
  func.func @kernel(%arg0: memref<64x128xf32, #tpu.memory_space<vmem>>, %arg1: memref<128x256xf32, #tpu.memory_space<vmem>>, %arg2: memref<64x256xf32, #tpu.memory_space<vmem>>, %arg3: memref<1x256xf32, #tpu.memory_space<vmem>>, %arg4: memref<128x256xf32, #tpu.memory_space<vmem>>, %arg5: memref<1x256xf32, #tpu.memory_space<vmem>>, %arg6: memref<128x256xf32, #tpu.memory_space<vmem>>, %arg7: memref<1x256xf32, #tpu.memory_space<vmem>>, %arg8: memref<128x256xf32, #tpu.memory_space<vmem>>, %arg9: memref<1x256xf32, #tpu.memory_space<vmem>>, %arg10: memref<64x128xf32, #tpu.memory_space<vmem>>, %arg11: memref<1x128xf32, #tpu.memory_space<vmem>>, %arg12: memref<8x128xf32, #tpu.memory_space<vmem>>, %arg13: memref<64x256xf32, #tpu.memory_space<vmem>>) attributes {dimension_semantics = [], scalar_prefetch = 0 : i64, scratch_operands = 1 : i64, tpu.core_type = #tpu.core_type<tc>} {
    %c0 = arith.constant 0 : index
    %c0_0 = arith.constant 0 : index
    %0 = vector.load %arg0[%c0, %c0_0] : memref<64x128xf32, #tpu.memory_space<vmem>>, vector<64x128xf32>
    %c0_1 = arith.constant 0 : index
    %c0_2 = arith.constant 0 : index
    %1 = vector.load %arg1[%c0_1, %c0_2] : memref<128x256xf32, #tpu.memory_space<vmem>>, vector<128x256xf32>
    %cst = arith.constant dense<0.000000e+00> : vector<64x256xf32>
    %2 = tpu.matmul %0, %1, %cst {dimension_numbers = #tpu.dot_dimension_numbers<[1], [0], [0], [1], [0, 0, 1, 1], [], []>} : vector<64x128xf32>, vector<128x256xf32>, vector<64x256xf32> -> vector<64x256xf32>
    %c0_3 = arith.constant 0 : index
    %c0_4 = arith.constant 0 : index
    %3 = vector.load %arg3[%c0_3, %c0_4] : memref<1x256xf32, #tpu.memory_space<vmem>>, vector<1x256xf32>
    %4 = vector.broadcast %3 : vector<1x256xf32> to vector<64x256xf32>
    %5 = arith.addf %2, %4 : vector<64x256xf32>
    %c0_5 = arith.constant 0 : index
    %c0_6 = arith.constant 0 : index
    %6 = vector.load %arg13[%c0_5, %c0_6] : memref<64x256xf32, #tpu.memory_space<vmem>>, vector<64x256xf32>
    tpu.vector_store %arg13[%c0_5, %c0_6], %5 {strides = array<i32>} : memref<64x256xf32, #tpu.memory_space<vmem>>, vector<64x256xf32>,
    %c0_7 = arith.constant 0 : index
    %c0_8 = arith.constant 0 : index
    %7 = vector.load %arg5[%c0_7, %c0_8] : memref<1x256xf32, #tpu.memory_space<vmem>>, vector<1x256xf32>
    %8 = vector.shape_cast %7 : vector<1x256xf32> to vector<1x256xf32>
    %9 = vector.broadcast %8 : vector<1x256xf32> to vector<8x256xf32>
    %c0_9 = arith.constant 0 : index
    %c0_10 = arith.constant 0 : index
    %10 = vector.load %arg7[%c0_9, %c0_10] : memref<1x256xf32, #tpu.memory_space<vmem>>, vector<1x256xf32>
    %11 = vector.shape_cast %10 : vector<1x256xf32> to vector<1x256xf32>
    %12 = vector.broadcast %11 : vector<1x256xf32> to vector<8x256xf32>
    %c0_11 = arith.constant 0 : index
    %c0_12 = arith.constant 0 : index
    %13 = vector.load %arg9[%c0_11, %c0_12] : memref<1x256xf32, #tpu.memory_space<vmem>>, vector<1x256xf32>
    %14 = vector.shape_cast %13 : vector<1x256xf32> to vector<1x256xf32>
    %15 = vector.broadcast %14 : vector<1x256xf32> to vector<8x256xf32>
    %cst_13 = arith.constant 0.000000e+00 : f32
    %16 = vector.broadcast %cst_13 : f32 to vector<8x64xf32>
    %c0_14 = arith.constant 0 : index
    %c0_15 = arith.constant 0 : index
    %17 = vector.load %arg13[%c0_14, %c0_15] : memref<64x256xf32, #tpu.memory_space<vmem>>, vector<8x256xf32>
    %c0_16 = arith.constant 0 : index
    %c0_17 = arith.constant 0 : index
    %18 = vector.load %arg2[%c0_16, %c0_17] : memref<64x256xf32, #tpu.memory_space<vmem>>, vector<64x256xf32>
    %cst_18 = arith.constant dense<0.000000e+00> : vector<8x256xf32>
    %19 = tpu.matmul %16, %18, %cst_18 {dimension_numbers = #tpu.dot_dimension_numbers<[1], [0], [0], [1], [0, 0, 1, 1], [], []>} : vector<8x64xf32>, vector<64x256xf32>, vector<8x256xf32> -> vector<8x256xf32>
    %20 = arith.addf %17, %19 : vector<8x256xf32>
    %21 = vector.extract_strided_slice %20 {offsets = [0, 0], sizes = [8, 192], strides = [1, 1]} : vector<8x256xf32> to vector<8x192xf32>
    %22 = arith.negf %21 : vector<8x192xf32>
    %23 = math.exp %22 : vector<8x192xf32>
    %cst_19 = arith.constant 1.000000e+00 : f32
    %24 = vector.broadcast %cst_19 : f32 to vector<8x192xf32>
    %25 = arith.addf %24, %23 : vector<8x192xf32>
    %26 = arith.divf %24, %25 : vector<8x192xf32>
    %27 = vector.extract_strided_slice %20 {offsets = [0, 192], sizes = [8, 64], strides = [1, 1]} : vector<8x256xf32> to vector<8x64xf32>
    %28 = math.tanh %27 : vector<8x64xf32>
    %29 = vector.extract_strided_slice %26 {offsets = [0, 0], sizes = [8, 64], strides = [1, 1]} : vector<8x192xf32> to vector<8x64xf32>
    %30 = vector.extract_strided_slice %26 {offsets = [0, 64], sizes = [8, 64], strides = [1, 1]} : vector<8x192xf32> to vector<8x64xf32>
    %31 = vector.extract_strided_slice %26 {offsets = [0, 128], sizes = [8, 64], strides = [1, 1]} : vector<8x192xf32> to vector<8x64xf32>
    %32 = arith.mulf %30, %16 : vector<8x64xf32>
    %33 = arith.mulf %29, %28 : vector<8x64xf32>
    %34 = arith.addf %32, %33 : vector<8x64xf32>
    %35 = math.tanh %34 : vector<8x64xf32>
    %36 = arith.mulf %31, %35 : vector<8x64xf32>
    %c8 = arith.constant 8 : index
    %c0_20 = arith.constant 0 : index
    %37 = vector.load %arg13[%c8, %c0_20] : memref<64x256xf32, #tpu.memory_space<vmem>>, vector<8x256xf32>
    %c0_21 = arith.constant 0 : index
    %c0_22 = arith.constant 0 : index
    %38 = vector.load %arg2[%c0_21, %c0_22] : memref<64x256xf32, #tpu.memory_space<vmem>>, vector<64x256xf32>
    %cst_23 = arith.constant dense<0.000000e+00> : vector<8x256xf32>
    %39 = tpu.matmul %36, %38, %cst_23 {dimension_numbers = #tpu.dot_dimension_numbers<[1], [0], [0], [1], [0, 0, 1, 1], [], []>} : vector<8x64xf32>, vector<64x256xf32>, vector<8x256xf32> -> vector<8x256xf32>
    %40 = arith.addf %37, %39 : vector<8x256xf32>
    %41 = vector.extract_strided_slice %40 {offsets = [0, 0], sizes = [8, 192], strides = [1, 1]} : vector<8x256xf32> to vector<8x192xf32>
    %42 = arith.negf %41 : vector<8x192xf32>
    %43 = math.exp %42 : vector<8x192xf32>
    %cst_24 = arith.constant 1.000000e+00 : f32
    %44 = vector.broadcast %cst_24 : f32 to vector<8x192xf32>
    %45 = arith.addf %44, %43 : vector<8x192xf32>
    %46 = arith.divf %44, %45 : vector<8x192xf32>
    %47 = vector.extract_strided_slice %40 {offsets = [0, 192], sizes = [8, 64], strides = [1, 1]} : vector<8x256xf32> to vector<8x64xf32>
    %48 = math.tanh %47 : vector<8x64xf32>
    %49 = vector.extract_strided_slice %46 {offsets = [0, 0], sizes = [8, 64], strides = [1, 1]} : vector<8x192xf32> to vector<8x64xf32>
    %50 = vector.extract_strided_slice %46 {offsets = [0, 64], sizes = [8, 64], strides = [1, 1]} : vector<8x192xf32> to vector<8x64xf32>
    %51 = vector.extract_strided_slice %46 {offsets = [0, 128], sizes = [8, 64], strides = [1, 1]} : vector<8x192xf32> to vector<8x64xf32>
    %52 = arith.mulf %50, %34 : vector<8x64xf32>
    %53 = arith.mulf %49, %48 : vector<8x64xf32>
    %54 = arith.addf %52, %53 : vector<8x64xf32>
    %55 = math.tanh %54 : vector<8x64xf32>
    %56 = arith.mulf %51, %55 : vector<8x64xf32>
    %57 = tpu.concatenate %36, %16 in 1 : vector<8x64xf32>, vector<8x64xf32> -> vector<8x128xf32>
    %c0_25 = arith.constant 0 : index
    %c0_26 = arith.constant 0 : index
    %58 = vector.load %arg4[%c0_25, %c0_26] : memref<128x256xf32, #tpu.memory_space<vmem>>, vector<128x256xf32>
    %cst_27 = arith.constant dense<0.000000e+00> : vector<8x256xf32>
    %59 = tpu.matmul %57, %58, %cst_27 {dimension_numbers = #tpu.dot_dimension_numbers<[1], [0], [0], [1], [0, 0, 1, 1], [], []>} : vector<8x128xf32>, vector<128x256xf32>, vector<8x256xf32> -> vector<8x256xf32>
    %60 = arith.addf %59, %9 : vector<8x256xf32>
    %61 = vector.extract_strided_slice %60 {offsets = [0, 0], sizes = [8, 192], strides = [1, 1]} : vector<8x256xf32> to vector<8x192xf32>
    %62 = arith.negf %61 : vector<8x192xf32>
    %63 = math.exp %62 : vector<8x192xf32>
    %cst_28 = arith.constant 1.000000e+00 : f32
    %64 = vector.broadcast %cst_28 : f32 to vector<8x192xf32>
    %65 = arith.addf %64, %63 : vector<8x192xf32>
    %66 = arith.divf %64, %65 : vector<8x192xf32>
    %67 = vector.extract_strided_slice %60 {offsets = [0, 192], sizes = [8, 64], strides = [1, 1]} : vector<8x256xf32> to vector<8x64xf32>
    %68 = math.tanh %67 : vector<8x64xf32>
    %69 = vector.extract_strided_slice %66 {offsets = [0, 0], sizes = [8, 64], strides = [1, 1]} : vector<8x192xf32> to vector<8x64xf32>
    %70 = vector.extract_strided_slice %66 {offsets = [0, 64], sizes = [8, 64], strides = [1, 1]} : vector<8x192xf32> to vector<8x64xf32>
    %71 = vector.extract_strided_slice %66 {offsets = [0, 128], sizes = [8, 64], strides = [1, 1]} : vector<8x192xf32> to vector<8x64xf32>
    %72 = arith.mulf %70, %16 : vector<8x64xf32>
    %73 = arith.mulf %69, %68 : vector<8x64xf32>
    %74 = arith.addf %72, %73 : vector<8x64xf32>
    %75 = math.tanh %74 : vector<8x64xf32>
    %76 = arith.mulf %71, %75 : vector<8x64xf32>
    %c16 = arith.constant 16 : index
    %c0_29 = arith.constant 0 : index
    %77 = vector.load %arg13[%c16, %c0_29] : memref<64x256xf32, #tpu.memory_space<vmem>>, vector<8x256xf32>
    %c0_30 = arith.constant 0 : index
    %c0_31 = arith.constant 0 : index
    %78 = vector.load %arg2[%c0_30, %c0_31] : memref<64x256xf32, #tpu.memory_space<vmem>>, vector<64x256xf32>
    %cst_32 = arith.constant dense<0.000000e+00> : vector<8x256xf32>
    %79 = tpu.matmul %56, %78, %cst_32 {dimension_numbers = #tpu.dot_dimension_numbers<[1], [0], [0], [1], [0, 0, 1, 1], [], []>} : vector<8x64xf32>, vector<64x256xf32>, vector<8x256xf32> -> vector<8x256xf32>
    %80 = arith.addf %77, %79 : vector<8x256xf32>
    %81 = vector.extract_strided_slice %80 {offsets = [0, 0], sizes = [8, 192], strides = [1, 1]} : vector<8x256xf32> to vector<8x192xf32>
    %82 = arith.negf %81 : vector<8x192xf32>
    %83 = math.exp %82 : vector<8x192xf32>
    %cst_33 = arith.constant 1.000000e+00 : f32
    %84 = vector.broadcast %cst_33 : f32 to vector<8x192xf32>
    %85 = arith.addf %84, %83 : vector<8x192xf32>
    %86 = arith.divf %84, %85 : vector<8x192xf32>
    %87 = vector.extract_strided_slice %80 {offsets = [0, 192], sizes = [8, 64], strides = [1, 1]} : vector<8x256xf32> to vector<8x64xf32>
    %88 = math.tanh %87 : vector<8x64xf32>
    %89 = vector.extract_strided_slice %86 {offsets = [0, 0], sizes = [8, 64], strides = [1, 1]} : vector<8x192xf32> to vector<8x64xf32>
    %90 = vector.extract_strided_slice %86 {offsets = [0, 64], sizes = [8, 64], strides = [1, 1]} : vector<8x192xf32> to vector<8x64xf32>
    %91 = vector.extract_strided_slice %86 {offsets = [0, 128], sizes = [8, 64], strides = [1, 1]} : vector<8x192xf32> to vector<8x64xf32>
    %92 = arith.mulf %90, %54 : vector<8x64xf32>
    %93 = arith.mulf %89, %88 : vector<8x64xf32>
    %94 = arith.addf %92, %93 : vector<8x64xf32>
    %95 = math.tanh %94 : vector<8x64xf32>
    %96 = arith.mulf %91, %95 : vector<8x64xf32>
    %97 = tpu.concatenate %56, %76 in 1 : vector<8x64xf32>, vector<8x64xf32> -> vector<8x128xf32>
    %c0_34 = arith.constant 0 : index
    %c0_35 = arith.constant 0 : index
    %98 = vector.load %arg4[%c0_34, %c0_35] : memref<128x256xf32, #tpu.memory_space<vmem>>, vector<128x256xf32>
    %cst_36 = arith.constant dense<0.000000e+00> : vector<8x256xf32>
    %99 = tpu.matmul %97, %98, %cst_36 {dimension_numbers = #tpu.dot_dimension_numbers<[1], [0], [0], [1], [0, 0, 1, 1], [], []>} : vector<8x128xf32>, vector<128x256xf32>, vector<8x256xf32> -> vector<8x256xf32>
    %100 = arith.addf %99, %9 : vector<8x256xf32>
    %101 = vector.extract_strided_slice %100 {offsets = [0, 0], sizes = [8, 192], strides = [1, 1]} : vector<8x256xf32> to vector<8x192xf32>
    %102 = arith.negf %101 : vector<8x192xf32>
    %103 = math.exp %102 : vector<8x192xf32>
    %cst_37 = arith.constant 1.000000e+00 : f32
    %104 = vector.broadcast %cst_37 : f32 to vector<8x192xf32>
    %105 = arith.addf %104, %103 : vector<8x192xf32>
    %106 = arith.divf %104, %105 : vector<8x192xf32>
    %107 = vector.extract_strided_slice %100 {offsets = [0, 192], sizes = [8, 64], strides = [1, 1]} : vector<8x256xf32> to vector<8x64xf32>
    %108 = math.tanh %107 : vector<8x64xf32>
    %109 = vector.extract_strided_slice %106 {offsets = [0, 0], sizes = [8, 64], strides = [1, 1]} : vector<8x192xf32> to vector<8x64xf32>
    %110 = vector.extract_strided_slice %106 {offsets = [0, 64], sizes = [8, 64], strides = [1, 1]} : vector<8x192xf32> to vector<8x64xf32>
    %111 = vector.extract_strided_slice %106 {offsets = [0, 128], sizes = [8, 64], strides = [1, 1]} : vector<8x192xf32> to vector<8x64xf32>
    %112 = arith.mulf %110, %74 : vector<8x64xf32>
    %113 = arith.mulf %109, %108 : vector<8x64xf32>
    %114 = arith.addf %112, %113 : vector<8x64xf32>
    %115 = math.tanh %114 : vector<8x64xf32>
    %116 = arith.mulf %111, %115 : vector<8x64xf32>
    %117 = tpu.concatenate %76, %16 in 1 : vector<8x64xf32>, vector<8x64xf32> -> vector<8x128xf32>
    %c0_38 = arith.constant 0 : index
    %c0_39 = arith.constant 0 : index
    %118 = vector.load %arg6[%c0_38, %c0_39] : memref<128x256xf32, #tpu.memory_space<vmem>>, vector<128x256xf32>
    %cst_40 = arith.constant dense<0.000000e+00> : vector<8x256xf32>
    %119 = tpu.matmul %117, %118, %cst_40 {dimension_numbers = #tpu.dot_dimension_numbers<[1], [0], [0], [1], [0, 0, 1, 1], [], []>} : vector<8x128xf32>, vector<128x256xf32>, vector<8x256xf32> -> vector<8x256xf32>
    %120 = arith.addf %119, %12 : vector<8x256xf32>
    %121 = vector.extract_strided_slice %120 {offsets = [0, 0], sizes = [8, 192], strides = [1, 1]} : vector<8x256xf32> to vector<8x192xf32>
    %122 = arith.negf %121 : vector<8x192xf32>
    %123 = math.exp %122 : vector<8x192xf32>
    %cst_41 = arith.constant 1.000000e+00 : f32
    %124 = vector.broadcast %cst_41 : f32 to vector<8x192xf32>
    %125 = arith.addf %124, %123 : vector<8x192xf32>
    %126 = arith.divf %124, %125 : vector<8x192xf32>
    %127 = vector.extract_strided_slice %120 {offsets = [0, 192], sizes = [8, 64], strides = [1, 1]} : vector<8x256xf32> to vector<8x64xf32>
    %128 = math.tanh %127 : vector<8x64xf32>
    %129 = vector.extract_strided_slice %126 {offsets = [0, 0], sizes = [8, 64], strides = [1, 1]} : vector<8x192xf32> to vector<8x64xf32>
    %130 = vector.extract_strided_slice %126 {offsets = [0, 64], sizes = [8, 64], strides = [1, 1]} : vector<8x192xf32> to vector<8x64xf32>
    %131 = vector.extract_strided_slice %126 {offsets = [0, 128], sizes = [8, 64], strides = [1, 1]} : vector<8x192xf32> to vector<8x64xf32>
    %132 = arith.mulf %130, %16 : vector<8x64xf32>
    %133 = arith.mulf %129, %128 : vector<8x64xf32>
    %134 = arith.addf %132, %133 : vector<8x64xf32>
    %135 = math.tanh %134 : vector<8x64xf32>
    %136 = arith.mulf %131, %135 : vector<8x64xf32>
    %c24 = arith.constant 24 : index
    %c0_42 = arith.constant 0 : index
    %137 = vector.load %arg13[%c24, %c0_42] : memref<64x256xf32, #tpu.memory_space<vmem>>, vector<8x256xf32>
    %c0_43 = arith.constant 0 : index
    %c0_44 = arith.constant 0 : index
    %138 = vector.load %arg2[%c0_43, %c0_44] : memref<64x256xf32, #tpu.memory_space<vmem>>, vector<64x256xf32>
    %cst_45 = arith.constant dense<0.000000e+00> : vector<8x256xf32>
    %139 = tpu.matmul %96, %138, %cst_45 {dimension_numbers = #tpu.dot_dimension_numbers<[1], [0], [0], [1], [0, 0, 1, 1], [], []>} : vector<8x64xf32>, vector<64x256xf32>, vector<8x256xf32> -> vector<8x256xf32>
    %140 = arith.addf %137, %139 : vector<8x256xf32>
    %141 = vector.extract_strided_slice %140 {offsets = [0, 0], sizes = [8, 192], strides = [1, 1]} : vector<8x256xf32> to vector<8x192xf32>
    %142 = arith.negf %141 : vector<8x192xf32>
    %143 = math.exp %142 : vector<8x192xf32>
    %cst_46 = arith.constant 1.000000e+00 : f32
    %144 = vector.broadcast %cst_46 : f32 to vector<8x192xf32>
    %145 = arith.addf %144, %143 : vector<8x192xf32>
    %146 = arith.divf %144, %145 : vector<8x192xf32>
    %147 = vector.extract_strided_slice %140 {offsets = [0, 192], sizes = [8, 64], strides = [1, 1]} : vector<8x256xf32> to vector<8x64xf32>
    %148 = math.tanh %147 : vector<8x64xf32>
    %149 = vector.extract_strided_slice %146 {offsets = [0, 0], sizes = [8, 64], strides = [1, 1]} : vector<8x192xf32> to vector<8x64xf32>
    %150 = vector.extract_strided_slice %146 {offsets = [0, 64], sizes = [8, 64], strides = [1, 1]} : vector<8x192xf32> to vector<8x64xf32>
    %151 = vector.extract_strided_slice %146 {offsets = [0, 128], sizes = [8, 64], strides = [1, 1]} : vector<8x192xf32> to vector<8x64xf32>
    %152 = arith.mulf %150, %94 : vector<8x64xf32>
    %153 = arith.mulf %149, %148 : vector<8x64xf32>
    %154 = arith.addf %152, %153 : vector<8x64xf32>
    %155 = math.tanh %154 : vector<8x64xf32>
    %156 = arith.mulf %151, %155 : vector<8x64xf32>
    %157 = tpu.concatenate %96, %116 in 1 : vector<8x64xf32>, vector<8x64xf32> -> vector<8x128xf32>
    %c0_47 = arith.constant 0 : index
    %c0_48 = arith.constant 0 : index
    %158 = vector.load %arg4[%c0_47, %c0_48] : memref<128x256xf32, #tpu.memory_space<vmem>>, vector<128x256xf32>
    %cst_49 = arith.constant dense<0.000000e+00> : vector<8x256xf32>
    %159 = tpu.matmul %157, %158, %cst_49 {dimension_numbers = #tpu.dot_dimension_numbers<[1], [0], [0], [1], [0, 0, 1, 1], [], []>} : vector<8x128xf32>, vector<128x256xf32>, vector<8x256xf32> -> vector<8x256xf32>
    %160 = arith.addf %159, %9 : vector<8x256xf32>
    %161 = vector.extract_strided_slice %160 {offsets = [0, 0], sizes = [8, 192], strides = [1, 1]} : vector<8x256xf32> to vector<8x192xf32>
    %162 = arith.negf %161 : vector<8x192xf32>
    %163 = math.exp %162 : vector<8x192xf32>
    %cst_50 = arith.constant 1.000000e+00 : f32
    %164 = vector.broadcast %cst_50 : f32 to vector<8x192xf32>
    %165 = arith.addf %164, %163 : vector<8x192xf32>
    %166 = arith.divf %164, %165 : vector<8x192xf32>
    %167 = vector.extract_strided_slice %160 {offsets = [0, 192], sizes = [8, 64], strides = [1, 1]} : vector<8x256xf32> to vector<8x64xf32>
    %168 = math.tanh %167 : vector<8x64xf32>
    %169 = vector.extract_strided_slice %166 {offsets = [0, 0], sizes = [8, 64], strides = [1, 1]} : vector<8x192xf32> to vector<8x64xf32>
    %170 = vector.extract_strided_slice %166 {offsets = [0, 64], sizes = [8, 64], strides = [1, 1]} : vector<8x192xf32> to vector<8x64xf32>
    %171 = vector.extract_strided_slice %166 {offsets = [0, 128], sizes = [8, 64], strides = [1, 1]} : vector<8x192xf32> to vector<8x64xf32>
    %172 = arith.mulf %170, %114 : vector<8x64xf32>
    %173 = arith.mulf %169, %168 : vector<8x64xf32>
    %174 = arith.addf %172, %173 : vector<8x64xf32>
    %175 = math.tanh %174 : vector<8x64xf32>
    %176 = arith.mulf %171, %175 : vector<8x64xf32>
    %177 = tpu.concatenate %116, %136 in 1 : vector<8x64xf32>, vector<8x64xf32> -> vector<8x128xf32>
    %c0_51 = arith.constant 0 : index
    %c0_52 = arith.constant 0 : index
    %178 = vector.load %arg6[%c0_51, %c0_52] : memref<128x256xf32, #tpu.memory_space<vmem>>, vector<128x256xf32>
    %cst_53 = arith.constant dense<0.000000e+00> : vector<8x256xf32>
    %179 = tpu.matmul %177, %178, %cst_53 {dimension_numbers = #tpu.dot_dimension_numbers<[1], [0], [0], [1], [0, 0, 1, 1], [], []>} : vector<8x128xf32>, vector<128x256xf32>, vector<8x256xf32> -> vector<8x256xf32>
    %180 = arith.addf %179, %12 : vector<8x256xf32>
    %181 = vector.extract_strided_slice %180 {offsets = [0, 0], sizes = [8, 192], strides = [1, 1]} : vector<8x256xf32> to vector<8x192xf32>
    %182 = arith.negf %181 : vector<8x192xf32>
    %183 = math.exp %182 : vector<8x192xf32>
    %cst_54 = arith.constant 1.000000e+00 : f32
    %184 = vector.broadcast %cst_54 : f32 to vector<8x192xf32>
    %185 = arith.addf %184, %183 : vector<8x192xf32>
    %186 = arith.divf %184, %185 : vector<8x192xf32>
    %187 = vector.extract_strided_slice %180 {offsets = [0, 192], sizes = [8, 64], strides = [1, 1]} : vector<8x256xf32> to vector<8x64xf32>
    %188 = math.tanh %187 : vector<8x64xf32>
    %189 = vector.extract_strided_slice %186 {offsets = [0, 0], sizes = [8, 64], strides = [1, 1]} : vector<8x192xf32> to vector<8x64xf32>
    %190 = vector.extract_strided_slice %186 {offsets = [0, 64], sizes = [8, 64], strides = [1, 1]} : vector<8x192xf32> to vector<8x64xf32>
    %191 = vector.extract_strided_slice %186 {offsets = [0, 128], sizes = [8, 64], strides = [1, 1]} : vector<8x192xf32> to vector<8x64xf32>
    %192 = arith.mulf %190, %134 : vector<8x64xf32>
    %193 = arith.mulf %189, %188 : vector<8x64xf32>
    %194 = arith.addf %192, %193 : vector<8x64xf32>
    %195 = math.tanh %194 : vector<8x64xf32>
    %196 = arith.mulf %191, %195 : vector<8x64xf32>
    %197 = tpu.concatenate %136, %16 in 1 : vector<8x64xf32>, vector<8x64xf32> -> vector<8x128xf32>
    %c0_55 = arith.constant 0 : index
    %c0_56 = arith.constant 0 : index
    %198 = vector.load %arg8[%c0_55, %c0_56] : memref<128x256xf32, #tpu.memory_space<vmem>>, vector<128x256xf32>
    %cst_57 = arith.constant dense<0.000000e+00> : vector<8x256xf32>
    %199 = tpu.matmul %197, %198, %cst_57 {dimension_numbers = #tpu.dot_dimension_numbers<[1], [0], [0], [1], [0, 0, 1, 1], [], []>} : vector<8x128xf32>, vector<128x256xf32>, vector<8x256xf32> -> vector<8x256xf32>
    %200 = arith.addf %199, %15 : vector<8x256xf32>
    %201 = vector.extract_strided_slice %200 {offsets = [0, 0], sizes = [8, 192], strides = [1, 1]} : vector<8x256xf32> to vector<8x192xf32>
    %202 = arith.negf %201 : vector<8x192xf32>
    %203 = math.exp %202 : vector<8x192xf32>
    %cst_58 = arith.constant 1.000000e+00 : f32
    %204 = vector.broadcast %cst_58 : f32 to vector<8x192xf32>
    %205 = arith.addf %204, %203 : vector<8x192xf32>
    %206 = arith.divf %204, %205 : vector<8x192xf32>
    %207 = vector.extract_strided_slice %200 {offsets = [0, 192], sizes = [8, 64], strides = [1, 1]} : vector<8x256xf32> to vector<8x64xf32>
    %208 = math.tanh %207 : vector<8x64xf32>
    %209 = vector.extract_strided_slice %206 {offsets = [0, 0], sizes = [8, 64], strides = [1, 1]} : vector<8x192xf32> to vector<8x64xf32>
    %210 = vector.extract_strided_slice %206 {offsets = [0, 64], sizes = [8, 64], strides = [1, 1]} : vector<8x192xf32> to vector<8x64xf32>
    %211 = vector.extract_strided_slice %206 {offsets = [0, 128], sizes = [8, 64], strides = [1, 1]} : vector<8x192xf32> to vector<8x64xf32>
    %212 = arith.mulf %210, %16 : vector<8x64xf32>
    %213 = arith.mulf %209, %208 : vector<8x64xf32>
    %214 = arith.addf %212, %213 : vector<8x64xf32>
    %215 = math.tanh %214 : vector<8x64xf32>
    %216 = arith.mulf %211, %215 : vector<8x64xf32>
    %c32 = arith.constant 32 : index
    %c0_59 = arith.constant 0 : index
    %217 = vector.load %arg13[%c32, %c0_59] : memref<64x256xf32, #tpu.memory_space<vmem>>, vector<8x256xf32>
    %c0_60 = arith.constant 0 : index
    %c0_61 = arith.constant 0 : index
    %218 = vector.load %arg2[%c0_60, %c0_61] : memref<64x256xf32, #tpu.memory_space<vmem>>, vector<64x256xf32>
    %cst_62 = arith.constant dense<0.000000e+00> : vector<8x256xf32>
    %219 = tpu.matmul %156, %218, %cst_62 {dimension_numbers = #tpu.dot_dimension_numbers<[1], [0], [0], [1], [0, 0, 1, 1], [], []>} : vector<8x64xf32>, vector<64x256xf32>, vector<8x256xf32> -> vector<8x256xf32>
    %220 = arith.addf %217, %219 : vector<8x256xf32>
    %221 = vector.extract_strided_slice %220 {offsets = [0, 0], sizes = [8, 192], strides = [1, 1]} : vector<8x256xf32> to vector<8x192xf32>
    %222 = arith.negf %221 : vector<8x192xf32>
    %223 = math.exp %222 : vector<8x192xf32>
    %cst_63 = arith.constant 1.000000e+00 : f32
    %224 = vector.broadcast %cst_63 : f32 to vector<8x192xf32>
    %225 = arith.addf %224, %223 : vector<8x192xf32>
    %226 = arith.divf %224, %225 : vector<8x192xf32>
    %227 = vector.extract_strided_slice %220 {offsets = [0, 192], sizes = [8, 64], strides = [1, 1]} : vector<8x256xf32> to vector<8x64xf32>
    %228 = math.tanh %227 : vector<8x64xf32>
    %229 = vector.extract_strided_slice %226 {offsets = [0, 0], sizes = [8, 64], strides = [1, 1]} : vector<8x192xf32> to vector<8x64xf32>
    %230 = vector.extract_strided_slice %226 {offsets = [0, 64], sizes = [8, 64], strides = [1, 1]} : vector<8x192xf32> to vector<8x64xf32>
    %231 = vector.extract_strided_slice %226 {offsets = [0, 128], sizes = [8, 64], strides = [1, 1]} : vector<8x192xf32> to vector<8x64xf32>
    %232 = arith.mulf %230, %154 : vector<8x64xf32>
    %233 = arith.mulf %229, %228 : vector<8x64xf32>
    %234 = arith.addf %232, %233 : vector<8x64xf32>
    %235 = math.tanh %234 : vector<8x64xf32>
    %236 = arith.mulf %231, %235 : vector<8x64xf32>
    %237 = tpu.concatenate %156, %176 in 1 : vector<8x64xf32>, vector<8x64xf32> -> vector<8x128xf32>
    %c0_64 = arith.constant 0 : index
    %c0_65 = arith.constant 0 : index
    %238 = vector.load %arg4[%c0_64, %c0_65] : memref<128x256xf32, #tpu.memory_space<vmem>>, vector<128x256xf32>
    %cst_66 = arith.constant dense<0.000000e+00> : vector<8x256xf32>
    %239 = tpu.matmul %237, %238, %cst_66 {dimension_numbers = #tpu.dot_dimension_numbers<[1], [0], [0], [1], [0, 0, 1, 1], [], []>} : vector<8x128xf32>, vector<128x256xf32>, vector<8x256xf32> -> vector<8x256xf32>
    %240 = arith.addf %239, %9 : vector<8x256xf32>
    %241 = vector.extract_strided_slice %240 {offsets = [0, 0], sizes = [8, 192], strides = [1, 1]} : vector<8x256xf32> to vector<8x192xf32>
    %242 = arith.negf %241 : vector<8x192xf32>
    %243 = math.exp %242 : vector<8x192xf32>
    %cst_67 = arith.constant 1.000000e+00 : f32
    %244 = vector.broadcast %cst_67 : f32 to vector<8x192xf32>
    %245 = arith.addf %244, %243 : vector<8x192xf32>
    %246 = arith.divf %244, %245 : vector<8x192xf32>
    %247 = vector.extract_strided_slice %240 {offsets = [0, 192], sizes = [8, 64], strides = [1, 1]} : vector<8x256xf32> to vector<8x64xf32>
    %248 = math.tanh %247 : vector<8x64xf32>
    %249 = vector.extract_strided_slice %246 {offsets = [0, 0], sizes = [8, 64], strides = [1, 1]} : vector<8x192xf32> to vector<8x64xf32>
    %250 = vector.extract_strided_slice %246 {offsets = [0, 64], sizes = [8, 64], strides = [1, 1]} : vector<8x192xf32> to vector<8x64xf32>
    %251 = vector.extract_strided_slice %246 {offsets = [0, 128], sizes = [8, 64], strides = [1, 1]} : vector<8x192xf32> to vector<8x64xf32>
    %252 = arith.mulf %250, %174 : vector<8x64xf32>
    %253 = arith.mulf %249, %248 : vector<8x64xf32>
    %254 = arith.addf %252, %253 : vector<8x64xf32>
    %255 = math.tanh %254 : vector<8x64xf32>
    %256 = arith.mulf %251, %255 : vector<8x64xf32>
    %257 = tpu.concatenate %176, %196 in 1 : vector<8x64xf32>, vector<8x64xf32> -> vector<8x128xf32>
    %c0_68 = arith.constant 0 : index
    %c0_69 = arith.constant 0 : index
    %258 = vector.load %arg6[%c0_68, %c0_69] : memref<128x256xf32, #tpu.memory_space<vmem>>, vector<128x256xf32>
    %cst_70 = arith.constant dense<0.000000e+00> : vector<8x256xf32>
    %259 = tpu.matmul %257, %258, %cst_70 {dimension_numbers = #tpu.dot_dimension_numbers<[1], [0], [0], [1], [0, 0, 1, 1], [], []>} : vector<8x128xf32>, vector<128x256xf32>, vector<8x256xf32> -> vector<8x256xf32>
    %260 = arith.addf %259, %12 : vector<8x256xf32>
    %261 = vector.extract_strided_slice %260 {offsets = [0, 0], sizes = [8, 192], strides = [1, 1]} : vector<8x256xf32> to vector<8x192xf32>
    %262 = arith.negf %261 : vector<8x192xf32>
    %263 = math.exp %262 : vector<8x192xf32>
    %cst_71 = arith.constant 1.000000e+00 : f32
    %264 = vector.broadcast %cst_71 : f32 to vector<8x192xf32>
    %265 = arith.addf %264, %263 : vector<8x192xf32>
    %266 = arith.divf %264, %265 : vector<8x192xf32>
    %267 = vector.extract_strided_slice %260 {offsets = [0, 192], sizes = [8, 64], strides = [1, 1]} : vector<8x256xf32> to vector<8x64xf32>
    %268 = math.tanh %267 : vector<8x64xf32>
    %269 = vector.extract_strided_slice %266 {offsets = [0, 0], sizes = [8, 64], strides = [1, 1]} : vector<8x192xf32> to vector<8x64xf32>
    %270 = vector.extract_strided_slice %266 {offsets = [0, 64], sizes = [8, 64], strides = [1, 1]} : vector<8x192xf32> to vector<8x64xf32>
    %271 = vector.extract_strided_slice %266 {offsets = [0, 128], sizes = [8, 64], strides = [1, 1]} : vector<8x192xf32> to vector<8x64xf32>
    %272 = arith.mulf %270, %194 : vector<8x64xf32>
    %273 = arith.mulf %269, %268 : vector<8x64xf32>
    %274 = arith.addf %272, %273 : vector<8x64xf32>
    %275 = math.tanh %274 : vector<8x64xf32>
    %276 = arith.mulf %271, %275 : vector<8x64xf32>
    %277 = tpu.concatenate %196, %216 in 1 : vector<8x64xf32>, vector<8x64xf32> -> vector<8x128xf32>
    %c0_72 = arith.constant 0 : index
    %c0_73 = arith.constant 0 : index
    %278 = vector.load %arg8[%c0_72, %c0_73] : memref<128x256xf32, #tpu.memory_space<vmem>>, vector<128x256xf32>
    %cst_74 = arith.constant dense<0.000000e+00> : vector<8x256xf32>
    %279 = tpu.matmul %277, %278, %cst_74 {dimension_numbers = #tpu.dot_dimension_numbers<[1], [0], [0], [1], [0, 0, 1, 1], [], []>} : vector<8x128xf32>, vector<128x256xf32>, vector<8x256xf32> -> vector<8x256xf32>
    %280 = arith.addf %279, %15 : vector<8x256xf32>
    %281 = vector.extract_strided_slice %280 {offsets = [0, 0], sizes = [8, 192], strides = [1, 1]} : vector<8x256xf32> to vector<8x192xf32>
    %282 = arith.negf %281 : vector<8x192xf32>
    %283 = math.exp %282 : vector<8x192xf32>
    %cst_75 = arith.constant 1.000000e+00 : f32
    %284 = vector.broadcast %cst_75 : f32 to vector<8x192xf32>
    %285 = arith.addf %284, %283 : vector<8x192xf32>
    %286 = arith.divf %284, %285 : vector<8x192xf32>
    %287 = vector.extract_strided_slice %280 {offsets = [0, 192], sizes = [8, 64], strides = [1, 1]} : vector<8x256xf32> to vector<8x64xf32>
    %288 = math.tanh %287 : vector<8x64xf32>
    %289 = vector.extract_strided_slice %286 {offsets = [0, 0], sizes = [8, 64], strides = [1, 1]} : vector<8x192xf32> to vector<8x64xf32>
    %290 = vector.extract_strided_slice %286 {offsets = [0, 64], sizes = [8, 64], strides = [1, 1]} : vector<8x192xf32> to vector<8x64xf32>
    %291 = vector.extract_strided_slice %286 {offsets = [0, 128], sizes = [8, 64], strides = [1, 1]} : vector<8x192xf32> to vector<8x64xf32>
    %292 = arith.mulf %290, %214 : vector<8x64xf32>
    %293 = arith.mulf %289, %288 : vector<8x64xf32>
    %294 = arith.addf %292, %293 : vector<8x64xf32>
    %295 = math.tanh %294 : vector<8x64xf32>
    %296 = arith.mulf %291, %295 : vector<8x64xf32>
    %c40 = arith.constant 40 : index
    %c0_76 = arith.constant 0 : index
    %297 = vector.load %arg13[%c40, %c0_76] : memref<64x256xf32, #tpu.memory_space<vmem>>, vector<8x256xf32>
    %c0_77 = arith.constant 0 : index
    %c0_78 = arith.constant 0 : index
    %298 = vector.load %arg2[%c0_77, %c0_78] : memref<64x256xf32, #tpu.memory_space<vmem>>, vector<64x256xf32>
    %cst_79 = arith.constant dense<0.000000e+00> : vector<8x256xf32>
    %299 = tpu.matmul %236, %298, %cst_79 {dimension_numbers = #tpu.dot_dimension_numbers<[1], [0], [0], [1], [0, 0, 1, 1], [], []>} : vector<8x64xf32>, vector<64x256xf32>, vector<8x256xf32> -> vector<8x256xf32>
    %300 = arith.addf %297, %299 : vector<8x256xf32>
    %301 = vector.extract_strided_slice %300 {offsets = [0, 0], sizes = [8, 192], strides = [1, 1]} : vector<8x256xf32> to vector<8x192xf32>
    %302 = arith.negf %301 : vector<8x192xf32>
    %303 = math.exp %302 : vector<8x192xf32>
    %cst_80 = arith.constant 1.000000e+00 : f32
    %304 = vector.broadcast %cst_80 : f32 to vector<8x192xf32>
    %305 = arith.addf %304, %303 : vector<8x192xf32>
    %306 = arith.divf %304, %305 : vector<8x192xf32>
    %307 = vector.extract_strided_slice %300 {offsets = [0, 192], sizes = [8, 64], strides = [1, 1]} : vector<8x256xf32> to vector<8x64xf32>
    %308 = math.tanh %307 : vector<8x64xf32>
    %309 = vector.extract_strided_slice %306 {offsets = [0, 0], sizes = [8, 64], strides = [1, 1]} : vector<8x192xf32> to vector<8x64xf32>
    %310 = vector.extract_strided_slice %306 {offsets = [0, 64], sizes = [8, 64], strides = [1, 1]} : vector<8x192xf32> to vector<8x64xf32>
    %311 = vector.extract_strided_slice %306 {offsets = [0, 128], sizes = [8, 64], strides = [1, 1]} : vector<8x192xf32> to vector<8x64xf32>
    %312 = arith.mulf %310, %234 : vector<8x64xf32>
    %313 = arith.mulf %309, %308 : vector<8x64xf32>
    %314 = arith.addf %312, %313 : vector<8x64xf32>
    %315 = math.tanh %314 : vector<8x64xf32>
    %316 = arith.mulf %311, %315 : vector<8x64xf32>
    %317 = tpu.concatenate %236, %256 in 1 : vector<8x64xf32>, vector<8x64xf32> -> vector<8x128xf32>
    %c0_81 = arith.constant 0 : index
    %c0_82 = arith.constant 0 : index
    %318 = vector.load %arg4[%c0_81, %c0_82] : memref<128x256xf32, #tpu.memory_space<vmem>>, vector<128x256xf32>
    %cst_83 = arith.constant dense<0.000000e+00> : vector<8x256xf32>
    %319 = tpu.matmul %317, %318, %cst_83 {dimension_numbers = #tpu.dot_dimension_numbers<[1], [0], [0], [1], [0, 0, 1, 1], [], []>} : vector<8x128xf32>, vector<128x256xf32>, vector<8x256xf32> -> vector<8x256xf32>
    %320 = arith.addf %319, %9 : vector<8x256xf32>
    %321 = vector.extract_strided_slice %320 {offsets = [0, 0], sizes = [8, 192], strides = [1, 1]} : vector<8x256xf32> to vector<8x192xf32>
    %322 = arith.negf %321 : vector<8x192xf32>
    %323 = math.exp %322 : vector<8x192xf32>
    %cst_84 = arith.constant 1.000000e+00 : f32
    %324 = vector.broadcast %cst_84 : f32 to vector<8x192xf32>
    %325 = arith.addf %324, %323 : vector<8x192xf32>
    %326 = arith.divf %324, %325 : vector<8x192xf32>
    %327 = vector.extract_strided_slice %320 {offsets = [0, 192], sizes = [8, 64], strides = [1, 1]} : vector<8x256xf32> to vector<8x64xf32>
    %328 = math.tanh %327 : vector<8x64xf32>
    %329 = vector.extract_strided_slice %326 {offsets = [0, 0], sizes = [8, 64], strides = [1, 1]} : vector<8x192xf32> to vector<8x64xf32>
    %330 = vector.extract_strided_slice %326 {offsets = [0, 64], sizes = [8, 64], strides = [1, 1]} : vector<8x192xf32> to vector<8x64xf32>
    %331 = vector.extract_strided_slice %326 {offsets = [0, 128], sizes = [8, 64], strides = [1, 1]} : vector<8x192xf32> to vector<8x64xf32>
    %332 = arith.mulf %330, %254 : vector<8x64xf32>
    %333 = arith.mulf %329, %328 : vector<8x64xf32>
    %334 = arith.addf %332, %333 : vector<8x64xf32>
    %335 = math.tanh %334 : vector<8x64xf32>
    %336 = arith.mulf %331, %335 : vector<8x64xf32>
    %337 = tpu.concatenate %256, %276 in 1 : vector<8x64xf32>, vector<8x64xf32> -> vector<8x128xf32>
    %c0_85 = arith.constant 0 : index
    %c0_86 = arith.constant 0 : index
    %338 = vector.load %arg6[%c0_85, %c0_86] : memref<128x256xf32, #tpu.memory_space<vmem>>, vector<128x256xf32>
    %cst_87 = arith.constant dense<0.000000e+00> : vector<8x256xf32>
    %339 = tpu.matmul %337, %338, %cst_87 {dimension_numbers = #tpu.dot_dimension_numbers<[1], [0], [0], [1], [0, 0, 1, 1], [], []>} : vector<8x128xf32>, vector<128x256xf32>, vector<8x256xf32> -> vector<8x256xf32>
    %340 = arith.addf %339, %12 : vector<8x256xf32>
    %341 = vector.extract_strided_slice %340 {offsets = [0, 0], sizes = [8, 192], strides = [1, 1]} : vector<8x256xf32> to vector<8x192xf32>
    %342 = arith.negf %341 : vector<8x192xf32>
    %343 = math.exp %342 : vector<8x192xf32>
    %cst_88 = arith.constant 1.000000e+00 : f32
    %344 = vector.broadcast %cst_88 : f32 to vector<8x192xf32>
    %345 = arith.addf %344, %343 : vector<8x192xf32>
    %346 = arith.divf %344, %345 : vector<8x192xf32>
    %347 = vector.extract_strided_slice %340 {offsets = [0, 192], sizes = [8, 64], strides = [1, 1]} : vector<8x256xf32> to vector<8x64xf32>
    %348 = math.tanh %347 : vector<8x64xf32>
    %349 = vector.extract_strided_slice %346 {offsets = [0, 0], sizes = [8, 64], strides = [1, 1]} : vector<8x192xf32> to vector<8x64xf32>
    %350 = vector.extract_strided_slice %346 {offsets = [0, 64], sizes = [8, 64], strides = [1, 1]} : vector<8x192xf32> to vector<8x64xf32>
    %351 = vector.extract_strided_slice %346 {offsets = [0, 128], sizes = [8, 64], strides = [1, 1]} : vector<8x192xf32> to vector<8x64xf32>
    %352 = arith.mulf %350, %274 : vector<8x64xf32>
    %353 = arith.mulf %349, %348 : vector<8x64xf32>
    %354 = arith.addf %352, %353 : vector<8x64xf32>
    %355 = math.tanh %354 : vector<8x64xf32>
    %356 = arith.mulf %351, %355 : vector<8x64xf32>
    %357 = tpu.concatenate %276, %296 in 1 : vector<8x64xf32>, vector<8x64xf32> -> vector<8x128xf32>
    %c0_89 = arith.constant 0 : index
    %c0_90 = arith.constant 0 : index
    %358 = vector.load %arg8[%c0_89, %c0_90] : memref<128x256xf32, #tpu.memory_space<vmem>>, vector<128x256xf32>
    %cst_91 = arith.constant dense<0.000000e+00> : vector<8x256xf32>
    %359 = tpu.matmul %357, %358, %cst_91 {dimension_numbers = #tpu.dot_dimension_numbers<[1], [0], [0], [1], [0, 0, 1, 1], [], []>} : vector<8x128xf32>, vector<128x256xf32>, vector<8x256xf32> -> vector<8x256xf32>
    %360 = arith.addf %359, %15 : vector<8x256xf32>
    %361 = vector.extract_strided_slice %360 {offsets = [0, 0], sizes = [8, 192], strides = [1, 1]} : vector<8x256xf32> to vector<8x192xf32>
    %362 = arith.negf %361 : vector<8x192xf32>
    %363 = math.exp %362 : vector<8x192xf32>
    %cst_92 = arith.constant 1.000000e+00 : f32
    %364 = vector.broadcast %cst_92 : f32 to vector<8x192xf32>
    %365 = arith.addf %364, %363 : vector<8x192xf32>
    %366 = arith.divf %364, %365 : vector<8x192xf32>
    %367 = vector.extract_strided_slice %360 {offsets = [0, 192], sizes = [8, 64], strides = [1, 1]} : vector<8x256xf32> to vector<8x64xf32>
    %368 = math.tanh %367 : vector<8x64xf32>
    %369 = vector.extract_strided_slice %366 {offsets = [0, 0], sizes = [8, 64], strides = [1, 1]} : vector<8x192xf32> to vector<8x64xf32>
    %370 = vector.extract_strided_slice %366 {offsets = [0, 64], sizes = [8, 64], strides = [1, 1]} : vector<8x192xf32> to vector<8x64xf32>
    %371 = vector.extract_strided_slice %366 {offsets = [0, 128], sizes = [8, 64], strides = [1, 1]} : vector<8x192xf32> to vector<8x64xf32>
    %372 = arith.mulf %370, %294 : vector<8x64xf32>
    %373 = arith.mulf %369, %368 : vector<8x64xf32>
    %374 = arith.addf %372, %373 : vector<8x64xf32>
    %375 = math.tanh %374 : vector<8x64xf32>
    %376 = arith.mulf %371, %375 : vector<8x64xf32>
    %c48 = arith.constant 48 : index
    %c0_93 = arith.constant 0 : index
    %377 = vector.load %arg13[%c48, %c0_93] : memref<64x256xf32, #tpu.memory_space<vmem>>, vector<8x256xf32>
    %c0_94 = arith.constant 0 : index
    %c0_95 = arith.constant 0 : index
    %378 = vector.load %arg2[%c0_94, %c0_95] : memref<64x256xf32, #tpu.memory_space<vmem>>, vector<64x256xf32>
    %cst_96 = arith.constant dense<0.000000e+00> : vector<8x256xf32>
    %379 = tpu.matmul %316, %378, %cst_96 {dimension_numbers = #tpu.dot_dimension_numbers<[1], [0], [0], [1], [0, 0, 1, 1], [], []>} : vector<8x64xf32>, vector<64x256xf32>, vector<8x256xf32> -> vector<8x256xf32>
    %380 = arith.addf %377, %379 : vector<8x256xf32>
    %381 = vector.extract_strided_slice %380 {offsets = [0, 0], sizes = [8, 192], strides = [1, 1]} : vector<8x256xf32> to vector<8x192xf32>
    %382 = arith.negf %381 : vector<8x192xf32>
    %383 = math.exp %382 : vector<8x192xf32>
    %cst_97 = arith.constant 1.000000e+00 : f32
    %384 = vector.broadcast %cst_97 : f32 to vector<8x192xf32>
    %385 = arith.addf %384, %383 : vector<8x192xf32>
    %386 = arith.divf %384, %385 : vector<8x192xf32>
    %387 = vector.extract_strided_slice %380 {offsets = [0, 192], sizes = [8, 64], strides = [1, 1]} : vector<8x256xf32> to vector<8x64xf32>
    %388 = math.tanh %387 : vector<8x64xf32>
    %389 = vector.extract_strided_slice %386 {offsets = [0, 0], sizes = [8, 64], strides = [1, 1]} : vector<8x192xf32> to vector<8x64xf32>
    %390 = vector.extract_strided_slice %386 {offsets = [0, 64], sizes = [8, 64], strides = [1, 1]} : vector<8x192xf32> to vector<8x64xf32>
    %391 = vector.extract_strided_slice %386 {offsets = [0, 128], sizes = [8, 64], strides = [1, 1]} : vector<8x192xf32> to vector<8x64xf32>
    %392 = arith.mulf %390, %314 : vector<8x64xf32>
    %393 = arith.mulf %389, %388 : vector<8x64xf32>
    %394 = arith.addf %392, %393 : vector<8x64xf32>
    %395 = math.tanh %394 : vector<8x64xf32>
    %396 = arith.mulf %391, %395 : vector<8x64xf32>
    %397 = tpu.concatenate %316, %336 in 1 : vector<8x64xf32>, vector<8x64xf32> -> vector<8x128xf32>
    %c0_98 = arith.constant 0 : index
    %c0_99 = arith.constant 0 : index
    %398 = vector.load %arg4[%c0_98, %c0_99] : memref<128x256xf32, #tpu.memory_space<vmem>>, vector<128x256xf32>
    %cst_100 = arith.constant dense<0.000000e+00> : vector<8x256xf32>
    %399 = tpu.matmul %397, %398, %cst_100 {dimension_numbers = #tpu.dot_dimension_numbers<[1], [0], [0], [1], [0, 0, 1, 1], [], []>} : vector<8x128xf32>, vector<128x256xf32>, vector<8x256xf32> -> vector<8x256xf32>
    %400 = arith.addf %399, %9 : vector<8x256xf32>
    %401 = vector.extract_strided_slice %400 {offsets = [0, 0], sizes = [8, 192], strides = [1, 1]} : vector<8x256xf32> to vector<8x192xf32>
    %402 = arith.negf %401 : vector<8x192xf32>
    %403 = math.exp %402 : vector<8x192xf32>
    %cst_101 = arith.constant 1.000000e+00 : f32
    %404 = vector.broadcast %cst_101 : f32 to vector<8x192xf32>
    %405 = arith.addf %404, %403 : vector<8x192xf32>
    %406 = arith.divf %404, %405 : vector<8x192xf32>
    %407 = vector.extract_strided_slice %400 {offsets = [0, 192], sizes = [8, 64], strides = [1, 1]} : vector<8x256xf32> to vector<8x64xf32>
    %408 = math.tanh %407 : vector<8x64xf32>
    %409 = vector.extract_strided_slice %406 {offsets = [0, 0], sizes = [8, 64], strides = [1, 1]} : vector<8x192xf32> to vector<8x64xf32>
    %410 = vector.extract_strided_slice %406 {offsets = [0, 64], sizes = [8, 64], strides = [1, 1]} : vector<8x192xf32> to vector<8x64xf32>
    %411 = vector.extract_strided_slice %406 {offsets = [0, 128], sizes = [8, 64], strides = [1, 1]} : vector<8x192xf32> to vector<8x64xf32>
    %412 = arith.mulf %410, %334 : vector<8x64xf32>
    %413 = arith.mulf %409, %408 : vector<8x64xf32>
    %414 = arith.addf %412, %413 : vector<8x64xf32>
    %415 = math.tanh %414 : vector<8x64xf32>
    %416 = arith.mulf %411, %415 : vector<8x64xf32>
    %417 = tpu.concatenate %336, %356 in 1 : vector<8x64xf32>, vector<8x64xf32> -> vector<8x128xf32>
    %c0_102 = arith.constant 0 : index
    %c0_103 = arith.constant 0 : index
    %418 = vector.load %arg6[%c0_102, %c0_103] : memref<128x256xf32, #tpu.memory_space<vmem>>, vector<128x256xf32>
    %cst_104 = arith.constant dense<0.000000e+00> : vector<8x256xf32>
    %419 = tpu.matmul %417, %418, %cst_104 {dimension_numbers = #tpu.dot_dimension_numbers<[1], [0], [0], [1], [0, 0, 1, 1], [], []>} : vector<8x128xf32>, vector<128x256xf32>, vector<8x256xf32> -> vector<8x256xf32>
    %420 = arith.addf %419, %12 : vector<8x256xf32>
    %421 = vector.extract_strided_slice %420 {offsets = [0, 0], sizes = [8, 192], strides = [1, 1]} : vector<8x256xf32> to vector<8x192xf32>
    %422 = arith.negf %421 : vector<8x192xf32>
    %423 = math.exp %422 : vector<8x192xf32>
    %cst_105 = arith.constant 1.000000e+00 : f32
    %424 = vector.broadcast %cst_105 : f32 to vector<8x192xf32>
    %425 = arith.addf %424, %423 : vector<8x192xf32>
    %426 = arith.divf %424, %425 : vector<8x192xf32>
    %427 = vector.extract_strided_slice %420 {offsets = [0, 192], sizes = [8, 64], strides = [1, 1]} : vector<8x256xf32> to vector<8x64xf32>
    %428 = math.tanh %427 : vector<8x64xf32>
    %429 = vector.extract_strided_slice %426 {offsets = [0, 0], sizes = [8, 64], strides = [1, 1]} : vector<8x192xf32> to vector<8x64xf32>
    %430 = vector.extract_strided_slice %426 {offsets = [0, 64], sizes = [8, 64], strides = [1, 1]} : vector<8x192xf32> to vector<8x64xf32>
    %431 = vector.extract_strided_slice %426 {offsets = [0, 128], sizes = [8, 64], strides = [1, 1]} : vector<8x192xf32> to vector<8x64xf32>
    %432 = arith.mulf %430, %354 : vector<8x64xf32>
    %433 = arith.mulf %429, %428 : vector<8x64xf32>
    %434 = arith.addf %432, %433 : vector<8x64xf32>
    %435 = math.tanh %434 : vector<8x64xf32>
    %436 = arith.mulf %431, %435 : vector<8x64xf32>
    %437 = tpu.concatenate %356, %376 in 1 : vector<8x64xf32>, vector<8x64xf32> -> vector<8x128xf32>
    %c0_106 = arith.constant 0 : index
    %c0_107 = arith.constant 0 : index
    %438 = vector.load %arg8[%c0_106, %c0_107] : memref<128x256xf32, #tpu.memory_space<vmem>>, vector<128x256xf32>
    %cst_108 = arith.constant dense<0.000000e+00> : vector<8x256xf32>
    %439 = tpu.matmul %437, %438, %cst_108 {dimension_numbers = #tpu.dot_dimension_numbers<[1], [0], [0], [1], [0, 0, 1, 1], [], []>} : vector<8x128xf32>, vector<128x256xf32>, vector<8x256xf32> -> vector<8x256xf32>
    %440 = arith.addf %439, %15 : vector<8x256xf32>
    %441 = vector.extract_strided_slice %440 {offsets = [0, 0], sizes = [8, 192], strides = [1, 1]} : vector<8x256xf32> to vector<8x192xf32>
    %442 = arith.negf %441 : vector<8x192xf32>
    %443 = math.exp %442 : vector<8x192xf32>
    %cst_109 = arith.constant 1.000000e+00 : f32
    %444 = vector.broadcast %cst_109 : f32 to vector<8x192xf32>
    %445 = arith.addf %444, %443 : vector<8x192xf32>
    %446 = arith.divf %444, %445 : vector<8x192xf32>
    %447 = vector.extract_strided_slice %440 {offsets = [0, 192], sizes = [8, 64], strides = [1, 1]} : vector<8x256xf32> to vector<8x64xf32>
    %448 = math.tanh %447 : vector<8x64xf32>
    %449 = vector.extract_strided_slice %446 {offsets = [0, 0], sizes = [8, 64], strides = [1, 1]} : vector<8x192xf32> to vector<8x64xf32>
    %450 = vector.extract_strided_slice %446 {offsets = [0, 64], sizes = [8, 64], strides = [1, 1]} : vector<8x192xf32> to vector<8x64xf32>
    %451 = vector.extract_strided_slice %446 {offsets = [0, 128], sizes = [8, 64], strides = [1, 1]} : vector<8x192xf32> to vector<8x64xf32>
    %452 = arith.mulf %450, %374 : vector<8x64xf32>
    %453 = arith.mulf %449, %448 : vector<8x64xf32>
    %454 = arith.addf %452, %453 : vector<8x64xf32>
    %455 = math.tanh %454 : vector<8x64xf32>
    %456 = arith.mulf %451, %455 : vector<8x64xf32>
    %c56 = arith.constant 56 : index
    %c0_110 = arith.constant 0 : index
    %457 = vector.load %arg13[%c56, %c0_110] : memref<64x256xf32, #tpu.memory_space<vmem>>, vector<8x256xf32>
    %c0_111 = arith.constant 0 : index
    %c0_112 = arith.constant 0 : index
    %458 = vector.load %arg2[%c0_111, %c0_112] : memref<64x256xf32, #tpu.memory_space<vmem>>, vector<64x256xf32>
    %cst_113 = arith.constant dense<0.000000e+00> : vector<8x256xf32>
    %459 = tpu.matmul %396, %458, %cst_113 {dimension_numbers = #tpu.dot_dimension_numbers<[1], [0], [0], [1], [0, 0, 1, 1], [], []>} : vector<8x64xf32>, vector<64x256xf32>, vector<8x256xf32> -> vector<8x256xf32>
    %460 = arith.addf %457, %459 : vector<8x256xf32>
    %461 = vector.extract_strided_slice %460 {offsets = [0, 0], sizes = [8, 192], strides = [1, 1]} : vector<8x256xf32> to vector<8x192xf32>
    %462 = arith.negf %461 : vector<8x192xf32>
    %463 = math.exp %462 : vector<8x192xf32>
    %cst_114 = arith.constant 1.000000e+00 : f32
    %464 = vector.broadcast %cst_114 : f32 to vector<8x192xf32>
    %465 = arith.addf %464, %463 : vector<8x192xf32>
    %466 = arith.divf %464, %465 : vector<8x192xf32>
    %467 = vector.extract_strided_slice %460 {offsets = [0, 192], sizes = [8, 64], strides = [1, 1]} : vector<8x256xf32> to vector<8x64xf32>
    %468 = math.tanh %467 : vector<8x64xf32>
    %469 = vector.extract_strided_slice %466 {offsets = [0, 0], sizes = [8, 64], strides = [1, 1]} : vector<8x192xf32> to vector<8x64xf32>
    %470 = vector.extract_strided_slice %466 {offsets = [0, 64], sizes = [8, 64], strides = [1, 1]} : vector<8x192xf32> to vector<8x64xf32>
    %471 = vector.extract_strided_slice %466 {offsets = [0, 128], sizes = [8, 64], strides = [1, 1]} : vector<8x192xf32> to vector<8x64xf32>
    %472 = arith.mulf %470, %394 : vector<8x64xf32>
    %473 = arith.mulf %469, %468 : vector<8x64xf32>
    %474 = arith.addf %472, %473 : vector<8x64xf32>
    %475 = math.tanh %474 : vector<8x64xf32>
    %476 = arith.mulf %471, %475 : vector<8x64xf32>
    %477 = tpu.concatenate %396, %416 in 1 : vector<8x64xf32>, vector<8x64xf32> -> vector<8x128xf32>
    %c0_115 = arith.constant 0 : index
    %c0_116 = arith.constant 0 : index
    %478 = vector.load %arg4[%c0_115, %c0_116] : memref<128x256xf32, #tpu.memory_space<vmem>>, vector<128x256xf32>
    %cst_117 = arith.constant dense<0.000000e+00> : vector<8x256xf32>
    %479 = tpu.matmul %477, %478, %cst_117 {dimension_numbers = #tpu.dot_dimension_numbers<[1], [0], [0], [1], [0, 0, 1, 1], [], []>} : vector<8x128xf32>, vector<128x256xf32>, vector<8x256xf32> -> vector<8x256xf32>
    %480 = arith.addf %479, %9 : vector<8x256xf32>
    %481 = vector.extract_strided_slice %480 {offsets = [0, 0], sizes = [8, 192], strides = [1, 1]} : vector<8x256xf32> to vector<8x192xf32>
    %482 = arith.negf %481 : vector<8x192xf32>
    %483 = math.exp %482 : vector<8x192xf32>
    %cst_118 = arith.constant 1.000000e+00 : f32
    %484 = vector.broadcast %cst_118 : f32 to vector<8x192xf32>
    %485 = arith.addf %484, %483 : vector<8x192xf32>
    %486 = arith.divf %484, %485 : vector<8x192xf32>
    %487 = vector.extract_strided_slice %480 {offsets = [0, 192], sizes = [8, 64], strides = [1, 1]} : vector<8x256xf32> to vector<8x64xf32>
    %488 = math.tanh %487 : vector<8x64xf32>
    %489 = vector.extract_strided_slice %486 {offsets = [0, 0], sizes = [8, 64], strides = [1, 1]} : vector<8x192xf32> to vector<8x64xf32>
    %490 = vector.extract_strided_slice %486 {offsets = [0, 64], sizes = [8, 64], strides = [1, 1]} : vector<8x192xf32> to vector<8x64xf32>
    %491 = vector.extract_strided_slice %486 {offsets = [0, 128], sizes = [8, 64], strides = [1, 1]} : vector<8x192xf32> to vector<8x64xf32>
    %492 = arith.mulf %490, %414 : vector<8x64xf32>
    %493 = arith.mulf %489, %488 : vector<8x64xf32>
    %494 = arith.addf %492, %493 : vector<8x64xf32>
    %495 = math.tanh %494 : vector<8x64xf32>
    %496 = arith.mulf %491, %495 : vector<8x64xf32>
    %497 = tpu.concatenate %416, %436 in 1 : vector<8x64xf32>, vector<8x64xf32> -> vector<8x128xf32>
    %c0_119 = arith.constant 0 : index
    %c0_120 = arith.constant 0 : index
    %498 = vector.load %arg6[%c0_119, %c0_120] : memref<128x256xf32, #tpu.memory_space<vmem>>, vector<128x256xf32>
    %cst_121 = arith.constant dense<0.000000e+00> : vector<8x256xf32>
    %499 = tpu.matmul %497, %498, %cst_121 {dimension_numbers = #tpu.dot_dimension_numbers<[1], [0], [0], [1], [0, 0, 1, 1], [], []>} : vector<8x128xf32>, vector<128x256xf32>, vector<8x256xf32> -> vector<8x256xf32>
    %500 = arith.addf %499, %12 : vector<8x256xf32>
    %501 = vector.extract_strided_slice %500 {offsets = [0, 0], sizes = [8, 192], strides = [1, 1]} : vector<8x256xf32> to vector<8x192xf32>
    %502 = arith.negf %501 : vector<8x192xf32>
    %503 = math.exp %502 : vector<8x192xf32>
    %cst_122 = arith.constant 1.000000e+00 : f32
    %504 = vector.broadcast %cst_122 : f32 to vector<8x192xf32>
    %505 = arith.addf %504, %503 : vector<8x192xf32>
    %506 = arith.divf %504, %505 : vector<8x192xf32>
    %507 = vector.extract_strided_slice %500 {offsets = [0, 192], sizes = [8, 64], strides = [1, 1]} : vector<8x256xf32> to vector<8x64xf32>
    %508 = math.tanh %507 : vector<8x64xf32>
    %509 = vector.extract_strided_slice %506 {offsets = [0, 0], sizes = [8, 64], strides = [1, 1]} : vector<8x192xf32> to vector<8x64xf32>
    %510 = vector.extract_strided_slice %506 {offsets = [0, 64], sizes = [8, 64], strides = [1, 1]} : vector<8x192xf32> to vector<8x64xf32>
    %511 = vector.extract_strided_slice %506 {offsets = [0, 128], sizes = [8, 64], strides = [1, 1]} : vector<8x192xf32> to vector<8x64xf32>
    %512 = arith.mulf %510, %434 : vector<8x64xf32>
    %513 = arith.mulf %509, %508 : vector<8x64xf32>
    %514 = arith.addf %512, %513 : vector<8x64xf32>
    %515 = math.tanh %514 : vector<8x64xf32>
    %516 = arith.mulf %511, %515 : vector<8x64xf32>
    %517 = tpu.concatenate %436, %456 in 1 : vector<8x64xf32>, vector<8x64xf32> -> vector<8x128xf32>
    %c0_123 = arith.constant 0 : index
    %c0_124 = arith.constant 0 : index
    %518 = vector.load %arg8[%c0_123, %c0_124] : memref<128x256xf32, #tpu.memory_space<vmem>>, vector<128x256xf32>
    %cst_125 = arith.constant dense<0.000000e+00> : vector<8x256xf32>
    %519 = tpu.matmul %517, %518, %cst_125 {dimension_numbers = #tpu.dot_dimension_numbers<[1], [0], [0], [1], [0, 0, 1, 1], [], []>} : vector<8x128xf32>, vector<128x256xf32>, vector<8x256xf32> -> vector<8x256xf32>
    %520 = arith.addf %519, %15 : vector<8x256xf32>
    %521 = vector.extract_strided_slice %520 {offsets = [0, 0], sizes = [8, 192], strides = [1, 1]} : vector<8x256xf32> to vector<8x192xf32>
    %522 = arith.negf %521 : vector<8x192xf32>
    %523 = math.exp %522 : vector<8x192xf32>
    %cst_126 = arith.constant 1.000000e+00 : f32
    %524 = vector.broadcast %cst_126 : f32 to vector<8x192xf32>
    %525 = arith.addf %524, %523 : vector<8x192xf32>
    %526 = arith.divf %524, %525 : vector<8x192xf32>
    %527 = vector.extract_strided_slice %520 {offsets = [0, 192], sizes = [8, 64], strides = [1, 1]} : vector<8x256xf32> to vector<8x64xf32>
    %528 = math.tanh %527 : vector<8x64xf32>
    %529 = vector.extract_strided_slice %526 {offsets = [0, 0], sizes = [8, 64], strides = [1, 1]} : vector<8x192xf32> to vector<8x64xf32>
    %530 = vector.extract_strided_slice %526 {offsets = [0, 64], sizes = [8, 64], strides = [1, 1]} : vector<8x192xf32> to vector<8x64xf32>
    %531 = vector.extract_strided_slice %526 {offsets = [0, 128], sizes = [8, 64], strides = [1, 1]} : vector<8x192xf32> to vector<8x64xf32>
    %532 = arith.mulf %530, %454 : vector<8x64xf32>
    %533 = arith.mulf %529, %528 : vector<8x64xf32>
    %534 = arith.addf %532, %533 : vector<8x64xf32>
    %535 = math.tanh %534 : vector<8x64xf32>
    %536 = arith.mulf %531, %535 : vector<8x64xf32>
    %537 = tpu.concatenate %476, %496 in 1 : vector<8x64xf32>, vector<8x64xf32> -> vector<8x128xf32>
    %c0_127 = arith.constant 0 : index
    %c0_128 = arith.constant 0 : index
    %538 = vector.load %arg4[%c0_127, %c0_128] : memref<128x256xf32, #tpu.memory_space<vmem>>, vector<128x256xf32>
    %cst_129 = arith.constant dense<0.000000e+00> : vector<8x256xf32>
    %539 = tpu.matmul %537, %538, %cst_129 {dimension_numbers = #tpu.dot_dimension_numbers<[1], [0], [0], [1], [0, 0, 1, 1], [], []>} : vector<8x128xf32>, vector<128x256xf32>, vector<8x256xf32> -> vector<8x256xf32>
    %540 = arith.addf %539, %9 : vector<8x256xf32>
    %541 = vector.extract_strided_slice %540 {offsets = [0, 0], sizes = [8, 192], strides = [1, 1]} : vector<8x256xf32> to vector<8x192xf32>
    %542 = arith.negf %541 : vector<8x192xf32>
    %543 = math.exp %542 : vector<8x192xf32>
    %cst_130 = arith.constant 1.000000e+00 : f32
    %544 = vector.broadcast %cst_130 : f32 to vector<8x192xf32>
    %545 = arith.addf %544, %543 : vector<8x192xf32>
    %546 = arith.divf %544, %545 : vector<8x192xf32>
    %547 = vector.extract_strided_slice %540 {offsets = [0, 192], sizes = [8, 64], strides = [1, 1]} : vector<8x256xf32> to vector<8x64xf32>
    %548 = math.tanh %547 : vector<8x64xf32>
    %549 = vector.extract_strided_slice %546 {offsets = [0, 0], sizes = [8, 64], strides = [1, 1]} : vector<8x192xf32> to vector<8x64xf32>
    %550 = vector.extract_strided_slice %546 {offsets = [0, 64], sizes = [8, 64], strides = [1, 1]} : vector<8x192xf32> to vector<8x64xf32>
    %551 = vector.extract_strided_slice %546 {offsets = [0, 128], sizes = [8, 64], strides = [1, 1]} : vector<8x192xf32> to vector<8x64xf32>
    %552 = arith.mulf %550, %494 : vector<8x64xf32>
    %553 = arith.mulf %549, %548 : vector<8x64xf32>
    %554 = arith.addf %552, %553 : vector<8x64xf32>
    %555 = math.tanh %554 : vector<8x64xf32>
    %556 = arith.mulf %551, %555 : vector<8x64xf32>
    %557 = tpu.concatenate %496, %516 in 1 : vector<8x64xf32>, vector<8x64xf32> -> vector<8x128xf32>
    %c0_131 = arith.constant 0 : index
    %c0_132 = arith.constant 0 : index
    %558 = vector.load %arg6[%c0_131, %c0_132] : memref<128x256xf32, #tpu.memory_space<vmem>>, vector<128x256xf32>
    %cst_133 = arith.constant dense<0.000000e+00> : vector<8x256xf32>
    %559 = tpu.matmul %557, %558, %cst_133 {dimension_numbers = #tpu.dot_dimension_numbers<[1], [0], [0], [1], [0, 0, 1, 1], [], []>} : vector<8x128xf32>, vector<128x256xf32>, vector<8x256xf32> -> vector<8x256xf32>
    %560 = arith.addf %559, %12 : vector<8x256xf32>
    %561 = vector.extract_strided_slice %560 {offsets = [0, 0], sizes = [8, 192], strides = [1, 1]} : vector<8x256xf32> to vector<8x192xf32>
    %562 = arith.negf %561 : vector<8x192xf32>
    %563 = math.exp %562 : vector<8x192xf32>
    %cst_134 = arith.constant 1.000000e+00 : f32
    %564 = vector.broadcast %cst_134 : f32 to vector<8x192xf32>
    %565 = arith.addf %564, %563 : vector<8x192xf32>
    %566 = arith.divf %564, %565 : vector<8x192xf32>
    %567 = vector.extract_strided_slice %560 {offsets = [0, 192], sizes = [8, 64], strides = [1, 1]} : vector<8x256xf32> to vector<8x64xf32>
    %568 = math.tanh %567 : vector<8x64xf32>
    %569 = vector.extract_strided_slice %566 {offsets = [0, 0], sizes = [8, 64], strides = [1, 1]} : vector<8x192xf32> to vector<8x64xf32>
    %570 = vector.extract_strided_slice %566 {offsets = [0, 64], sizes = [8, 64], strides = [1, 1]} : vector<8x192xf32> to vector<8x64xf32>
    %571 = vector.extract_strided_slice %566 {offsets = [0, 128], sizes = [8, 64], strides = [1, 1]} : vector<8x192xf32> to vector<8x64xf32>
    %572 = arith.mulf %570, %514 : vector<8x64xf32>
    %573 = arith.mulf %569, %568 : vector<8x64xf32>
    %574 = arith.addf %572, %573 : vector<8x64xf32>
    %575 = math.tanh %574 : vector<8x64xf32>
    %576 = arith.mulf %571, %575 : vector<8x64xf32>
    %577 = tpu.concatenate %516, %536 in 1 : vector<8x64xf32>, vector<8x64xf32> -> vector<8x128xf32>
    %c0_135 = arith.constant 0 : index
    %c0_136 = arith.constant 0 : index
    %578 = vector.load %arg8[%c0_135, %c0_136] : memref<128x256xf32, #tpu.memory_space<vmem>>, vector<128x256xf32>
    %cst_137 = arith.constant dense<0.000000e+00> : vector<8x256xf32>
    %579 = tpu.matmul %577, %578, %cst_137 {dimension_numbers = #tpu.dot_dimension_numbers<[1], [0], [0], [1], [0, 0, 1, 1], [], []>} : vector<8x128xf32>, vector<128x256xf32>, vector<8x256xf32> -> vector<8x256xf32>
    %580 = arith.addf %579, %15 : vector<8x256xf32>
    %581 = vector.extract_strided_slice %580 {offsets = [0, 0], sizes = [8, 192], strides = [1, 1]} : vector<8x256xf32> to vector<8x192xf32>
    %582 = arith.negf %581 : vector<8x192xf32>
    %583 = math.exp %582 : vector<8x192xf32>
    %cst_138 = arith.constant 1.000000e+00 : f32
    %584 = vector.broadcast %cst_138 : f32 to vector<8x192xf32>
    %585 = arith.addf %584, %583 : vector<8x192xf32>
    %586 = arith.divf %584, %585 : vector<8x192xf32>
    %587 = vector.extract_strided_slice %580 {offsets = [0, 192], sizes = [8, 64], strides = [1, 1]} : vector<8x256xf32> to vector<8x64xf32>
    %588 = math.tanh %587 : vector<8x64xf32>
    %589 = vector.extract_strided_slice %586 {offsets = [0, 0], sizes = [8, 64], strides = [1, 1]} : vector<8x192xf32> to vector<8x64xf32>
    %590 = vector.extract_strided_slice %586 {offsets = [0, 64], sizes = [8, 64], strides = [1, 1]} : vector<8x192xf32> to vector<8x64xf32>
    %591 = vector.extract_strided_slice %586 {offsets = [0, 128], sizes = [8, 64], strides = [1, 1]} : vector<8x192xf32> to vector<8x64xf32>
    %592 = arith.mulf %590, %534 : vector<8x64xf32>
    %593 = arith.mulf %589, %588 : vector<8x64xf32>
    %594 = arith.addf %592, %593 : vector<8x64xf32>
    %595 = math.tanh %594 : vector<8x64xf32>
    %596 = arith.mulf %591, %595 : vector<8x64xf32>
    %597 = tpu.concatenate %556, %576 in 1 : vector<8x64xf32>, vector<8x64xf32> -> vector<8x128xf32>
    %c0_139 = arith.constant 0 : index
    %c0_140 = arith.constant 0 : index
    %598 = vector.load %arg6[%c0_139, %c0_140] : memref<128x256xf32, #tpu.memory_space<vmem>>, vector<128x256xf32>
    %cst_141 = arith.constant dense<0.000000e+00> : vector<8x256xf32>
    %599 = tpu.matmul %597, %598, %cst_141 {dimension_numbers = #tpu.dot_dimension_numbers<[1], [0], [0], [1], [0, 0, 1, 1], [], []>} : vector<8x128xf32>, vector<128x256xf32>, vector<8x256xf32> -> vector<8x256xf32>
    %600 = arith.addf %599, %12 : vector<8x256xf32>
    %601 = vector.extract_strided_slice %600 {offsets = [0, 0], sizes = [8, 192], strides = [1, 1]} : vector<8x256xf32> to vector<8x192xf32>
    %602 = arith.negf %601 : vector<8x192xf32>
    %603 = math.exp %602 : vector<8x192xf32>
    %cst_142 = arith.constant 1.000000e+00 : f32
    %604 = vector.broadcast %cst_142 : f32 to vector<8x192xf32>
    %605 = arith.addf %604, %603 : vector<8x192xf32>
    %606 = arith.divf %604, %605 : vector<8x192xf32>
    %607 = vector.extract_strided_slice %600 {offsets = [0, 192], sizes = [8, 64], strides = [1, 1]} : vector<8x256xf32> to vector<8x64xf32>
    %608 = math.tanh %607 : vector<8x64xf32>
    %609 = vector.extract_strided_slice %606 {offsets = [0, 0], sizes = [8, 64], strides = [1, 1]} : vector<8x192xf32> to vector<8x64xf32>
    %610 = vector.extract_strided_slice %606 {offsets = [0, 64], sizes = [8, 64], strides = [1, 1]} : vector<8x192xf32> to vector<8x64xf32>
    %611 = vector.extract_strided_slice %606 {offsets = [0, 128], sizes = [8, 64], strides = [1, 1]} : vector<8x192xf32> to vector<8x64xf32>
    %612 = arith.mulf %610, %574 : vector<8x64xf32>
    %613 = arith.mulf %609, %608 : vector<8x64xf32>
    %614 = arith.addf %612, %613 : vector<8x64xf32>
    %615 = math.tanh %614 : vector<8x64xf32>
    %616 = arith.mulf %611, %615 : vector<8x64xf32>
    %617 = tpu.concatenate %576, %596 in 1 : vector<8x64xf32>, vector<8x64xf32> -> vector<8x128xf32>
    %c0_143 = arith.constant 0 : index
    %c0_144 = arith.constant 0 : index
    %618 = vector.load %arg8[%c0_143, %c0_144] : memref<128x256xf32, #tpu.memory_space<vmem>>, vector<128x256xf32>
    %cst_145 = arith.constant dense<0.000000e+00> : vector<8x256xf32>
    %619 = tpu.matmul %617, %618, %cst_145 {dimension_numbers = #tpu.dot_dimension_numbers<[1], [0], [0], [1], [0, 0, 1, 1], [], []>} : vector<8x128xf32>, vector<128x256xf32>, vector<8x256xf32> -> vector<8x256xf32>
    %620 = arith.addf %619, %15 : vector<8x256xf32>
    %621 = vector.extract_strided_slice %620 {offsets = [0, 0], sizes = [8, 192], strides = [1, 1]} : vector<8x256xf32> to vector<8x192xf32>
    %622 = arith.negf %621 : vector<8x192xf32>
    %623 = math.exp %622 : vector<8x192xf32>
    %cst_146 = arith.constant 1.000000e+00 : f32
    %624 = vector.broadcast %cst_146 : f32 to vector<8x192xf32>
    %625 = arith.addf %624, %623 : vector<8x192xf32>
    %626 = arith.divf %624, %625 : vector<8x192xf32>
    %627 = vector.extract_strided_slice %620 {offsets = [0, 192], sizes = [8, 64], strides = [1, 1]} : vector<8x256xf32> to vector<8x64xf32>
    %628 = math.tanh %627 : vector<8x64xf32>
    %629 = vector.extract_strided_slice %626 {offsets = [0, 0], sizes = [8, 64], strides = [1, 1]} : vector<8x192xf32> to vector<8x64xf32>
    %630 = vector.extract_strided_slice %626 {offsets = [0, 64], sizes = [8, 64], strides = [1, 1]} : vector<8x192xf32> to vector<8x64xf32>
    %631 = vector.extract_strided_slice %626 {offsets = [0, 128], sizes = [8, 64], strides = [1, 1]} : vector<8x192xf32> to vector<8x64xf32>
    %632 = arith.mulf %630, %594 : vector<8x64xf32>
    %633 = arith.mulf %629, %628 : vector<8x64xf32>
    %634 = arith.addf %632, %633 : vector<8x64xf32>
    %635 = math.tanh %634 : vector<8x64xf32>
    %636 = arith.mulf %631, %635 : vector<8x64xf32>
    %637 = tpu.concatenate %616, %636 in 1 : vector<8x64xf32>, vector<8x64xf32> -> vector<8x128xf32>
    %c0_147 = arith.constant 0 : index
    %c0_148 = arith.constant 0 : index
    %638 = vector.load %arg8[%c0_147, %c0_148] : memref<128x256xf32, #tpu.memory_space<vmem>>, vector<128x256xf32>
    %cst_149 = arith.constant dense<0.000000e+00> : vector<8x256xf32>
    %639 = tpu.matmul %637, %638, %cst_149 {dimension_numbers = #tpu.dot_dimension_numbers<[1], [0], [0], [1], [0, 0, 1, 1], [], []>} : vector<8x128xf32>, vector<128x256xf32>, vector<8x256xf32> -> vector<8x256xf32>
    %640 = arith.addf %639, %15 : vector<8x256xf32>
    %641 = vector.extract_strided_slice %640 {offsets = [0, 0], sizes = [8, 192], strides = [1, 1]} : vector<8x256xf32> to vector<8x192xf32>
    %642 = arith.negf %641 : vector<8x192xf32>
    %643 = math.exp %642 : vector<8x192xf32>
    %cst_150 = arith.constant 1.000000e+00 : f32
    %644 = vector.broadcast %cst_150 : f32 to vector<8x192xf32>
    %645 = arith.addf %644, %643 : vector<8x192xf32>
    %646 = arith.divf %644, %645 : vector<8x192xf32>
    %647 = vector.extract_strided_slice %640 {offsets = [0, 192], sizes = [8, 64], strides = [1, 1]} : vector<8x256xf32> to vector<8x64xf32>
    %648 = math.tanh %647 : vector<8x64xf32>
    %649 = vector.extract_strided_slice %646 {offsets = [0, 0], sizes = [8, 64], strides = [1, 1]} : vector<8x192xf32> to vector<8x64xf32>
    %650 = vector.extract_strided_slice %646 {offsets = [0, 64], sizes = [8, 64], strides = [1, 1]} : vector<8x192xf32> to vector<8x64xf32>
    %651 = vector.extract_strided_slice %646 {offsets = [0, 128], sizes = [8, 64], strides = [1, 1]} : vector<8x192xf32> to vector<8x64xf32>
    %652 = arith.mulf %650, %634 : vector<8x64xf32>
    %653 = arith.mulf %649, %648 : vector<8x64xf32>
    %654 = arith.addf %652, %653 : vector<8x64xf32>
    %655 = math.tanh %654 : vector<8x64xf32>
    %656 = arith.mulf %651, %655 : vector<8x64xf32>
    %c0_151 = arith.constant 0 : index
    %c0_152 = arith.constant 0 : index
    %657 = vector.load %arg10[%c0_151, %c0_152] : memref<64x128xf32, #tpu.memory_space<vmem>>, vector<64x128xf32>
    %cst_153 = arith.constant dense<0.000000e+00> : vector<8x128xf32>
    %658 = tpu.matmul %656, %657, %cst_153 {dimension_numbers = #tpu.dot_dimension_numbers<[1], [0], [0], [1], [0, 0, 1, 1], [], []>} : vector<8x64xf32>, vector<64x128xf32>, vector<8x128xf32> -> vector<8x128xf32>
    %c0_154 = arith.constant 0 : index
    %c0_155 = arith.constant 0 : index
    %659 = vector.load %arg11[%c0_154, %c0_155] : memref<1x128xf32, #tpu.memory_space<vmem>>, vector<1x128xf32>
    %660 = vector.broadcast %659 : vector<1x128xf32> to vector<8x128xf32>
    %661 = arith.addf %658, %660 : vector<8x128xf32>
    %c0_156 = arith.constant 0 : index
    %c0_157 = arith.constant 0 : index
    %662 = vector.load %arg12[%c0_156, %c0_157] : memref<8x128xf32, #tpu.memory_space<vmem>>, vector<8x128xf32>
    tpu.vector_store %arg12[%c0_156, %c0_157], %661 {strides = array<i32>} : memref<8x128xf32, #tpu.memory_space<vmem>>, vector<8x128xf32>,
    return
  }
}

</mosaic_0001>

<llo_original>
// kernel: _lstm_model_forward.1
$region0: #{_lstm_model_forward.1}
  #allocation0 [shape = 'u32[]', space=smem, size = 0x4, offset = 0x4, fixed_abs, tag = 'smem constant byte address 0x4 - core index']
  #allocation1 [shape = 'u32[72,128]{1,0:T(1,128)}', space=vmem, size = 0x9000, scoped, tag = 'internal scratch']
  #allocation2 [shape = 'f32[64,256]{1,0:T(8,128)}', space=vmem, size = 0x10000, scoped, tag = 'scratch operand']
  %s0 = inlined_call_operand.vmem [shape: f32[64,128], index: 0, kind: input, shape index: {}]
  %s1 = inlined_call_operand.vmem [shape: f32[128,256], index: 1, kind: input, shape index: {}]
  %s2 = inlined_call_operand.vmem [shape: f32[64,256], index: 2, kind: input, shape index: {}]
  %s3 = inlined_call_operand.vmem [shape: f32[1,256], index: 3, kind: input, shape index: {}]
  %s4 = inlined_call_operand.vmem [shape: f32[128,256], index: 4, kind: input, shape index: {}]
  %s5 = inlined_call_operand.vmem [shape: f32[1,256], index: 5, kind: input, shape index: {}]
  %s6 = inlined_call_operand.vmem [shape: f32[128,256], index: 6, kind: input, shape index: {}]
  %s7 = inlined_call_operand.vmem [shape: f32[1,256], index: 7, kind: input, shape index: {}]
  %s8 = inlined_call_operand.vmem [shape: f32[128,256], index: 8, kind: input, shape index: {}]
  %s9 = inlined_call_operand.vmem [shape: f32[1,256], index: 9, kind: input, shape index: {}]
  %s10 = inlined_call_operand.vmem [shape: f32[64,128], index: 10, kind: input, shape index: {}]
  %s11 = inlined_call_operand.vmem [shape: f32[1,128], index: 11, kind: input, shape index: {}]
  %s12 = inlined_call_operand.vmem [shape: f32[8,128], index: 12, kind: output, shape index: {}]
  %s13 = sld [smem:[#allocation0]]
  $region58: #{_lstm_model_forward.1} parent=0
    _
  %s15 = ssub.s32 1, %s13
  %s16 = scalar_select 0, %s15, %s13
  // Predicated region
  $region2: #{_lstm_model_forward.1} parent=0 // pred_check
    _
  $region3: #{_lstm_model_forward.1} parent=0 // pred_check_branch
    %18 = sbr.rel (0) target = $region5
  $region4: #{_lstm_model_forward.1} parent=0 // pred_region
    _
  $region5: #{_lstm_model_forward.1} parent=0 // pred_fallthru
    _
  // Predicated region
  $region6: #{_lstm_model_forward.1} parent=0 // pred_check
    _
  $region7: #{_lstm_model_forward.1} parent=0 // pred_check_branch
    %20 = sbr.rel (0) target = $region9
  $region8: #{_lstm_model_forward.1} parent=0 // pred_region
    _
  $region9: #{_lstm_model_forward.1} parent=0 // pred_fallthru
    _
  // Predicated region
  $region10: #{_lstm_model_forward.1} parent=0 // pred_check
    _
  $region11: #{_lstm_model_forward.1} parent=0 // pred_check_branch
    %22 = sbr.rel (0) target = $region13
  $region12: #{_lstm_model_forward.1} parent=0 // pred_region
    _
  $region13: #{_lstm_model_forward.1} parent=0 // pred_fallthru
    _
  // Predicated region
  $region14: #{_lstm_model_forward.1} parent=0 // pred_check
    _
  $region15: #{_lstm_model_forward.1} parent=0 // pred_check_branch
    %24 = sbr.rel (0) target = $region17
  $region16: #{_lstm_model_forward.1} parent=0 // pred_region
    _
  $region17: #{_lstm_model_forward.1} parent=0 // pred_fallthru
    _
  // Predicated region
  $region18: #{_lstm_model_forward.1} parent=0 // pred_check
    _
  $region19: #{_lstm_model_forward.1} parent=0 // pred_check_branch
    %26 = sbr.rel (0) target = $region21
  $region20: #{_lstm_model_forward.1} parent=0 // pred_region
    _
  $region21: #{_lstm_model_forward.1} parent=0 // pred_fallthru
    _
  // Predicated region
  $region22: #{_lstm_model_forward.1} parent=0 // pred_check
    _
  $region23: #{_lstm_model_forward.1} parent=0 // pred_check_branch
    %28 = sbr.rel (0) target = $region25
  $region24: #{_lstm_model_forward.1} parent=0 // pred_region
    _
  $region25: #{_lstm_model_forward.1} parent=0 // pred_fallthru
    _
  // Predicated region
  $region26: #{_lstm_model_forward.1} parent=0 // pred_check
    _
  $region27: #{_lstm_model_forward.1} parent=0 // pred_check_branch
    %30 = sbr.rel (0) target = $region29
  $region28: #{_lstm_model_forward.1} parent=0 // pred_region
    _
  $region29: #{_lstm_model_forward.1} parent=0 // pred_fallthru
    _
  // Predicated region
  $region30: #{_lstm_model_forward.1} parent=0 // pred_check
    _
  $region31: #{_lstm_model_forward.1} parent=0 // pred_check_branch
    %32 = sbr.rel (0) target = $region33
  $region32: #{_lstm_model_forward.1} parent=0 // pred_region
    _
  $region33: #{_lstm_model_forward.1} parent=0 // pred_fallthru
    _
  // Predicated region
  $region34: #{_lstm_model_forward.1} parent=0 // pred_check
    _
  $region35: #{_lstm_model_forward.1} parent=0 // pred_check_branch
    %34 = sbr.rel (0) target = $region37
  $region36: #{_lstm_model_forward.1} parent=0 // pred_region
    _
  $region37: #{_lstm_model_forward.1} parent=0 // pred_fallthru
    _
  // Predicated region
  $region38: #{_lstm_model_forward.1} parent=0 // pred_check
    _
  $region39: #{_lstm_model_forward.1} parent=0 // pred_check_branch
    %36 = sbr.rel (0) target = $region41
  $region40: #{_lstm_model_forward.1} parent=0 // pred_region
    _
  $region41: #{_lstm_model_forward.1} parent=0 // pred_fallthru
    _
  // Predicated region
  $region42: #{_lstm_model_forward.1} parent=0 // pred_check
    _
  $region43: #{_lstm_model_forward.1} parent=0 // pred_check_branch
    %38 = sbr.rel (0) target = $region45
  $region44: #{_lstm_model_forward.1} parent=0 // pred_region
    _
  $region45: #{_lstm_model_forward.1} parent=0 // pred_fallthru
    _
  // Predicated region
  $region46: #{_lstm_model_forward.1} parent=0 // pred_check
    _
  $region47: #{_lstm_model_forward.1} parent=0 // pred_check_branch
    %40 = sbr.rel (0) target = $region49
  $region48: #{_lstm_model_forward.1} parent=0 // pred_region
    _
  $region49: #{_lstm_model_forward.1} parent=0 // pred_fallthru
    _
  %v41 = vld [vmem:[%s0] sm:$0xff]
  %v42 = vld [vmem:[%s0 + $0x8] sm:$0xff]
  %v43 = vld [vmem:[%s0 + $0x10] sm:$0xff]
  %v44 = vld [vmem:[%s0 + $0x18] sm:$0xff]
  %v45 = vld [vmem:[%s0 + $0x20] sm:$0xff]
  %v46 = vld [vmem:[%s0 + $0x28] sm:$0xff]
  %v47 = vld [vmem:[%s0 + $0x30] sm:$0xff]
  %v48 = vld [vmem:[%s0 + $0x38] sm:$0xff]
  %v49 = vld [vmem:[%s1] sm:$0xff]
  %v50 = vld [vmem:[%s1 + $0x8] sm:$0xff]
  %v51 = vld [vmem:[%s1 + $0x10] sm:$0xff]
  %v52 = vld [vmem:[%s1 + $0x18] sm:$0xff]
  %v53 = vld [vmem:[%s1 + $0x20] sm:$0xff]
  %v54 = vld [vmem:[%s1 + $0x28] sm:$0xff]
  %v55 = vld [vmem:[%s1 + $0x30] sm:$0xff]
  %v56 = vld [vmem:[%s1 + $0x38] sm:$0xff]
  %v57 = vld [vmem:[%s1 + $0x40] sm:$0xff]
  %v58 = vld [vmem:[%s1 + $0x48] sm:$0xff]
  %v59 = vld [vmem:[%s1 + $0x50] sm:$0xff]
  %v60 = vld [vmem:[%s1 + $0x58] sm:$0xff]
  %v61 = vld [vmem:[%s1 + $0x60] sm:$0xff]
  %v62 = vld [vmem:[%s1 + $0x68] sm:$0xff]
  %v63 = vld [vmem:[%s1 + $0x70] sm:$0xff]
  %v64 = vld [vmem:[%s1 + $0x78] sm:$0xff]
  %v65 = vld [vmem:[%s1 + $0x80] sm:$0xff]
  %v66 = vld [vmem:[%s1 + $0x88] sm:$0xff]
  %v67 = vld [vmem:[%s1 + $0x90] sm:$0xff]
  %v68 = vld [vmem:[%s1 + $0x98] sm:$0xff]
  %v69 = vld [vmem:[%s1 + $0xa0] sm:$0xff]
  %v70 = vld [vmem:[%s1 + $0xa8] sm:$0xff]
  %v71 = vld [vmem:[%s1 + $0xb0] sm:$0xff]
  %v72 = vld [vmem:[%s1 + $0xb8] sm:$0xff]
  %v73 = vld [vmem:[%s1 + $0xc0] sm:$0xff]
  %v74 = vld [vmem:[%s1 + $0xc8] sm:$0xff]
  %v75 = vld [vmem:[%s1 + $0xd0] sm:$0xff]
  %v76 = vld [vmem:[%s1 + $0xd8] sm:$0xff]
  %v77 = vld [vmem:[%s1 + $0xe0] sm:$0xff]
  %v78 = vld [vmem:[%s1 + $0xe8] sm:$0xff]
  %v79 = vld [vmem:[%s1 + $0xf0] sm:$0xff]
  %v80 = vld [vmem:[%s1 + $0xf8] sm:$0xff]
  %v81 = vld [vmem:[%s3] sm:$0x3]
  %v83 = vperm.slane %v81, 0
  %v84 = vperm.slane %v81, 1
  %87 = vmatpush.msra.mxu0 %v79
  %88 = vmatpush.msra.mxu0 %v77
  %89 = vmatpush.msra.mxu0 %v75
  %90 = vmatpush.msra.mxu0 %v73
  %91 = vmatpush.msra.mxu0 %v71
  %92 = vmatpush.msra.mxu0 %v69
  %93 = vmatpush.msra.mxu0 %v67
  %94 = vmatpush.msra.mxu0 %v65
  %95 = vmatpush.msra.mxu0 %v63
  %96 = vmatpush.msra.mxu0 %v61
  %97 = vmatpush.msra.mxu0 %v59
  %98 = vmatpush.msra.mxu0 %v57
  %99 = vmatpush.msra.mxu0 %v55
  %100 = vmatpush.msra.mxu0 %v53
  %101 = vmatpush.msra.mxu0 %v51
  %102 = vmatpush.msra.mxu0 %v49
  %103 = vmatmul.f32.gmra.mxu0 %v41
  %v104 = vpop.f32.mrf.mxu0
  %v105 = vadd.f32 %v83, %v104
  %106 = vmatmul.f32.gmra.mxu0 %v42
  %v107 = vpop.f32.mrf.mxu0
  %v108 = vadd.f32 %v83, %v107
  %109 = vmatmul.f32.gmra.mxu0 %v43
  %v110 = vpop.f32.mrf.mxu0
  %v111 = vadd.f32 %v83, %v110
  %112 = vmatmul.f32.gmra.mxu0 %v44
  %v113 = vpop.f32.mrf.mxu0
  %v114 = vadd.f32 %v83, %v113
  %115 = vmatmul.f32.gmra.mxu0 %v45
  %v116 = vpop.f32.mrf.mxu0
  %v117 = vadd.f32 %v83, %v116
  %118 = vmatmul.f32.gmra.mxu0 %v46
  %v119 = vpop.f32.mrf.mxu0
  %v120 = vadd.f32 %v83, %v119
  %121 = vmatmul.f32.gmra.mxu0 %v47
  %v122 = vpop.f32.mrf.mxu0
  %v123 = vadd.f32 %v83, %v122
  %124 = vmatmul.f32.gmra.mxu0 %v48
  %v125 = vpop.f32.mrf.mxu0
  %v126 = vadd.f32 %v83, %v125
  %127 = vdwg.mxu0
  %128 = vmatpush.msra.mxu0 %v80
  %129 = vmatpush.msra.mxu0 %v78
  %130 = vmatpush.msra.mxu0 %v76
  %131 = vmatpush.msra.mxu0 %v74
  %132 = vmatpush.msra.mxu0 %v72
  %133 = vmatpush.msra.mxu0 %v70
  %134 = vmatpush.msra.mxu0 %v68
  %135 = vmatpush.msra.mxu0 %v66
  %136 = vmatpush.msra.mxu0 %v64
  %137 = vmatpush.msra.mxu0 %v62
  %138 = vmatpush.msra.mxu0 %v60
  %139 = vmatpush.msra.mxu0 %v58
  %140 = vmatpush.msra.mxu0 %v56
  %141 = vmatpush.msra.mxu0 %v54
  %142 = vmatpush.msra.mxu0 %v52
  %143 = vmatpush.msra.mxu0 %v50
  %144 = vmatmul.f32.gmra.mxu0 %v41
  %v145 = vpop.f32.mrf.mxu0
  %v146 = vadd.f32 %v84, %v145
  %147 = vmatmul.f32.gmra.mxu0 %v42
  %v148 = vpop.f32.mrf.mxu0
  %v149 = vadd.f32 %v84, %v148
  %150 = vmatmul.f32.gmra.mxu0 %v43
  %v151 = vpop.f32.mrf.mxu0
  %v152 = vadd.f32 %v84, %v151
  %153 = vmatmul.f32.gmra.mxu0 %v44
  %v154 = vpop.f32.mrf.mxu0
  %v155 = vadd.f32 %v84, %v154
  %156 = vmatmul.f32.gmra.mxu0 %v45
  %v157 = vpop.f32.mrf.mxu0
  %v158 = vadd.f32 %v84, %v157
  %159 = vmatmul.f32.gmra.mxu0 %v46
  %v160 = vpop.f32.mrf.mxu0
  %v161 = vadd.f32 %v84, %v160
  %162 = vmatmul.f32.gmra.mxu0 %v47
  %v163 = vpop.f32.mrf.mxu0
  %v164 = vadd.f32 %v84, %v163
  %165 = vmatmul.f32.gmra.mxu0 %v48
  %v166 = vpop.f32.mrf.mxu0
  %v167 = vadd.f32 %v84, %v166
  %168 = vdwg.mxu0
  %169 = vst [vmem:[#allocation2] sm:$0xff] %v105
  %170 = vst [vmem:[#allocation2 + $0x8] sm:$0xff] %v146
  %171 = vst [vmem:[#allocation2 + $0x10] sm:$0xff] %v108
  %172 = vst [vmem:[#allocation2 + $0x18] sm:$0xff] %v149
  %173 = vst [vmem:[#allocation2 + $0x20] sm:$0xff] %v111
  %174 = vst [vmem:[#allocation2 + $0x28] sm:$0xff] %v152
  %175 = vst [vmem:[#allocation2 + $0x30] sm:$0xff] %v114
  %176 = vst [vmem:[#allocation2 + $0x38] sm:$0xff] %v155
  %177 = vst [vmem:[#allocation2 + $0x40] sm:$0xff] %v117
  %178 = vst [vmem:[#allocation2 + $0x48] sm:$0xff] %v158
  %179 = vst [vmem:[#allocation2 + $0x50] sm:$0xff] %v120
  %180 = vst [vmem:[#allocation2 + $0x58] sm:$0xff] %v161
  %181 = vst [vmem:[#allocation2 + $0x60] sm:$0xff] %v123
  %182 = vst [vmem:[#allocation2 + $0x68] sm:$0xff] %v164
  %183 = vst [vmem:[#allocation2 + $0x70] sm:$0xff] %v126
  %184 = vst [vmem:[#allocation2 + $0x78] sm:$0xff] %v167
  %v185 = vld [vmem:[%s5] sm:$0x3]
  %v187 = vperm.slane %v185, 0
  %v188 = vperm.slane %v185, 1
  %v191 = vld [vmem:[%s7] sm:$0x3]
  %v193 = vperm.slane %v191, 0
  %v194 = vperm.slane %v191, 1
  %v197 = vld [vmem:[%s9] sm:$0x3]
  %v199 = vperm.slane %v197, 0
  %v200 = vperm.slane %v197, 1
  %v203 = vld [vmem:[#allocation2] sm:$0xff]
  %v204 = vld [vmem:[#allocation2 + $0x8] sm:$0xff]
  %v205 = vld [vmem:[%s2] sm:$0xff]
  %v206 = vld [vmem:[%s2 + $0x8] sm:$0xff]
  %v207 = vld [vmem:[%s2 + $0x10] sm:$0xff]
  %v208 = vld [vmem:[%s2 + $0x18] sm:$0xff]
  %v209 = vld [vmem:[%s2 + $0x20] sm:$0xff]
  %v210 = vld [vmem:[%s2 + $0x28] sm:$0xff]
  %v211 = vld [vmem:[%s2 + $0x30] sm:$0xff]
  %v212 = vld [vmem:[%s2 + $0x38] sm:$0xff]
  %v213 = vld [vmem:[%s2 + $0x40] sm:$0xff]
  %v214 = vld [vmem:[%s2 + $0x48] sm:$0xff]
  %v215 = vld [vmem:[%s2 + $0x50] sm:$0xff]
  %v216 = vld [vmem:[%s2 + $0x58] sm:$0xff]
  %v217 = vld [vmem:[%s2 + $0x60] sm:$0xff]
  %v218 = vld [vmem:[%s2 + $0x68] sm:$0xff]
  %v219 = vld [vmem:[%s2 + $0x70] sm:$0xff]
  %v220 = vld [vmem:[%s2 + $0x78] sm:$0xff]
  %vm221 = vcmask 523264
  %v223 = vsel %vm221, 0.0, 0
  %225 = vmatpush.msra.mxu0 0.0
  %226 = vmatpush.msra.mxu0 0.0
  %227 = vmatpush.msra.mxu0 0.0
  %228 = vmatpush.msra.mxu0 0.0
  %229 = vmatpush.msra.mxu0 0.0
  %230 = vmatpush.msra.mxu0 0.0
  %231 = vmatpush.msra.mxu0 0.0
  %232 = vmatpush.msra.mxu0 0.0
  %233 = vmatpush.msra.mxu0 %v219
  %234 = vmatpush.msra.mxu0 %v217
  %235 = vmatpush.msra.mxu0 %v215
  %236 = vmatpush.msra.mxu0 %v213
  %237 = vmatpush.msra.mxu0 %v211
  %238 = vmatpush.msra.mxu0 %v209
  %239 = vmatpush.msra.mxu0 %v207
  %240 = vmatpush.msra.mxu0 %v205
  %241 = vmatmul.f32.gmra.mxu0 %v223
  %v242 = vpop.f32.mrf.mxu0
  %v243 = vadd.f32 0.0, %v242
  %244 = vdwg.mxu0
  %245 = vmatpush.msra.mxu0 0.0
  %246 = vmatpush.msra.mxu0 0.0
  %247 = vmatpush.msra.mxu0 0.0
  %248 = vmatpush.msra.mxu0 0.0
  %249 = vmatpush.msra.mxu0 0.0
  %250 = vmatpush.msra.mxu0 0.0
  %251 = vmatpush.msra.mxu0 0.0
  %252 = vmatpush.msra.mxu0 0.0
  %253 = vmatpush.msra.mxu0 %v220
  %254 = vmatpush.msra.mxu0 %v218
  %255 = vmatpush.msra.mxu0 %v216
  %256 = vmatpush.msra.mxu0 %v214
  %257 = vmatpush.msra.mxu0 %v212
  %258 = vmatpush.msra.mxu0 %v210
  %259 = vmatpush.msra.mxu0 %v208
  %260 = vmatpush.msra.mxu0 %v206
  %261 = vmatmul.f32.gmra.mxu0 %v223
  %v262 = vpop.f32.mrf.mxu0
  %v263 = vadd.f32 0.0, %v262
  %264 = vdwg.mxu0
  %v265 = vadd.f32 %v203, %v243
  %v266 = vadd.f32 %v204, %v263
  %v267 = vxor.u32 %v265, 2147483648
  %v268 = vxor.u32 %v266, 2147483648
  %v269 = vmul.f32 %v267, 1.442695
  %v270 = vpow.pop %v269
  %v271 = vmul.f32 %v268, 1.442695
  %v272 = vpow.pop %v271
  %v273 = vadd.f32 %v270, 1.0
  %v274 = vadd.f32 %v272, 1.0
  %v275 = vrcp.pop %v273
  %v276 = vmul.f32 %v273, %v275
  %v277 = vsub.f32 1.0, %v276
  %v278 = vmul.f32 %v275, %v277
  %v279 = vadd.f32 %v275, %v278
  %vm280 = vweird.f32 %v273
  %vm281 = vweird.f32 %v275
  %vm282 = vmor %vm280, %vm281
  %v283 = vsel %vm282, %v275, %v279
  %v284 = vand.u32 2147483647, %v273
  %vm285 = vcmp.eq.f32.partialorder %v284, 8.507059e+37
  %v286 = vand.u32 %v273, 2147483648
  %v287 = vor.u32 1.1754944e-38, %v286
  %v288 = vsel %vm285, %v287, %v283
  %v289 = vmul.f32 1.0, %v288
  %v290 = vrcp.pop %v274
  %v291 = vmul.f32 %v274, %v290
  %v292 = vsub.f32 1.0, %v291
  %v293 = vmul.f32 %v290, %v292
  %v294 = vadd.f32 %v290, %v293
  %vm295 = vweird.f32 %v274
  %vm296 = vweird.f32 %v290
  %vm297 = vmor %vm295, %vm296
  %v298 = vsel %vm297, %v290, %v294
  %v299 = vand.u32 2147483647, %v274
  %vm300 = vcmp.eq.f32.partialorder %v299, 8.507059e+37
  %v301 = vand.u32 %v274, 2147483648
  %v302 = vor.u32 1.1754944e-38, %v301
  %v303 = vsel %vm300, %v302, %v298
  %v304 = vmul.f32 1.0, %v303
  %v305 = vtanh.pop %v266
  %v306 = vmul.f32 %v289, 0.0
  %308 = vrot.lane.b32.xlu0 %v305, 64
  %v309 = vpop.permute.xlu0 %308
  %v311 = vmul.f32 %v289, %v309
  %313 = vrot.lane.b32.xlu0 %v311, 64
  %v314 = vpop.permute.xlu0 %313
  %v316 = vadd.f32 %v306, %v314
  %v317 = vtanh.pop %v316
  %319 = vrot.lane.b32.xlu0 %v317, 64
  %v320 = vpop.permute.xlu0 %319
  %v322 = vmul.f32 %v304, %v320
  %v323 = vld [vmem:[#allocation2 + $0x10] sm:$0xff]
  %v324 = vld [vmem:[#allocation2 + $0x18] sm:$0xff]
  %v326 = vsel %vm221, %v322, 0
  %328 = vmatpush.msra.mxu0 0.0
  %329 = vmatpush.msra.mxu0 0.0
  %330 = vmatpush.msra.mxu0 0.0
  %331 = vmatpush.msra.mxu0 0.0
  %332 = vmatpush.msra.mxu0 0.0
  %333 = vmatpush.msra.mxu0 0.0
  %334 = vmatpush.msra.mxu0 0.0
  %335 = vmatpush.msra.mxu0 0.0
  %336 = vmatpush.msra.mxu0 %v219
  %337 = vmatpush.msra.mxu0 %v217
  %338 = vmatpush.msra.mxu0 %v215
  %339 = vmatpush.msra.mxu0 %v213
  %340 = vmatpush.msra.mxu0 %v211
  %341 = vmatpush.msra.mxu0 %v209
  %342 = vmatpush.msra.mxu0 %v207
  %343 = vmatpush.msra.mxu0 %v205
  %344 = vmatmul.f32.gmra.mxu0 %v326
  %v345 = vpop.f32.mrf.mxu0
  %v346 = vadd.f32 0.0, %v345
  %347 = vdwg.mxu0
  %348 = vmatpush.msra.mxu0 0.0
  %349 = vmatpush.msra.mxu0 0.0
  %350 = vmatpush.msra.mxu0 0.0
  %351 = vmatpush.msra.mxu0 0.0
  %352 = vmatpush.msra.mxu0 0.0
  %353 = vmatpush.msra.mxu0 0.0
  %354 = vmatpush.msra.mxu0 0.0
  %355 = vmatpush.msra.mxu0 0.0
  %356 = vmatpush.msra.mxu0 %v220
  %357 = vmatpush.msra.mxu0 %v218
  %358 = vmatpush.msra.mxu0 %v216
  %359 = vmatpush.msra.mxu0 %v214
  %360 = vmatpush.msra.mxu0 %v212
  %361 = vmatpush.msra.mxu0 %v210
  %362 = vmatpush.msra.mxu0 %v208
  %363 = vmatpush.msra.mxu0 %v206
  %364 = vmatmul.f32.gmra.mxu0 %v326
  %v365 = vpop.f32.mrf.mxu0
  %v366 = vadd.f32 0.0, %v365
  %367 = vdwg.mxu0
  %v368 = vadd.f32 %v323, %v346
  %v369 = vadd.f32 %v324, %v366
  %v370 = vxor.u32 %v368, 2147483648
  %v371 = vxor.u32 %v369, 2147483648
  %v372 = vmul.f32 %v370, 1.442695
  %v373 = vpow.pop %v372
  %v374 = vmul.f32 %v371, 1.442695
  %v375 = vpow.pop %v374
  %v376 = vadd.f32 %v373, 1.0
  %v377 = vadd.f32 %v375, 1.0
  %v378 = vrcp.pop %v376
  %v379 = vmul.f32 %v376, %v378
  %v380 = vsub.f32 1.0, %v379
  %v381 = vmul.f32 %v378, %v380
  %v382 = vadd.f32 %v378, %v381
  %vm383 = vweird.f32 %v376
  %vm384 = vweird.f32 %v378
  %vm385 = vmor %vm383, %vm384
  %v386 = vsel %vm385, %v378, %v382
  %v387 = vand.u32 2147483647, %v376
  %vm388 = vcmp.eq.f32.partialorder %v387, 8.507059e+37
  %v389 = vand.u32 %v376, 2147483648
  %v390 = vor.u32 1.1754944e-38, %v389
  %v391 = vsel %vm388, %v390, %v386
  %v392 = vmul.f32 1.0, %v391
  %v393 = vrcp.pop %v377
  %v394 = vmul.f32 %v377, %v393
  %v395 = vsub.f32 1.0, %v394
  %v396 = vmul.f32 %v393, %v395
  %v397 = vadd.f32 %v393, %v396
  %vm398 = vweird.f32 %v377
  %vm399 = vweird.f32 %v393
  %vm400 = vmor %vm398, %vm399
  %v401 = vsel %vm400, %v393, %v397
  %v402 = vand.u32 2147483647, %v377
  %vm403 = vcmp.eq.f32.partialorder %v402, 8.507059e+37
  %v404 = vand.u32 %v377, 2147483648
  %v405 = vor.u32 1.1754944e-38, %v404
  %v406 = vsel %vm403, %v405, %v401
  %v407 = vmul.f32 1.0, %v406
  %v408 = vtanh.pop %v369
  %v409 = vmul.f32 %v392, %v316
  %411 = vrot.lane.b32.xlu0 %v408, 64
  %v412 = vpop.permute.xlu0 %411
  %v414 = vmul.f32 %v392, %v412
  %416 = vrot.lane.b32.xlu0 %v414, 64
  %v417 = vpop.permute.xlu0 %416
  %v419 = vadd.f32 %v409, %v417
  %v420 = vtanh.pop %v419
  %422 = vrot.lane.b32.xlu0 %v420, 64
  %v423 = vpop.permute.xlu0 %422
  %v425 = vmul.f32 %v407, %v423
  %v426 = vsel %vm221, %v322, 0.0
  %v427 = vld [vmem:[%s4] sm:$0xff]
  %v428 = vld [vmem:[%s4 + $0x8] sm:$0xff]
  %v429 = vld [vmem:[%s4 + $0x10] sm:$0xff]
  %v430 = vld [vmem:[%s4 + $0x18] sm:$0xff]
  %v431 = vld [vmem:[%s4 + $0x20] sm:$0xff]
  %v432 = vld [vmem:[%s4 + $0x28] sm:$0xff]
  %v433 = vld [vmem:[%s4 + $0x30] sm:$0xff]
  %v434 = vld [vmem:[%s4 + $0x38] sm:$0xff]
  %v435 = vld [vmem:[%s4 + $0x40] sm:$0xff]
  %v436 = vld [vmem:[%s4 + $0x48] sm:$0xff]
  %v437 = vld [vmem:[%s4 + $0x50] sm:$0xff]
  %v438 = vld [vmem:[%s4 + $0x58] sm:$0xff]
  %v439 = vld [vmem:[%s4 + $0x60] sm:$0xff]
  %v440 = vld [vmem:[%s4 + $0x68] sm:$0xff]
  %v441 = vld [vmem:[%s4 + $0x70] sm:$0xff]
  %v442 = vld [vmem:[%s4 + $0x78] sm:$0xff]
  %v443 = vld [vmem:[%s4 + $0x80] sm:$0xff]
  %v444 = vld [vmem:[%s4 + $0x88] sm:$0xff]
  %v445 = vld [vmem:[%s4 + $0x90] sm:$0xff]
  %v446 = vld [vmem:[%s4 + $0x98] sm:$0xff]
  %v447 = vld [vmem:[%s4 + $0xa0] sm:$0xff]
  %v448 = vld [vmem:[%s4 + $0xa8] sm:$0xff]
  %v449 = vld [vmem:[%s4 + $0xb0] sm:$0xff]
  %v450 = vld [vmem:[%s4 + $0xb8] sm:$0xff]
  %v451 = vld [vmem:[%s4 + $0xc0] sm:$0xff]
  %v452 = vld [vmem:[%s4 + $0xc8] sm:$0xff]
  %v453 = vld [vmem:[%s4 + $0xd0] sm:$0xff]
  %v454 = vld [vmem:[%s4 + $0xd8] sm:$0xff]
  %v455 = vld [vmem:[%s4 + $0xe0] sm:$0xff]
  %v456 = vld [vmem:[%s4 + $0xe8] sm:$0xff]
  %v457 = vld [vmem:[%s4 + $0xf0] sm:$0xff]
  %v458 = vld [vmem:[%s4 + $0xf8] sm:$0xff]
  %459 = vmatpush.msra.mxu0 %v457
  %460 = vmatpush.msra.mxu0 %v455
  %461 = vmatpush.msra.mxu0 %v453
  %462 = vmatpush.msra.mxu0 %v451
  %463 = vmatpush.msra.mxu0 %v449
  %464 = vmatpush.msra.mxu0 %v447
  %465 = vmatpush.msra.mxu0 %v445
  %466 = vmatpush.msra.mxu0 %v443
  %467 = vmatpush.msra.mxu0 %v441
  %468 = vmatpush.msra.mxu0 %v439
  %469 = vmatpush.msra.mxu0 %v437
  %470 = vmatpush.msra.mxu0 %v435
  %471 = vmatpush.msra.mxu0 %v433
  %472 = vmatpush.msra.mxu0 %v431
  %473 = vmatpush.msra.mxu0 %v429
  %474 = vmatpush.msra.mxu0 %v427
  %475 = vmatmul.f32.gmra.mxu0 %v426
  %v476 = vpop.f32.mrf.mxu0
  %v477 = vadd.f32 %v187, %v476
  %478 = vdwg.mxu0
  %479 = vmatpush.msra.mxu0 %v458
  %480 = vmatpush.msra.mxu0 %v456
  %481 = vmatpush.msra.mxu0 %v454
  %482 = vmatpush.msra.mxu0 %v452
  %483 = vmatpush.msra.mxu0 %v450
  %484 = vmatpush.msra.mxu0 %v448
  %485 = vmatpush.msra.mxu0 %v446
  %486 = vmatpush.msra.mxu0 %v444
  %487 = vmatpush.msra.mxu0 %v442
  %488 = vmatpush.msra.mxu0 %v440
  %489 = vmatpush.msra.mxu0 %v438
  %490 = vmatpush.msra.mxu0 %v436
  %491 = vmatpush.msra.mxu0 %v434
  %492 = vmatpush.msra.mxu0 %v432
  %493 = vmatpush.msra.mxu0 %v430
  %494 = vmatpush.msra.mxu0 %v428
  %495 = vmatmul.f32.gmra.mxu0 %v426
  %v496 = vpop.f32.mrf.mxu0
  %v497 = vadd.f32 %v188, %v496
  %498 = vdwg.mxu0
  %v499 = vxor.u32 %v477, 2147483648
  %v500 = vxor.u32 %v497, 2147483648
  %v501 = vmul.f32 %v499, 1.442695
  %v502 = vpow.pop %v501
  %v503 = vmul.f32 %v500, 1.442695
  %v504 = vpow.pop %v503
  %v505 = vadd.f32 %v502, 1.0
  %v506 = vadd.f32 %v504, 1.0
  %v507 = vrcp.pop %v505
  %v508 = vmul.f32 %v505, %v507
  %v509 = vsub.f32 1.0, %v508
  %v510 = vmul.f32 %v507, %v509
  %v511 = vadd.f32 %v507, %v510
  %vm512 = vweird.f32 %v505
  %vm513 = vweird.f32 %v507
  %vm514 = vmor %vm512, %vm513
  %v515 = vsel %vm514, %v507, %v511
  %v516 = vand.u32 2147483647, %v505
  %vm517 = vcmp.eq.f32.partialorder %v516, 8.507059e+37
  %v518 = vand.u32 %v505, 2147483648
  %v519 = vor.u32 1.1754944e-38, %v518
  %v520 = vsel %vm517, %v519, %v515
  %v521 = vmul.f32 1.0, %v520
  %v522 = vrcp.pop %v506
  %v523 = vmul.f32 %v506, %v522
  %v524 = vsub.f32 1.0, %v523
  %v525 = vmul.f32 %v522, %v524
  %v526 = vadd.f32 %v522, %v525
  %vm527 = vweird.f32 %v506
  %vm528 = vweird.f32 %v522
  %vm529 = vmor %vm527, %vm528
  %v530 = vsel %vm529, %v522, %v526
  %v531 = vand.u32 2147483647, %v506
  %vm532 = vcmp.eq.f32.partialorder %v531, 8.507059e+37
  %v533 = vand.u32 %v506, 2147483648
  %v534 = vor.u32 1.1754944e-38, %v533
  %v535 = vsel %vm532, %v534, %v530
  %v536 = vmul.f32 1.0, %v535
  %v537 = vtanh.pop %v497
  %v538 = vmul.f32 %v521, 0.0
  %540 = vrot.lane.b32.xlu0 %v537, 64
  %v541 = vpop.permute.xlu0 %540
  %v543 = vmul.f32 %v521, %v541
  %545 = vrot.lane.b32.xlu0 %v543, 64
  %v546 = vpop.permute.xlu0 %545
  %v548 = vadd.f32 %v538, %v546
  %v549 = vtanh.pop %v548
  %551 = vrot.lane.b32.xlu0 %v549, 64
  %v552 = vpop.permute.xlu0 %551
  %v554 = vmul.f32 %v536, %v552
  %v555 = vld [vmem:[#allocation2 + $0x20] sm:$0xff]
  %v556 = vld [vmem:[#allocation2 + $0x28] sm:$0xff]
  %v558 = vsel %vm221, %v425, 0
  %560 = vmatpush.msra.mxu0 0.0
  %561 = vmatpush.msra.mxu0 0.0
  %562 = vmatpush.msra.mxu0 0.0
  %563 = vmatpush.msra.mxu0 0.0
  %564 = vmatpush.msra.mxu0 0.0
  %565 = vmatpush.msra.mxu0 0.0
  %566 = vmatpush.msra.mxu0 0.0
  %567 = vmatpush.msra.mxu0 0.0
  %568 = vmatpush.msra.mxu0 %v219
  %569 = vmatpush.msra.mxu0 %v217
  %570 = vmatpush.msra.mxu0 %v215
  %571 = vmatpush.msra.mxu0 %v213
  %572 = vmatpush.msra.mxu0 %v211
  %573 = vmatpush.msra.mxu0 %v209
  %574 = vmatpush.msra.mxu0 %v207
  %575 = vmatpush.msra.mxu0 %v205
  %576 = vmatmul.f32.gmra.mxu0 %v558
  %v577 = vpop.f32.mrf.mxu0
  %v578 = vadd.f32 0.0, %v577
  %579 = vdwg.mxu0
  %580 = vmatpush.msra.mxu0 0.0
  %581 = vmatpush.msra.mxu0 0.0
  %582 = vmatpush.msra.mxu0 0.0
  %583 = vmatpush.msra.mxu0 0.0
  %584 = vmatpush.msra.mxu0 0.0
  %585 = vmatpush.msra.mxu0 0.0
  %586 = vmatpush.msra.mxu0 0.0
  %587 = vmatpush.msra.mxu0 0.0
  %588 = vmatpush.msra.mxu0 %v220
  %589 = vmatpush.msra.mxu0 %v218
  %590 = vmatpush.msra.mxu0 %v216
  %591 = vmatpush.msra.mxu0 %v214
  %592 = vmatpush.msra.mxu0 %v212
  %593 = vmatpush.msra.mxu0 %v210
  %594 = vmatpush.msra.mxu0 %v208
  %595 = vmatpush.msra.mxu0 %v206
  %596 = vmatmul.f32.gmra.mxu0 %v558
  %v597 = vpop.f32.mrf.mxu0
  %v598 = vadd.f32 0.0, %v597
  %599 = vdwg.mxu0
  %v600 = vadd.f32 %v555, %v578
  %v601 = vadd.f32 %v556, %v598
  %v602 = vxor.u32 %v600, 2147483648
  %v603 = vxor.u32 %v601, 2147483648
  %v604 = vmul.f32 %v602, 1.442695
  %v605 = vpow.pop %v604
  %v606 = vmul.f32 %v603, 1.442695
  %v607 = vpow.pop %v606
  %v608 = vadd.f32 %v605, 1.0
  %v609 = vadd.f32 %v607, 1.0
  %v610 = vrcp.pop %v608
  %v611 = vmul.f32 %v608, %v610
  %v612 = vsub.f32 1.0, %v611
  %v613 = vmul.f32 %v610, %v612
  %v614 = vadd.f32 %v610, %v613
  %vm615 = vweird.f32 %v608
  %vm616 = vweird.f32 %v610
  %vm617 = vmor %vm615, %vm616
  %v618 = vsel %vm617, %v610, %v614
  %v619 = vand.u32 2147483647, %v608
  %vm620 = vcmp.eq.f32.partialorder %v619, 8.507059e+37
  %v621 = vand.u32 %v608, 2147483648
  %v622 = vor.u32 1.1754944e-38, %v621
  %v623 = vsel %vm620, %v622, %v618
  %v624 = vmul.f32 1.0, %v623
  %v625 = vrcp.pop %v609
  %v626 = vmul.f32 %v609, %v625
  %v627 = vsub.f32 1.0, %v626
  %v628 = vmul.f32 %v625, %v627
  %v629 = vadd.f32 %v625, %v628
  %vm630 = vweird.f32 %v609
  %vm631 = vweird.f32 %v625
  %vm632 = vmor %vm630, %vm631
  %v633 = vsel %vm632, %v625, %v629
  %v634 = vand.u32 2147483647, %v609
  %vm635 = vcmp.eq.f32.partialorder %v634, 8.507059e+37
  %v636 = vand.u32 %v609, 2147483648
  %v637 = vor.u32 1.1754944e-38, %v636
  %v638 = vsel %vm635, %v637, %v633
  %v639 = vmul.f32 1.0, %v638
  %v640 = vtanh.pop %v601
  %v641 = vmul.f32 %v624, %v419
  %643 = vrot.lane.b32.xlu0 %v640, 64
  %v644 = vpop.permute.xlu0 %643
  %v646 = vmul.f32 %v624, %v644
  %648 = vrot.lane.b32.xlu0 %v646, 64
  %v649 = vpop.permute.xlu0 %648
  %v651 = vadd.f32 %v641, %v649
  %v652 = vtanh.pop %v651
  %654 = vrot.lane.b32.xlu0 %v652, 64
  %v655 = vpop.permute.xlu0 %654
  %v657 = vmul.f32 %v639, %v655
  %659 = vrot.lane.b32.xlu0 %v554, 64
  %v660 = vpop.permute.xlu0 %659
  %v662 = vsel %vm221, %v425, %v660
  %663 = vmatpush.msra.mxu0 %v457
  %664 = vmatpush.msra.mxu0 %v455
  %665 = vmatpush.msra.mxu0 %v453
  %666 = vmatpush.msra.mxu0 %v451
  %667 = vmatpush.msra.mxu0 %v449
  %668 = vmatpush.msra.mxu0 %v447
  %669 = vmatpush.msra.mxu0 %v445
  %670 = vmatpush.msra.mxu0 %v443
  %671 = vmatpush.msra.mxu0 %v441
  %672 = vmatpush.msra.mxu0 %v439
  %673 = vmatpush.msra.mxu0 %v437
  %674 = vmatpush.msra.mxu0 %v435
  %675 = vmatpush.msra.mxu0 %v433
  %676 = vmatpush.msra.mxu0 %v431
  %677 = vmatpush.msra.mxu0 %v429
  %678 = vmatpush.msra.mxu0 %v427
  %679 = vmatmul.f32.gmra.mxu0 %v662
  %v680 = vpop.f32.mrf.mxu0
  %v681 = vadd.f32 %v187, %v680
  %682 = vdwg.mxu0
  %683 = vmatpush.msra.mxu0 %v458
  %684 = vmatpush.msra.mxu0 %v456
  %685 = vmatpush.msra.mxu0 %v454
  %686 = vmatpush.msra.mxu0 %v452
  %687 = vmatpush.msra.mxu0 %v450
  %688 = vmatpush.msra.mxu0 %v448
  %689 = vmatpush.msra.mxu0 %v446
  %690 = vmatpush.msra.mxu0 %v444
  %691 = vmatpush.msra.mxu0 %v442
  %692 = vmatpush.msra.mxu0 %v440
  %693 = vmatpush.msra.mxu0 %v438
  %694 = vmatpush.msra.mxu0 %v436
  %695 = vmatpush.msra.mxu0 %v434
  %696 = vmatpush.msra.mxu0 %v432
  %697 = vmatpush.msra.mxu0 %v430
  %698 = vmatpush.msra.mxu0 %v428
  %699 = vmatmul.f32.gmra.mxu0 %v662
  %v700 = vpop.f32.mrf.mxu0
  %v701 = vadd.f32 %v188, %v700
  %702 = vdwg.mxu0
  %v703 = vxor.u32 %v681, 2147483648
  %v704 = vxor.u32 %v701, 2147483648
  %v705 = vmul.f32 %v703, 1.442695
  %v706 = vpow.pop %v705
  %v707 = vmul.f32 %v704, 1.442695
  %v708 = vpow.pop %v707
  %v709 = vadd.f32 %v706, 1.0
  %v710 = vadd.f32 %v708, 1.0
  %v711 = vrcp.pop %v709
  %v712 = vmul.f32 %v709, %v711
  %v713 = vsub.f32 1.0, %v712
  %v714 = vmul.f32 %v711, %v713
  %v715 = vadd.f32 %v711, %v714
  %vm716 = vweird.f32 %v709
  %vm717 = vweird.f32 %v711
  %vm718 = vmor %vm716, %vm717
  %v719 = vsel %vm718, %v711, %v715
  %v720 = vand.u32 2147483647, %v709
  %vm721 = vcmp.eq.f32.partialorder %v720, 8.507059e+37
  %v722 = vand.u32 %v709, 2147483648
  %v723 = vor.u32 1.1754944e-38, %v722
  %v724 = vsel %vm721, %v723, %v719
  %v725 = vmul.f32 1.0, %v724
  %v726 = vrcp.pop %v710
  %v727 = vmul.f32 %v710, %v726
  %v728 = vsub.f32 1.0, %v727
  %v729 = vmul.f32 %v726, %v728
  %v730 = vadd.f32 %v726, %v729
  %vm731 = vweird.f32 %v710
  %vm732 = vweird.f32 %v726
  %vm733 = vmor %vm731, %vm732
  %v734 = vsel %vm733, %v726, %v730
  %v735 = vand.u32 2147483647, %v710
  %vm736 = vcmp.eq.f32.partialorder %v735, 8.507059e+37
  %v737 = vand.u32 %v710, 2147483648
  %v738 = vor.u32 1.1754944e-38, %v737
  %v739 = vsel %vm736, %v738, %v734
  %v740 = vmul.f32 1.0, %v739
  %v741 = vtanh.pop %v701
  %v742 = vmul.f32 %v725, %v548
  %744 = vrot.lane.b32.xlu0 %v741, 64
  %v745 = vpop.permute.xlu0 %744
  %v747 = vmul.f32 %v725, %v745
  %749 = vrot.lane.b32.xlu0 %v747, 64
  %v750 = vpop.permute.xlu0 %749
  %v752 = vadd.f32 %v742, %v750
  %v753 = vtanh.pop %v752
  %755 = vrot.lane.b32.xlu0 %v753, 64
  %v756 = vpop.permute.xlu0 %755
  %v758 = vmul.f32 %v740, %v756
  %v759 = vsel %vm221, %v554, 0.0
  %v760 = vld [vmem:[%s6] sm:$0xff]
  %v761 = vld [vmem:[%s6 + $0x8] sm:$0xff]
  %v762 = vld [vmem:[%s6 + $0x10] sm:$0xff]
  %v763 = vld [vmem:[%s6 + $0x18] sm:$0xff]
  %v764 = vld [vmem:[%s6 + $0x20] sm:$0xff]
  %v765 = vld [vmem:[%s6 + $0x28] sm:$0xff]
  %v766 = vld [vmem:[%s6 + $0x30] sm:$0xff]
  %v767 = vld [vmem:[%s6 + $0x38] sm:$0xff]
  %v768 = vld [vmem:[%s6 + $0x40] sm:$0xff]
  %v769 = vld [vmem:[%s6 + $0x48] sm:$0xff]
  %v770 = vld [vmem:[%s6 + $0x50] sm:$0xff]
  %v771 = vld [vmem:[%s6 + $0x58] sm:$0xff]
  %v772 = vld [vmem:[%s6 + $0x60] sm:$0xff]
  %v773 = vld [vmem:[%s6 + $0x68] sm:$0xff]
  %v774 = vld [vmem:[%s6 + $0x70] sm:$0xff]
  %v775 = vld [vmem:[%s6 + $0x78] sm:$0xff]
  %v776 = vld [vmem:[%s6 + $0x80] sm:$0xff]
  %v777 = vld [vmem:[%s6 + $0x88] sm:$0xff]
  %v778 = vld [vmem:[%s6 + $0x90] sm:$0xff]
  %v779 = vld [vmem:[%s6 + $0x98] sm:$0xff]
  %v780 = vld [vmem:[%s6 + $0xa0] sm:$0xff]
  %v781 = vld [vmem:[%s6 + $0xa8] sm:$0xff]
  %v782 = vld [vmem:[%s6 + $0xb0] sm:$0xff]
  %v783 = vld [vmem:[%s6 + $0xb8] sm:$0xff]
  %v784 = vld [vmem:[%s6 + $0xc0] sm:$0xff]
  %v785 = vld [vmem:[%s6 + $0xc8] sm:$0xff]
  %v786 = vld [vmem:[%s6 + $0xd0] sm:$0xff]
  %v787 = vld [vmem:[%s6 + $0xd8] sm:$0xff]
  %v788 = vld [vmem:[%s6 + $0xe0] sm:$0xff]
  %v789 = vld [vmem:[%s6 + $0xe8] sm:$0xff]
  %v790 = vld [vmem:[%s6 + $0xf0] sm:$0xff]
  %v791 = vld [vmem:[%s6 + $0xf8] sm:$0xff]
  %792 = vmatpush.msra.mxu0 %v790
  %793 = vmatpush.msra.mxu0 %v788
  %794 = vmatpush.msra.mxu0 %v786
  %795 = vmatpush.msra.mxu0 %v784
  %796 = vmatpush.msra.mxu0 %v782
  %797 = vmatpush.msra.mxu0 %v780
  %798 = vmatpush.msra.mxu0 %v778
  %799 = vmatpush.msra.mxu0 %v776
  %800 = vmatpush.msra.mxu0 %v774
  %801 = vmatpush.msra.mxu0 %v772
  %802 = vmatpush.msra.mxu0 %v770
  %803 = vmatpush.msra.mxu0 %v768
  %804 = vmatpush.msra.mxu0 %v766
  %805 = vmatpush.msra.mxu0 %v764
  %806 = vmatpush.msra.mxu0 %v762
  %807 = vmatpush.msra.mxu0 %v760
  %808 = vmatmul.f32.gmra.mxu0 %v759
  %v809 = vpop.f32.mrf.mxu0
  %v810 = vadd.f32 %v193, %v809
  %811 = vdwg.mxu0
  %812 = vmatpush.msra.mxu0 %v791
  %813 = vmatpush.msra.mxu0 %v789
  %814 = vmatpush.msra.mxu0 %v787
  %815 = vmatpush.msra.mxu0 %v785
  %816 = vmatpush.msra.mxu0 %v783
  %817 = vmatpush.msra.mxu0 %v781
  %818 = vmatpush.msra.mxu0 %v779
  %819 = vmatpush.msra.mxu0 %v777
  %820 = vmatpush.msra.mxu0 %v775
  %821 = vmatpush.msra.mxu0 %v773
  %822 = vmatpush.msra.mxu0 %v771
  %823 = vmatpush.msra.mxu0 %v769
  %824 = vmatpush.msra.mxu0 %v767
  %825 = vmatpush.msra.mxu0 %v765
  %826 = vmatpush.msra.mxu0 %v763
  %827 = vmatpush.msra.mxu0 %v761
  %828 = vmatmul.f32.gmra.mxu0 %v759
  %v829 = vpop.f32.mrf.mxu0
  %v830 = vadd.f32 %v194, %v829
  %831 = vdwg.mxu0
  %v832 = vxor.u32 %v810, 2147483648
  %v833 = vxor.u32 %v830, 2147483648
  %v834 = vmul.f32 %v832, 1.442695
  %v835 = vpow.pop %v834
  %v836 = vmul.f32 %v833, 1.442695
  %v837 = vpow.pop %v836
  %v838 = vadd.f32 %v835, 1.0
  %v839 = vadd.f32 %v837, 1.0
  %v840 = vrcp.pop %v838
  %v841 = vmul.f32 %v838, %v840
  %v842 = vsub.f32 1.0, %v841
  %v843 = vmul.f32 %v840, %v842
  %v844 = vadd.f32 %v840, %v843
  %vm845 = vweird.f32 %v838
  %vm846 = vweird.f32 %v840
  %vm847 = vmor %vm845, %vm846
  %v848 = vsel %vm847, %v840, %v844
  %v849 = vand.u32 2147483647, %v838
  %vm850 = vcmp.eq.f32.partialorder %v849, 8.507059e+37
  %v851 = vand.u32 %v838, 2147483648
  %v852 = vor.u32 1.1754944e-38, %v851
  %v853 = vsel %vm850, %v852, %v848
  %v854 = vmul.f32 1.0, %v853
  %v855 = vrcp.pop %v839
  %v856 = vmul.f32 %v839, %v855
  %v857 = vsub.f32 1.0, %v856
  %v858 = vmul.f32 %v855, %v857
  %v859 = vadd.f32 %v855, %v858
  %vm860 = vweird.f32 %v839
  %vm861 = vweird.f32 %v855
  %vm862 = vmor %vm860, %vm861
  %v863 = vsel %vm862, %v855, %v859
  %v864 = vand.u32 2147483647, %v839
  %vm865 = vcmp.eq.f32.partialorder %v864, 8.507059e+37
  %v866 = vand.u32 %v839, 2147483648
  %v867 = vor.u32 1.1754944e-38, %v866
  %v868 = vsel %vm865, %v867, %v863
  %v869 = vmul.f32 1.0, %v868
  %v870 = vtanh.pop %v830
  %v871 = vmul.f32 %v854, 0.0
  %873 = vrot.lane.b32.xlu0 %v870, 64
  %v874 = vpop.permute.xlu0 %873
  %v876 = vmul.f32 %v854, %v874
  %878 = vrot.lane.b32.xlu0 %v876, 64
  %v879 = vpop.permute.xlu0 %878
  %v881 = vadd.f32 %v871, %v879
  %v882 = vtanh.pop %v881
  %884 = vrot.lane.b32.xlu0 %v882, 64
  %v885 = vpop.permute.xlu0 %884
  %v887 = vmul.f32 %v869, %v885
  %v888 = vld [vmem:[#allocation2 + $0x30] sm:$0xff]
  %v889 = vld [vmem:[#allocation2 + $0x38] sm:$0xff]
  %v891 = vsel %vm221, %v657, 0
  %893 = vmatpush.msra.mxu0 0.0
  %894 = vmatpush.msra.mxu0 0.0
  %895 = vmatpush.msra.mxu0 0.0
  %896 = vmatpush.msra.mxu0 0.0
  %897 = vmatpush.msra.mxu0 0.0
  %898 = vmatpush.msra.mxu0 0.0
  %899 = vmatpush.msra.mxu0 0.0
  %900 = vmatpush.msra.mxu0 0.0
  %901 = vmatpush.msra.mxu0 %v219
  %902 = vmatpush.msra.mxu0 %v217
  %903 = vmatpush.msra.mxu0 %v215
  %904 = vmatpush.msra.mxu0 %v213
  %905 = vmatpush.msra.mxu0 %v211
  %906 = vmatpush.msra.mxu0 %v209
  %907 = vmatpush.msra.mxu0 %v207
  %908 = vmatpush.msra.mxu0 %v205
  %909 = vmatmul.f32.gmra.mxu0 %v891
  %v910 = vpop.f32.mrf.mxu0
  %v911 = vadd.f32 0.0, %v910
  %912 = vdwg.mxu0
  %913 = vmatpush.msra.mxu0 0.0
  %914 = vmatpush.msra.mxu0 0.0
  %915 = vmatpush.msra.mxu0 0.0
  %916 = vmatpush.msra.mxu0 0.0
  %917 = vmatpush.msra.mxu0 0.0
  %918 = vmatpush.msra.mxu0 0.0
  %919 = vmatpush.msra.mxu0 0.0
  %920 = vmatpush.msra.mxu0 0.0
  %921 = vmatpush.msra.mxu0 %v220
  %922 = vmatpush.msra.mxu0 %v218
  %923 = vmatpush.msra.mxu0 %v216
  %924 = vmatpush.msra.mxu0 %v214
  %925 = vmatpush.msra.mxu0 %v212
  %926 = vmatpush.msra.mxu0 %v210
  %927 = vmatpush.msra.mxu0 %v208
  %928 = vmatpush.msra.mxu0 %v206
  %929 = vmatmul.f32.gmra.mxu0 %v891
  %v930 = vpop.f32.mrf.mxu0
  %v931 = vadd.f32 0.0, %v930
  %932 = vdwg.mxu0
  %v933 = vadd.f32 %v888, %v911
  %v934 = vadd.f32 %v889, %v931
  %v935 = vxor.u32 %v933, 2147483648
  %v936 = vxor.u32 %v934, 2147483648
  %v937 = vmul.f32 %v935, 1.442695
  %v938 = vpow.pop %v937
  %v939 = vmul.f32 %v936, 1.442695
  %v940 = vpow.pop %v939
  %v941 = vadd.f32 %v938, 1.0
  %v942 = vadd.f32 %v940, 1.0
  %v943 = vrcp.pop %v941
  %v944 = vmul.f32 %v941, %v943
  %v945 = vsub.f32 1.0, %v944
  %v946 = vmul.f32 %v943, %v945
  %v947 = vadd.f32 %v943, %v946
  %vm948 = vweird.f32 %v941
  %vm949 = vweird.f32 %v943
  %vm950 = vmor %vm948, %vm949
  %v951 = vsel %vm950, %v943, %v947
  %v952 = vand.u32 2147483647, %v941
  %vm953 = vcmp.eq.f32.partialorder %v952, 8.507059e+37
  %v954 = vand.u32 %v941, 2147483648
  %v955 = vor.u32 1.1754944e-38, %v954
  %v956 = vsel %vm953, %v955, %v951
  %v957 = vmul.f32 1.0, %v956
  %v958 = vrcp.pop %v942
  %v959 = vmul.f32 %v942, %v958
  %v960 = vsub.f32 1.0, %v959
  %v961 = vmul.f32 %v958, %v960
  %v962 = vadd.f32 %v958, %v961
  %vm963 = vweird.f32 %v942
  %vm964 = vweird.f32 %v958
  %vm965 = vmor %vm963, %vm964
  %v966 = vsel %vm965, %v958, %v962
  %v967 = vand.u32 2147483647, %v942
  %vm968 = vcmp.eq.f32.partialorder %v967, 8.507059e+37
  %v969 = vand.u32 %v942, 2147483648
  %v970 = vor.u32 1.1754944e-38, %v969
  %v971 = vsel %vm968, %v970, %v966
  %v972 = vmul.f32 1.0, %v971
  %v973 = vtanh.pop %v934
  %v974 = vmul.f32 %v957, %v651
  %976 = vrot.lane.b32.xlu0 %v973, 64
  %v977 = vpop.permute.xlu0 %976
  %v979 = vmul.f32 %v957, %v977
  %981 = vrot.lane.b32.xlu0 %v979, 64
  %v982 = vpop.permute.xlu0 %981
  %v984 = vadd.f32 %v974, %v982
  %v985 = vtanh.pop %v984
  %987 = vrot.lane.b32.xlu0 %v985, 64
  %v988 = vpop.permute.xlu0 %987
  %v990 = vmul.f32 %v972, %v988
  %992 = vrot.lane.b32.xlu0 %v758, 64
  %v993 = vpop.permute.xlu0 %992
  %v995 = vsel %vm221, %v657, %v993
  %996 = vmatpush.msra.mxu0 %v457
  %997 = vmatpush.msra.mxu0 %v455
  %998 = vmatpush.msra.mxu0 %v453
  %999 = vmatpush.msra.mxu0 %v451
  %1000 = vmatpush.msra.mxu0 %v449
  %1001 = vmatpush.msra.mxu0 %v447
  %1002 = vmatpush.msra.mxu0 %v445
  %1003 = vmatpush.msra.mxu0 %v443
  %1004 = vmatpush.msra.mxu0 %v441
  %1005 = vmatpush.msra.mxu0 %v439
  %1006 = vmatpush.msra.mxu0 %v437
  %1007 = vmatpush.msra.mxu0 %v435
  %1008 = vmatpush.msra.mxu0 %v433
  %1009 = vmatpush.msra.mxu0 %v431
  %1010 = vmatpush.msra.mxu0 %v429
  %1011 = vmatpush.msra.mxu0 %v427
  %1012 = vmatmul.f32.gmra.mxu0 %v995
  %v1013 = vpop.f32.mrf.mxu0
  %v1014 = vadd.f32 %v187, %v1013
  %1015 = vdwg.mxu0
  %1016 = vmatpush.msra.mxu0 %v458
  %1017 = vmatpush.msra.mxu0 %v456
  %1018 = vmatpush.msra.mxu0 %v454
  %1019 = vmatpush.msra.mxu0 %v452
  %1020 = vmatpush.msra.mxu0 %v450
  %1021 = vmatpush.msra.mxu0 %v448
  %1022 = vmatpush.msra.mxu0 %v446
  %1023 = vmatpush.msra.mxu0 %v444
  %1024 = vmatpush.msra.mxu0 %v442
  %1025 = vmatpush.msra.mxu0 %v440
  %1026 = vmatpush.msra.mxu0 %v438
  %1027 = vmatpush.msra.mxu0 %v436
  %1028 = vmatpush.msra.mxu0 %v434
  %1029 = vmatpush.msra.mxu0 %v432
  %1030 = vmatpush.msra.mxu0 %v430
  %1031 = vmatpush.msra.mxu0 %v428
  %1032 = vmatmul.f32.gmra.mxu0 %v995
  %v1033 = vpop.f32.mrf.mxu0
  %v1034 = vadd.f32 %v188, %v1033
  %1035 = vdwg.mxu0
  %v1036 = vxor.u32 %v1014, 2147483648
  %v1037 = vxor.u32 %v1034, 2147483648
  %v1038 = vmul.f32 %v1036, 1.442695
  %v1039 = vpow.pop %v1038
  %v1040 = vmul.f32 %v1037, 1.442695
  %v1041 = vpow.pop %v1040
  %v1042 = vadd.f32 %v1039, 1.0
  %v1043 = vadd.f32 %v1041, 1.0
  %v1044 = vrcp.pop %v1042
  %v1045 = vmul.f32 %v1042, %v1044
  %v1046 = vsub.f32 1.0, %v1045
  %v1047 = vmul.f32 %v1044, %v1046
  %v1048 = vadd.f32 %v1044, %v1047
  %vm1049 = vweird.f32 %v1042
  %vm1050 = vweird.f32 %v1044
  %vm1051 = vmor %vm1049, %vm1050
  %v1052 = vsel %vm1051, %v1044, %v1048
  %v1053 = vand.u32 2147483647, %v1042
  %vm1054 = vcmp.eq.f32.partialorder %v1053, 8.507059e+37
  %v1055 = vand.u32 %v1042, 2147483648
  %v1056 = vor.u32 1.1754944e-38, %v1055
  %v1057 = vsel %vm1054, %v1056, %v1052
  %v1058 = vmul.f32 1.0, %v1057
  %v1059 = vrcp.pop %v1043
  %v1060 = vmul.f32 %v1043, %v1059
  %v1061 = vsub.f32 1.0, %v1060
  %v1062 = vmul.f32 %v1059, %v1061
  %v1063 = vadd.f32 %v1059, %v1062
  %vm1064 = vweird.f32 %v1043
  %vm1065 = vweird.f32 %v1059
  %vm1066 = vmor %vm1064, %vm1065
  %v1067 = vsel %vm1066, %v1059, %v1063
  %v1068 = vand.u32 2147483647, %v1043
  %vm1069 = vcmp.eq.f32.partialorder %v1068, 8.507059e+37
  %v1070 = vand.u32 %v1043, 2147483648
  %v1071 = vor.u32 1.1754944e-38, %v1070
  %v1072 = vsel %vm1069, %v1071, %v1067
  %v1073 = vmul.f32 1.0, %v1072
  %v1074 = vtanh.pop %v1034
  %v1075 = vmul.f32 %v1058, %v752
  %1077 = vrot.lane.b32.xlu0 %v1074, 64
  %v1078 = vpop.permute.xlu0 %1077
  %v1080 = vmul.f32 %v1058, %v1078
  %1082 = vrot.lane.b32.xlu0 %v1080, 64
  %v1083 = vpop.permute.xlu0 %1082
  %v1085 = vadd.f32 %v1075, %v1083
  %v1086 = vtanh.pop %v1085
  %1088 = vrot.lane.b32.xlu0 %v1086, 64
  %v1089 = vpop.permute.xlu0 %1088
  %v1091 = vmul.f32 %v1073, %v1089
  %1093 = vrot.lane.b32.xlu0 %v887, 64
  %v1094 = vpop.permute.xlu0 %1093
  %v1096 = vsel %vm221, %v758, %v1094
  %1097 = vmatpush.msra.mxu0 %v790
  %1098 = vmatpush.msra.mxu0 %v788
  %1099 = vmatpush.msra.mxu0 %v786
  %1100 = vmatpush.msra.mxu0 %v784
  %1101 = vmatpush.msra.mxu0 %v782
  %1102 = vmatpush.msra.mxu0 %v780
  %1103 = vmatpush.msra.mxu0 %v778
  %1104 = vmatpush.msra.mxu0 %v776
  %1105 = vmatpush.msra.mxu0 %v774
  %1106 = vmatpush.msra.mxu0 %v772
  %1107 = vmatpush.msra.mxu0 %v770
  %1108 = vmatpush.msra.mxu0 %v768
  %1109 = vmatpush.msra.mxu0 %v766
  %1110 = vmatpush.msra.mxu0 %v764
  %1111 = vmatpush.msra.mxu0 %v762
  %1112 = vmatpush.msra.mxu0 %v760
  %1113 = vmatmul.f32.gmra.mxu0 %v1096
  %v1114 = vpop.f32.mrf.mxu0
  %v1115 = vadd.f32 %v193, %v1114
  %1116 = vdwg.mxu0
  %1117 = vmatpush.msra.mxu0 %v791
  %1118 = vmatpush.msra.mxu0 %v789
  %1119 = vmatpush.msra.mxu0 %v787
  %1120 = vmatpush.msra.mxu0 %v785
  %1121 = vmatpush.msra.mxu0 %v783
  %1122 = vmatpush.msra.mxu0 %v781
  %1123 = vmatpush.msra.mxu0 %v779
  %1124 = vmatpush.msra.mxu0 %v777
  %1125 = vmatpush.msra.mxu0 %v775
  %1126 = vmatpush.msra.mxu0 %v773
  %1127 = vmatpush.msra.mxu0 %v771
  %1128 = vmatpush.msra.mxu0 %v769
  %1129 = vmatpush.msra.mxu0 %v767
  %1130 = vmatpush.msra.mxu0 %v765
  %1131 = vmatpush.msra.mxu0 %v763
  %1132 = vmatpush.msra.mxu0 %v761
  %1133 = vmatmul.f32.gmra.mxu0 %v1096
  %v1134 = vpop.f32.mrf.mxu0
  %v1135 = vadd.f32 %v194, %v1134
  %1136 = vdwg.mxu0
  %v1137 = vxor.u32 %v1115, 2147483648
  %v1138 = vxor.u32 %v1135, 2147483648
  %v1139 = vmul.f32 %v1137, 1.442695
  %v1140 = vpow.pop %v1139
  %v1141 = vmul.f32 %v1138, 1.442695
  %v1142 = vpow.pop %v1141
  %v1143 = vadd.f32 %v1140, 1.0
  %v1144 = vadd.f32 %v1142, 1.0
  %v1145 = vrcp.pop %v1143
  %v1146 = vmul.f32 %v1143, %v1145
  %v1147 = vsub.f32 1.0, %v1146
  %v1148 = vmul.f32 %v1145, %v1147
  %v1149 = vadd.f32 %v1145, %v1148
  %vm1150 = vweird.f32 %v1143
  %vm1151 = vweird.f32 %v1145
  %vm1152 = vmor %vm1150, %vm1151
  %v1153 = vsel %vm1152, %v1145, %v1149
  %v1154 = vand.u32 2147483647, %v1143
  %vm1155 = vcmp.eq.f32.partialorder %v1154, 8.507059e+37
  %v1156 = vand.u32 %v1143, 2147483648
  %v1157 = vor.u32 1.1754944e-38, %v1156
  %v1158 = vsel %vm1155, %v1157, %v1153
  %v1159 = vmul.f32 1.0, %v1158
  %v1160 = vrcp.pop %v1144
  %v1161 = vmul.f32 %v1144, %v1160
  %v1162 = vsub.f32 1.0, %v1161
  %v1163 = vmul.f32 %v1160, %v1162
  %v1164 = vadd.f32 %v1160, %v1163
  %vm1165 = vweird.f32 %v1144
  %vm1166 = vweird.f32 %v1160
  %vm1167 = vmor %vm1165, %vm1166
  %v1168 = vsel %vm1167, %v1160, %v1164
  %v1169 = vand.u32 2147483647, %v1144
  %vm1170 = vcmp.eq.f32.partialorder %v1169, 8.507059e+37
  %v1171 = vand.u32 %v1144, 2147483648
  %v1172 = vor.u32 1.1754944e-38, %v1171
  %v1173 = vsel %vm1170, %v1172, %v1168
  %v1174 = vmul.f32 1.0, %v1173
  %v1175 = vtanh.pop %v1135
  %v1176 = vmul.f32 %v1159, %v881
  %1178 = vrot.lane.b32.xlu0 %v1175, 64
  %v1179 = vpop.permute.xlu0 %1178
  %v1181 = vmul.f32 %v1159, %v1179
  %1183 = vrot.lane.b32.xlu0 %v1181, 64
  %v1184 = vpop.permute.xlu0 %1183
  %v1186 = vadd.f32 %v1176, %v1184
  %v1187 = vtanh.pop %v1186
  %1189 = vrot.lane.b32.xlu0 %v1187, 64
  %v1190 = vpop.permute.xlu0 %1189
  %v1192 = vmul.f32 %v1174, %v1190
  %v1193 = vsel %vm221, %v887, 0.0
  %v1194 = vld [vmem:[%s8] sm:$0xff]
  %v1195 = vld [vmem:[%s8 + $0x8] sm:$0xff]
  %v1196 = vld [vmem:[%s8 + $0x10] sm:$0xff]
  %v1197 = vld [vmem:[%s8 + $0x18] sm:$0xff]
  %v1198 = vld [vmem:[%s8 + $0x20] sm:$0xff]
  %v1199 = vld [vmem:[%s8 + $0x28] sm:$0xff]
  %v1200 = vld [vmem:[%s8 + $0x30] sm:$0xff]
  %v1201 = vld [vmem:[%s8 + $0x38] sm:$0xff]
  %v1202 = vld [vmem:[%s8 + $0x40] sm:$0xff]
  %v1203 = vld [vmem:[%s8 + $0x48] sm:$0xff]
  %v1204 = vld [vmem:[%s8 + $0x50] sm:$0xff]
  %v1205 = vld [vmem:[%s8 + $0x58] sm:$0xff]
  %v1206 = vld [vmem:[%s8 + $0x60] sm:$0xff]
  %v1207 = vld [vmem:[%s8 + $0x68] sm:$0xff]
  %v1208 = vld [vmem:[%s8 + $0x70] sm:$0xff]
  %v1209 = vld [vmem:[%s8 + $0x78] sm:$0xff]
  %v1210 = vld [vmem:[%s8 + $0x80] sm:$0xff]
  %v1211 = vld [vmem:[%s8 + $0x88] sm:$0xff]
  %v1212 = vld [vmem:[%s8 + $0x90] sm:$0xff]
  %v1213 = vld [vmem:[%s8 + $0x98] sm:$0xff]
  %v1214 = vld [vmem:[%s8 + $0xa0] sm:$0xff]
  %v1215 = vld [vmem:[%s8 + $0xa8] sm:$0xff]
  %v1216 = vld [vmem:[%s8 + $0xb0] sm:$0xff]
  %v1217 = vld [vmem:[%s8 + $0xb8] sm:$0xff]
  %v1218 = vld [vmem:[%s8 + $0xc0] sm:$0xff]
  %v1219 = vld [vmem:[%s8 + $0xc8] sm:$0xff]
  %v1220 = vld [vmem:[%s8 + $0xd0] sm:$0xff]
  %v1221 = vld [vmem:[%s8 + $0xd8] sm:$0xff]
  %v1222 = vld [vmem:[%s8 + $0xe0] sm:$0xff]
  %v1223 = vld [vmem:[%s8 + $0xe8] sm:$0xff]
  %v1224 = vld [vmem:[%s8 + $0xf0] sm:$0xff]
  %v1225 = vld [vmem:[%s8 + $0xf8] sm:$0xff]
  %1226 = vmatpush.msra.mxu0 %v1224
  %1227 = vmatpush.msra.mxu0 %v1222
  %1228 = vmatpush.msra.mxu0 %v1220
  %1229 = vmatpush.msra.mxu0 %v1218
  %1230 = vmatpush.msra.mxu0 %v1216
  %1231 = vmatpush.msra.mxu0 %v1214
  %1232 = vmatpush.msra.mxu0 %v1212
  %1233 = vmatpush.msra.mxu0 %v1210
  %1234 = vmatpush.msra.mxu0 %v1208
  %1235 = vmatpush.msra.mxu0 %v1206
  %1236 = vmatpush.msra.mxu0 %v1204
  %1237 = vmatpush.msra.mxu0 %v1202
  %1238 = vmatpush.msra.mxu0 %v1200
  %1239 = vmatpush.msra.mxu0 %v1198
  %1240 = vmatpush.msra.mxu0 %v1196
  %1241 = vmatpush.msra.mxu0 %v1194
  %1242 = vmatmul.f32.gmra.mxu0 %v1193
  %v1243 = vpop.f32.mrf.mxu0
  %v1244 = vadd.f32 %v199, %v1243
  %1245 = vdwg.mxu0
  %1246 = vmatpush.msra.mxu0 %v1225
  %1247 = vmatpush.msra.mxu0 %v1223
  %1248 = vmatpush.msra.mxu0 %v1221
  %1249 = vmatpush.msra.mxu0 %v1219
  %1250 = vmatpush.msra.mxu0 %v1217
  %1251 = vmatpush.msra.mxu0 %v1215
  %1252 = vmatpush.msra.mxu0 %v1213
  %1253 = vmatpush.msra.mxu0 %v1211
  %1254 = vmatpush.msra.mxu0 %v1209
  %1255 = vmatpush.msra.mxu0 %v1207
  %1256 = vmatpush.msra.mxu0 %v1205
  %1257 = vmatpush.msra.mxu0 %v1203
  %1258 = vmatpush.msra.mxu0 %v1201
  %1259 = vmatpush.msra.mxu0 %v1199
  %1260 = vmatpush.msra.mxu0 %v1197
  %1261 = vmatpush.msra.mxu0 %v1195
  %1262 = vmatmul.f32.gmra.mxu0 %v1193
  %v1263 = vpop.f32.mrf.mxu0
  %v1264 = vadd.f32 %v200, %v1263
  %1265 = vdwg.mxu0
  %v1266 = vxor.u32 %v1244, 2147483648
  %v1267 = vxor.u32 %v1264, 2147483648
  %v1268 = vmul.f32 %v1266, 1.442695
  %v1269 = vpow.pop %v1268
  %v1270 = vmul.f32 %v1267, 1.442695
  %v1271 = vpow.pop %v1270
  %v1272 = vadd.f32 %v1269, 1.0
  %v1273 = vadd.f32 %v1271, 1.0
  %v1274 = vrcp.pop %v1272
  %v1275 = vmul.f32 %v1272, %v1274
  %v1276 = vsub.f32 1.0, %v1275
  %v1277 = vmul.f32 %v1274, %v1276
  %v1278 = vadd.f32 %v1274, %v1277
  %vm1279 = vweird.f32 %v1272
  %vm1280 = vweird.f32 %v1274
  %vm1281 = vmor %vm1279, %vm1280
  %v1282 = vsel %vm1281, %v1274, %v1278
  %v1283 = vand.u32 2147483647, %v1272
  %vm1284 = vcmp.eq.f32.partialorder %v1283, 8.507059e+37
  %v1285 = vand.u32 %v1272, 2147483648
  %v1286 = vor.u32 1.1754944e-38, %v1285
  %v1287 = vsel %vm1284, %v1286, %v1282
  %v1288 = vmul.f32 1.0, %v1287
  %v1289 = vrcp.pop %v1273
  %v1290 = vmul.f32 %v1273, %v1289
  %v1291 = vsub.f32 1.0, %v1290
  %v1292 = vmul.f32 %v1289, %v1291
  %v1293 = vadd.f32 %v1289, %v1292
  %vm1294 = vweird.f32 %v1273
  %vm1295 = vweird.f32 %v1289
  %vm1296 = vmor %vm1294, %vm1295
  %v1297 = vsel %vm1296, %v1289, %v1293
  %v1298 = vand.u32 2147483647, %v1273
  %vm1299 = vcmp.eq.f32.partialorder %v1298, 8.507059e+37
  %v1300 = vand.u32 %v1273, 2147483648
  %v1301 = vor.u32 1.1754944e-38, %v1300
  %v1302 = vsel %vm1299, %v1301, %v1297
  %v1303 = vmul.f32 1.0, %v1302
  %v1304 = vtanh.pop %v1264
  %v1305 = vmul.f32 %v1288, 0.0
  %1307 = vrot.lane.b32.xlu0 %v1304, 64
  %v1308 = vpop.permute.xlu0 %1307
  %v1310 = vmul.f32 %v1288, %v1308
  %1312 = vrot.lane.b32.xlu0 %v1310, 64
  %v1313 = vpop.permute.xlu0 %1312
  %v1315 = vadd.f32 %v1305, %v1313
  %v1316 = vtanh.pop %v1315
  %1318 = vrot.lane.b32.xlu0 %v1316, 64
  %v1319 = vpop.permute.xlu0 %1318
  %v1321 = vmul.f32 %v1303, %v1319
  %v1322 = vld [vmem:[#allocation2 + $0x40] sm:$0xff]
  %v1323 = vld [vmem:[#allocation2 + $0x48] sm:$0xff]
  %v1325 = vsel %vm221, %v990, 0
  %1327 = vmatpush.msra.mxu0 0.0
  %1328 = vmatpush.msra.mxu0 0.0
  %1329 = vmatpush.msra.mxu0 0.0
  %1330 = vmatpush.msra.mxu0 0.0
  %1331 = vmatpush.msra.mxu0 0.0
  %1332 = vmatpush.msra.mxu0 0.0
  %1333 = vmatpush.msra.mxu0 0.0
  %1334 = vmatpush.msra.mxu0 0.0
  %1335 = vmatpush.msra.mxu0 %v219
  %1336 = vmatpush.msra.mxu0 %v217
  %1337 = vmatpush.msra.mxu0 %v215
  %1338 = vmatpush.msra.mxu0 %v213
  %1339 = vmatpush.msra.mxu0 %v211
  %1340 = vmatpush.msra.mxu0 %v209
  %1341 = vmatpush.msra.mxu0 %v207
  %1342 = vmatpush.msra.mxu0 %v205
  %1343 = vmatmul.f32.gmra.mxu0 %v1325
  %v1344 = vpop.f32.mrf.mxu0
  %v1345 = vadd.f32 0.0, %v1344
  %1346 = vdwg.mxu0
  %1347 = vmatpush.msra.mxu0 0.0
  %1348 = vmatpush.msra.mxu0 0.0
  %1349 = vmatpush.msra.mxu0 0.0
  %1350 = vmatpush.msra.mxu0 0.0
  %1351 = vmatpush.msra.mxu0 0.0
  %1352 = vmatpush.msra.mxu0 0.0
  %1353 = vmatpush.msra.mxu0 0.0
  %1354 = vmatpush.msra.mxu0 0.0
  %1355 = vmatpush.msra.mxu0 %v220
  %1356 = vmatpush.msra.mxu0 %v218
  %1357 = vmatpush.msra.mxu0 %v216
  %1358 = vmatpush.msra.mxu0 %v214
  %1359 = vmatpush.msra.mxu0 %v212
  %1360 = vmatpush.msra.mxu0 %v210
  %1361 = vmatpush.msra.mxu0 %v208
  %1362 = vmatpush.msra.mxu0 %v206
  %1363 = vmatmul.f32.gmra.mxu0 %v1325
  %v1364 = vpop.f32.mrf.mxu0
  %v1365 = vadd.f32 0.0, %v1364
  %1366 = vdwg.mxu0
  %v1367 = vadd.f32 %v1322, %v1345
  %v1368 = vadd.f32 %v1323, %v1365
  %v1369 = vxor.u32 %v1367, 2147483648
  %v1370 = vxor.u32 %v1368, 2147483648
  %v1371 = vmul.f32 %v1369, 1.442695
  %v1372 = vpow.pop %v1371
  %v1373 = vmul.f32 %v1370, 1.442695
  %v1374 = vpow.pop %v1373
  %v1375 = vadd.f32 %v1372, 1.0
  %v1376 = vadd.f32 %v1374, 1.0
  %v1377 = vrcp.pop %v1375
  %v1378 = vmul.f32 %v1375, %v1377
  %v1379 = vsub.f32 1.0, %v1378
  %v1380 = vmul.f32 %v1377, %v1379
  %v1381 = vadd.f32 %v1377, %v1380
  %vm1382 = vweird.f32 %v1375
  %vm1383 = vweird.f32 %v1377
  %vm1384 = vmor %vm1382, %vm1383
  %v1385 = vsel %vm1384, %v1377, %v1381
  %v1386 = vand.u32 2147483647, %v1375
  %vm1387 = vcmp.eq.f32.partialorder %v1386, 8.507059e+37
  %v1388 = vand.u32 %v1375, 2147483648
  %v1389 = vor.u32 1.1754944e-38, %v1388
  %v1390 = vsel %vm1387, %v1389, %v1385
  %v1391 = vmul.f32 1.0, %v1390
  %v1392 = vrcp.pop %v1376
  %v1393 = vmul.f32 %v1376, %v1392
  %v1394 = vsub.f32 1.0, %v1393
  %v1395 = vmul.f32 %v1392, %v1394
  %v1396 = vadd.f32 %v1392, %v1395
  %vm1397 = vweird.f32 %v1376
  %vm1398 = vweird.f32 %v1392
  %vm1399 = vmor %vm1397, %vm1398
  %v1400 = vsel %vm1399, %v1392, %v1396
  %v1401 = vand.u32 2147483647, %v1376
  %vm1402 = vcmp.eq.f32.partialorder %v1401, 8.507059e+37
  %v1403 = vand.u32 %v1376, 2147483648
  %v1404 = vor.u32 1.1754944e-38, %v1403
  %v1405 = vsel %vm1402, %v1404, %v1400
  %v1406 = vmul.f32 1.0, %v1405
  %v1407 = vtanh.pop %v1368
  %v1408 = vmul.f32 %v1391, %v984
  %1410 = vrot.lane.b32.xlu0 %v1407, 64
  %v1411 = vpop.permute.xlu0 %1410
  %v1413 = vmul.f32 %v1391, %v1411
  %1415 = vrot.lane.b32.xlu0 %v1413, 64
  %v1416 = vpop.permute.xlu0 %1415
  %v1418 = vadd.f32 %v1408, %v1416
  %v1419 = vtanh.pop %v1418
  %1421 = vrot.lane.b32.xlu0 %v1419, 64
  %v1422 = vpop.permute.xlu0 %1421
  %v1424 = vmul.f32 %v1406, %v1422
  %1426 = vrot.lane.b32.xlu0 %v1091, 64
  %v1427 = vpop.permute.xlu0 %1426
  %v1429 = vsel %vm221, %v990, %v1427
  %1430 = vmatpush.msra.mxu0 %v457
  %1431 = vmatpush.msra.mxu0 %v455
  %1432 = vmatpush.msra.mxu0 %v453
  %1433 = vmatpush.msra.mxu0 %v451
  %1434 = vmatpush.msra.mxu0 %v449
  %1435 = vmatpush.msra.mxu0 %v447
  %1436 = vmatpush.msra.mxu0 %v445
  %1437 = vmatpush.msra.mxu0 %v443
  %1438 = vmatpush.msra.mxu0 %v441
  %1439 = vmatpush.msra.mxu0 %v439
  %1440 = vmatpush.msra.mxu0 %v437
  %1441 = vmatpush.msra.mxu0 %v435
  %1442 = vmatpush.msra.mxu0 %v433
  %1443 = vmatpush.msra.mxu0 %v431
  %1444 = vmatpush.msra.mxu0 %v429
  %1445 = vmatpush.msra.mxu0 %v427
  %1446 = vmatmul.f32.gmra.mxu0 %v1429
  %v1447 = vpop.f32.mrf.mxu0
  %v1448 = vadd.f32 %v187, %v1447
  %1449 = vdwg.mxu0
  %1450 = vmatpush.msra.mxu0 %v458
  %1451 = vmatpush.msra.mxu0 %v456
  %1452 = vmatpush.msra.mxu0 %v454
  %1453 = vmatpush.msra.mxu0 %v452
  %1454 = vmatpush.msra.mxu0 %v450
  %1455 = vmatpush.msra.mxu0 %v448
  %1456 = vmatpush.msra.mxu0 %v446
  %1457 = vmatpush.msra.mxu0 %v444
  %1458 = vmatpush.msra.mxu0 %v442
  %1459 = vmatpush.msra.mxu0 %v440
  %1460 = vmatpush.msra.mxu0 %v438
  %1461 = vmatpush.msra.mxu0 %v436
  %1462 = vmatpush.msra.mxu0 %v434
  %1463 = vmatpush.msra.mxu0 %v432
  %1464 = vmatpush.msra.mxu0 %v430
  %1465 = vmatpush.msra.mxu0 %v428
  %1466 = vmatmul.f32.gmra.mxu0 %v1429
  %v1467 = vpop.f32.mrf.mxu0
  %v1468 = vadd.f32 %v188, %v1467
  %1469 = vdwg.mxu0
  %v1470 = vxor.u32 %v1448, 2147483648
  %v1471 = vxor.u32 %v1468, 2147483648
  %v1472 = vmul.f32 %v1470, 1.442695
  %v1473 = vpow.pop %v1472
  %v1474 = vmul.f32 %v1471, 1.442695
  %v1475 = vpow.pop %v1474
  %v1476 = vadd.f32 %v1473, 1.0
  %v1477 = vadd.f32 %v1475, 1.0
  %v1478 = vrcp.pop %v1476
  %v1479 = vmul.f32 %v1476, %v1478
  %v1480 = vsub.f32 1.0, %v1479
  %v1481 = vmul.f32 %v1478, %v1480
  %v1482 = vadd.f32 %v1478, %v1481
  %vm1483 = vweird.f32 %v1476
  %vm1484 = vweird.f32 %v1478
  %vm1485 = vmor %vm1483, %vm1484
  %v1486 = vsel %vm1485, %v1478, %v1482
  %v1487 = vand.u32 2147483647, %v1476
  %vm1488 = vcmp.eq.f32.partialorder %v1487, 8.507059e+37
  %v1489 = vand.u32 %v1476, 2147483648
  %v1490 = vor.u32 1.1754944e-38, %v1489
  %v1491 = vsel %vm1488, %v1490, %v1486
  %v1492 = vmul.f32 1.0, %v1491
  %v1493 = vrcp.pop %v1477
  %v1494 = vmul.f32 %v1477, %v1493
  %v1495 = vsub.f32 1.0, %v1494
  %v1496 = vmul.f32 %v1493, %v1495
  %v1497 = vadd.f32 %v1493, %v1496
  %vm1498 = vweird.f32 %v1477
  %vm1499 = vweird.f32 %v1493
  %vm1500 = vmor %vm1498, %vm1499
  %v1501 = vsel %vm1500, %v1493, %v1497
  %v1502 = vand.u32 2147483647, %v1477
  %vm1503 = vcmp.eq.f32.partialorder %v1502, 8.507059e+37
  %v1504 = vand.u32 %v1477, 2147483648
  %v1505 = vor.u32 1.1754944e-38, %v1504
  %v1506 = vsel %vm1503, %v1505, %v1501
  %v1507 = vmul.f32 1.0, %v1506
  %v1508 = vtanh.pop %v1468
  %v1509 = vmul.f32 %v1492, %v1085
  %1511 = vrot.lane.b32.xlu0 %v1508, 64
  %v1512 = vpop.permute.xlu0 %1511
  %v1514 = vmul.f32 %v1492, %v1512
  %1516 = vrot.lane.b32.xlu0 %v1514, 64
  %v1517 = vpop.permute.xlu0 %1516
  %v1519 = vadd.f32 %v1509, %v1517
  %v1520 = vtanh.pop %v1519
  %1522 = vrot.lane.b32.xlu0 %v1520, 64
  %v1523 = vpop.permute.xlu0 %1522
  %v1525 = vmul.f32 %v1507, %v1523
  %1527 = vrot.lane.b32.xlu0 %v1192, 64
  %v1528 = vpop.permute.xlu0 %1527
  %v1530 = vsel %vm221, %v1091, %v1528
  %1531 = vmatpush.msra.mxu0 %v790
  %1532 = vmatpush.msra.mxu0 %v788
  %1533 = vmatpush.msra.mxu0 %v786
  %1534 = vmatpush.msra.mxu0 %v784
  %1535 = vmatpush.msra.mxu0 %v782
  %1536 = vmatpush.msra.mxu0 %v780
  %1537 = vmatpush.msra.mxu0 %v778
  %1538 = vmatpush.msra.mxu0 %v776
  %1539 = vmatpush.msra.mxu0 %v774
  %1540 = vmatpush.msra.mxu0 %v772
  %1541 = vmatpush.msra.mxu0 %v770
  %1542 = vmatpush.msra.mxu0 %v768
  %1543 = vmatpush.msra.mxu0 %v766
  %1544 = vmatpush.msra.mxu0 %v764
  %1545 = vmatpush.msra.mxu0 %v762
  %1546 = vmatpush.msra.mxu0 %v760
  %1547 = vmatmul.f32.gmra.mxu0 %v1530
  %v1548 = vpop.f32.mrf.mxu0
  %v1549 = vadd.f32 %v193, %v1548
  %1550 = vdwg.mxu0
  %1551 = vmatpush.msra.mxu0 %v791
  %1552 = vmatpush.msra.mxu0 %v789
  %1553 = vmatpush.msra.mxu0 %v787
  %1554 = vmatpush.msra.mxu0 %v785
  %1555 = vmatpush.msra.mxu0 %v783
  %1556 = vmatpush.msra.mxu0 %v781
  %1557 = vmatpush.msra.mxu0 %v779
  %1558 = vmatpush.msra.mxu0 %v777
  %1559 = vmatpush.msra.mxu0 %v775
  %1560 = vmatpush.msra.mxu0 %v773
  %1561 = vmatpush.msra.mxu0 %v771
  %1562 = vmatpush.msra.mxu0 %v769
  %1563 = vmatpush.msra.mxu0 %v767
  %1564 = vmatpush.msra.mxu0 %v765
  %1565 = vmatpush.msra.mxu0 %v763
  %1566 = vmatpush.msra.mxu0 %v761
  %1567 = vmatmul.f32.gmra.mxu0 %v1530
  %v1568 = vpop.f32.mrf.mxu0
  %v1569 = vadd.f32 %v194, %v1568
  %1570 = vdwg.mxu0
  %v1571 = vxor.u32 %v1549, 2147483648
  %v1572 = vxor.u32 %v1569, 2147483648
  %v1573 = vmul.f32 %v1571, 1.442695
  %v1574 = vpow.pop %v1573
  %v1575 = vmul.f32 %v1572, 1.442695
  %v1576 = vpow.pop %v1575
  %v1577 = vadd.f32 %v1574, 1.0
  %v1578 = vadd.f32 %v1576, 1.0
  %v1579 = vrcp.pop %v1577
  %v1580 = vmul.f32 %v1577, %v1579
  %v1581 = vsub.f32 1.0, %v1580
  %v1582 = vmul.f32 %v1579, %v1581
  %v1583 = vadd.f32 %v1579, %v1582
  %vm1584 = vweird.f32 %v1577
  %vm1585 = vweird.f32 %v1579
  %vm1586 = vmor %vm1584, %vm1585
  %v1587 = vsel %vm1586, %v1579, %v1583
  %v1588 = vand.u32 2147483647, %v1577
  %vm1589 = vcmp.eq.f32.partialorder %v1588, 8.507059e+37
  %v1590 = vand.u32 %v1577, 2147483648
  %v1591 = vor.u32 1.1754944e-38, %v1590
  %v1592 = vsel %vm1589, %v1591, %v1587
  %v1593 = vmul.f32 1.0, %v1592
  %v1594 = vrcp.pop %v1578
  %v1595 = vmul.f32 %v1578, %v1594
  %v1596 = vsub.f32 1.0, %v1595
  %v1597 = vmul.f32 %v1594, %v1596
  %v1598 = vadd.f32 %v1594, %v1597
  %vm1599 = vweird.f32 %v1578
  %vm1600 = vweird.f32 %v1594
  %vm1601 = vmor %vm1599, %vm1600
  %v1602 = vsel %vm1601, %v1594, %v1598
  %v1603 = vand.u32 2147483647, %v1578
  %vm1604 = vcmp.eq.f32.partialorder %v1603, 8.507059e+37
  %v1605 = vand.u32 %v1578, 2147483648
  %v1606 = vor.u32 1.1754944e-38, %v1605
  %v1607 = vsel %vm1604, %v1606, %v1602
  %v1608 = vmul.f32 1.0, %v1607
  %v1609 = vtanh.pop %v1569
  %v1610 = vmul.f32 %v1593, %v1186
  %1612 = vrot.lane.b32.xlu0 %v1609, 64
  %v1613 = vpop.permute.xlu0 %1612
  %v1615 = vmul.f32 %v1593, %v1613
  %1617 = vrot.lane.b32.xlu0 %v1615, 64
  %v1618 = vpop.permute.xlu0 %1617
  %v1620 = vadd.f32 %v1610, %v1618
  %v1621 = vtanh.pop %v1620
  %1623 = vrot.lane.b32.xlu0 %v1621, 64
  %v1624 = vpop.permute.xlu0 %1623
  %v1626 = vmul.f32 %v1608, %v1624
  %1628 = vrot.lane.b32.xlu0 %v1321, 64
  %v1629 = vpop.permute.xlu0 %1628
  %v1631 = vsel %vm221, %v1192, %v1629
  %1632 = vmatpush.msra.mxu0 %v1224
  %1633 = vmatpush.msra.mxu0 %v1222
  %1634 = vmatpush.msra.mxu0 %v1220
  %1635 = vmatpush.msra.mxu0 %v1218
  %1636 = vmatpush.msra.mxu0 %v1216
  %1637 = vmatpush.msra.mxu0 %v1214
  %1638 = vmatpush.msra.mxu0 %v1212
  %1639 = vmatpush.msra.mxu0 %v1210
  %1640 = vmatpush.msra.mxu0 %v1208
  %1641 = vmatpush.msra.mxu0 %v1206
  %1642 = vmatpush.msra.mxu0 %v1204
  %1643 = vmatpush.msra.mxu0 %v1202
  %1644 = vmatpush.msra.mxu0 %v1200
  %1645 = vmatpush.msra.mxu0 %v1198
  %1646 = vmatpush.msra.mxu0 %v1196
  %1647 = vmatpush.msra.mxu0 %v1194
  %1648 = vmatmul.f32.gmra.mxu0 %v1631
  %v1649 = vpop.f32.mrf.mxu0
  %v1650 = vadd.f32 %v199, %v1649
  %1651 = vdwg.mxu0
  %1652 = vmatpush.msra.mxu0 %v1225
  %1653 = vmatpush.msra.mxu0 %v1223
  %1654 = vmatpush.msra.mxu0 %v1221
  %1655 = vmatpush.msra.mxu0 %v1219
  %1656 = vmatpush.msra.mxu0 %v1217
  %1657 = vmatpush.msra.mxu0 %v1215
  %1658 = vmatpush.msra.mxu0 %v1213
  %1659 = vmatpush.msra.mxu0 %v1211
  %1660 = vmatpush.msra.mxu0 %v1209
  %1661 = vmatpush.msra.mxu0 %v1207
  %1662 = vmatpush.msra.mxu0 %v1205
  %1663 = vmatpush.msra.mxu0 %v1203
  %1664 = vmatpush.msra.mxu0 %v1201
  %1665 = vmatpush.msra.mxu0 %v1199
  %1666 = vmatpush.msra.mxu0 %v1197
  %1667 = vmatpush.msra.mxu0 %v1195
  %1668 = vmatmul.f32.gmra.mxu0 %v1631
  %v1669 = vpop.f32.mrf.mxu0
  %v1670 = vadd.f32 %v200, %v1669
  %1671 = vdwg.mxu0
  %v1672 = vxor.u32 %v1650, 2147483648
  %v1673 = vxor.u32 %v1670, 2147483648
  %v1674 = vmul.f32 %v1672, 1.442695
  %v1675 = vpow.pop %v1674
  %v1676 = vmul.f32 %v1673, 1.442695
  %v1677 = vpow.pop %v1676
  %v1678 = vadd.f32 %v1675, 1.0
  %v1679 = vadd.f32 %v1677, 1.0
  %v1680 = vrcp.pop %v1678
  %v1681 = vmul.f32 %v1678, %v1680
  %v1682 = vsub.f32 1.0, %v1681
  %v1683 = vmul.f32 %v1680, %v1682
  %v1684 = vadd.f32 %v1680, %v1683
  %vm1685 = vweird.f32 %v1678
  %vm1686 = vweird.f32 %v1680
  %vm1687 = vmor %vm1685, %vm1686
  %v1688 = vsel %vm1687, %v1680, %v1684
  %v1689 = vand.u32 2147483647, %v1678
  %vm1690 = vcmp.eq.f32.partialorder %v1689, 8.507059e+37
  %v1691 = vand.u32 %v1678, 2147483648
  %v1692 = vor.u32 1.1754944e-38, %v1691
  %v1693 = vsel %vm1690, %v1692, %v1688
  %v1694 = vmul.f32 1.0, %v1693
  %v1695 = vrcp.pop %v1679
  %v1696 = vmul.f32 %v1679, %v1695
  %v1697 = vsub.f32 1.0, %v1696
  %v1698 = vmul.f32 %v1695, %v1697
  %v1699 = vadd.f32 %v1695, %v1698
  %vm1700 = vweird.f32 %v1679
  %vm1701 = vweird.f32 %v1695
  %vm1702 = vmor %vm1700, %vm1701
  %v1703 = vsel %vm1702, %v1695, %v1699
  %v1704 = vand.u32 2147483647, %v1679
  %vm1705 = vcmp.eq.f32.partialorder %v1704, 8.507059e+37
  %v1706 = vand.u32 %v1679, 2147483648
  %v1707 = vor.u32 1.1754944e-38, %v1706
  %v1708 = vsel %vm1705, %v1707, %v1703
  %v1709 = vmul.f32 1.0, %v1708
  %v1710 = vtanh.pop %v1670
  %v1711 = vmul.f32 %v1694, %v1315
  %1713 = vrot.lane.b32.xlu0 %v1710, 64
  %v1714 = vpop.permute.xlu0 %1713
  %v1716 = vmul.f32 %v1694, %v1714
  %1718 = vrot.lane.b32.xlu0 %v1716, 64
  %v1719 = vpop.permute.xlu0 %1718
  %v1721 = vadd.f32 %v1711, %v1719
  %v1722 = vtanh.pop %v1721
  %1724 = vrot.lane.b32.xlu0 %v1722, 64
  %v1725 = vpop.permute.xlu0 %1724
  %v1727 = vmul.f32 %v1709, %v1725
  %v1728 = vld [vmem:[#allocation2 + $0x50] sm:$0xff]
  %v1729 = vld [vmem:[#allocation2 + $0x58] sm:$0xff]
  %v1731 = vsel %vm221, %v1424, 0
  %1733 = vmatpush.msra.mxu0 0.0
  %1734 = vmatpush.msra.mxu0 0.0
  %1735 = vmatpush.msra.mxu0 0.0
  %1736 = vmatpush.msra.mxu0 0.0
  %1737 = vmatpush.msra.mxu0 0.0
  %1738 = vmatpush.msra.mxu0 0.0
  %1739 = vmatpush.msra.mxu0 0.0
  %1740 = vmatpush.msra.mxu0 0.0
  %1741 = vmatpush.msra.mxu0 %v219
  %1742 = vmatpush.msra.mxu0 %v217
  %1743 = vmatpush.msra.mxu0 %v215
  %1744 = vmatpush.msra.mxu0 %v213
  %1745 = vmatpush.msra.mxu0 %v211
  %1746 = vmatpush.msra.mxu0 %v209
  %1747 = vmatpush.msra.mxu0 %v207
  %1748 = vmatpush.msra.mxu0 %v205
  %1749 = vmatmul.f32.gmra.mxu0 %v1731
  %v1750 = vpop.f32.mrf.mxu0
  %v1751 = vadd.f32 0.0, %v1750
  %1752 = vdwg.mxu0
  %1753 = vmatpush.msra.mxu0 0.0
  %1754 = vmatpush.msra.mxu0 0.0
  %1755 = vmatpush.msra.mxu0 0.0
  %1756 = vmatpush.msra.mxu0 0.0
  %1757 = vmatpush.msra.mxu0 0.0
  %1758 = vmatpush.msra.mxu0 0.0
  %1759 = vmatpush.msra.mxu0 0.0
  %1760 = vmatpush.msra.mxu0 0.0
  %1761 = vmatpush.msra.mxu0 %v220
  %1762 = vmatpush.msra.mxu0 %v218
  %1763 = vmatpush.msra.mxu0 %v216
  %1764 = vmatpush.msra.mxu0 %v214
  %1765 = vmatpush.msra.mxu0 %v212
  %1766 = vmatpush.msra.mxu0 %v210
  %1767 = vmatpush.msra.mxu0 %v208
  %1768 = vmatpush.msra.mxu0 %v206
  %1769 = vmatmul.f32.gmra.mxu0 %v1731
  %v1770 = vpop.f32.mrf.mxu0
  %v1771 = vadd.f32 0.0, %v1770
  %1772 = vdwg.mxu0
  %v1773 = vadd.f32 %v1728, %v1751
  %v1774 = vadd.f32 %v1729, %v1771
  %v1775 = vxor.u32 %v1773, 2147483648
  %v1776 = vxor.u32 %v1774, 2147483648
  %v1777 = vmul.f32 %v1775, 1.442695
  %v1778 = vpow.pop %v1777
  %v1779 = vmul.f32 %v1776, 1.442695
  %v1780 = vpow.pop %v1779
  %v1781 = vadd.f32 %v1778, 1.0
  %v1782 = vadd.f32 %v1780, 1.0
  %v1783 = vrcp.pop %v1781
  %v1784 = vmul.f32 %v1781, %v1783
  %v1785 = vsub.f32 1.0, %v1784
  %v1786 = vmul.f32 %v1783, %v1785
  %v1787 = vadd.f32 %v1783, %v1786
  %vm1788 = vweird.f32 %v1781
  %vm1789 = vweird.f32 %v1783
  %vm1790 = vmor %vm1788, %vm1789
  %v1791 = vsel %vm1790, %v1783, %v1787
  %v1792 = vand.u32 2147483647, %v1781
  %vm1793 = vcmp.eq.f32.partialorder %v1792, 8.507059e+37
  %v1794 = vand.u32 %v1781, 2147483648
  %v1795 = vor.u32 1.1754944e-38, %v1794
  %v1796 = vsel %vm1793, %v1795, %v1791
  %v1797 = vmul.f32 1.0, %v1796
  %v1798 = vrcp.pop %v1782
  %v1799 = vmul.f32 %v1782, %v1798
  %v1800 = vsub.f32 1.0, %v1799
  %v1801 = vmul.f32 %v1798, %v1800
  %v1802 = vadd.f32 %v1798, %v1801
  %vm1803 = vweird.f32 %v1782
  %vm1804 = vweird.f32 %v1798
  %vm1805 = vmor %vm1803, %vm1804
  %v1806 = vsel %vm1805, %v1798, %v1802
  %v1807 = vand.u32 2147483647, %v1782
  %vm1808 = vcmp.eq.f32.partialorder %v1807, 8.507059e+37
  %v1809 = vand.u32 %v1782, 2147483648
  %v1810 = vor.u32 1.1754944e-38, %v1809
  %v1811 = vsel %vm1808, %v1810, %v1806
  %v1812 = vmul.f32 1.0, %v1811
  %v1813 = vtanh.pop %v1774
  %v1814 = vmul.f32 %v1797, %v1418
  %1816 = vrot.lane.b32.xlu0 %v1813, 64
  %v1817 = vpop.permute.xlu0 %1816
  %v1819 = vmul.f32 %v1797, %v1817
  %1821 = vrot.lane.b32.xlu0 %v1819, 64
  %v1822 = vpop.permute.xlu0 %1821
  %v1824 = vadd.f32 %v1814, %v1822
  %v1825 = vtanh.pop %v1824
  %1827 = vrot.lane.b32.xlu0 %v1825, 64
  %v1828 = vpop.permute.xlu0 %1827
  %v1830 = vmul.f32 %v1812, %v1828
  %1832 = vrot.lane.b32.xlu0 %v1525, 64
  %v1833 = vpop.permute.xlu0 %1832
  %v1835 = vsel %vm221, %v1424, %v1833
  %1836 = vmatpush.msra.mxu0 %v457
  %1837 = vmatpush.msra.mxu0 %v455
  %1838 = vmatpush.msra.mxu0 %v453
  %1839 = vmatpush.msra.mxu0 %v451
  %1840 = vmatpush.msra.mxu0 %v449
  %1841 = vmatpush.msra.mxu0 %v447
  %1842 = vmatpush.msra.mxu0 %v445
  %1843 = vmatpush.msra.mxu0 %v443
  %1844 = vmatpush.msra.mxu0 %v441
  %1845 = vmatpush.msra.mxu0 %v439
  %1846 = vmatpush.msra.mxu0 %v437
  %1847 = vmatpush.msra.mxu0 %v435
  %1848 = vmatpush.msra.mxu0 %v433
  %1849 = vmatpush.msra.mxu0 %v431
  %1850 = vmatpush.msra.mxu0 %v429
  %1851 = vmatpush.msra.mxu0 %v427
  %1852 = vmatmul.f32.gmra.mxu0 %v1835
  %v1853 = vpop.f32.mrf.mxu0
  %v1854 = vadd.f32 %v187, %v1853
  %1855 = vdwg.mxu0
  %1856 = vmatpush.msra.mxu0 %v458
  %1857 = vmatpush.msra.mxu0 %v456
  %1858 = vmatpush.msra.mxu0 %v454
  %1859 = vmatpush.msra.mxu0 %v452
  %1860 = vmatpush.msra.mxu0 %v450
  %1861 = vmatpush.msra.mxu0 %v448
  %1862 = vmatpush.msra.mxu0 %v446
  %1863 = vmatpush.msra.mxu0 %v444
  %1864 = vmatpush.msra.mxu0 %v442
  %1865 = vmatpush.msra.mxu0 %v440
  %1866 = vmatpush.msra.mxu0 %v438
  %1867 = vmatpush.msra.mxu0 %v436
  %1868 = vmatpush.msra.mxu0 %v434
  %1869 = vmatpush.msra.mxu0 %v432
  %1870 = vmatpush.msra.mxu0 %v430
  %1871 = vmatpush.msra.mxu0 %v428
  %1872 = vmatmul.f32.gmra.mxu0 %v1835
  %v1873 = vpop.f32.mrf.mxu0
  %v1874 = vadd.f32 %v188, %v1873
  %1875 = vdwg.mxu0
  %v1876 = vxor.u32 %v1854, 2147483648
  %v1877 = vxor.u32 %v1874, 2147483648
  %v1878 = vmul.f32 %v1876, 1.442695
  %v1879 = vpow.pop %v1878
  %v1880 = vmul.f32 %v1877, 1.442695
  %v1881 = vpow.pop %v1880
  %v1882 = vadd.f32 %v1879, 1.0
  %v1883 = vadd.f32 %v1881, 1.0
  %v1884 = vrcp.pop %v1882
  %v1885 = vmul.f32 %v1882, %v1884
  %v1886 = vsub.f32 1.0, %v1885
  %v1887 = vmul.f32 %v1884, %v1886
  %v1888 = vadd.f32 %v1884, %v1887
  %vm1889 = vweird.f32 %v1882
  %vm1890 = vweird.f32 %v1884
  %vm1891 = vmor %vm1889, %vm1890
  %v1892 = vsel %vm1891, %v1884, %v1888
  %v1893 = vand.u32 2147483647, %v1882
  %vm1894 = vcmp.eq.f32.partialorder %v1893, 8.507059e+37
  %v1895 = vand.u32 %v1882, 2147483648
  %v1896 = vor.u32 1.1754944e-38, %v1895
  %v1897 = vsel %vm1894, %v1896, %v1892
  %v1898 = vmul.f32 1.0, %v1897
  %v1899 = vrcp.pop %v1883
  %v1900 = vmul.f32 %v1883, %v1899
  %v1901 = vsub.f32 1.0, %v1900
  %v1902 = vmul.f32 %v1899, %v1901
  %v1903 = vadd.f32 %v1899, %v1902
  %vm1904 = vweird.f32 %v1883
  %vm1905 = vweird.f32 %v1899
  %vm1906 = vmor %vm1904, %vm1905
  %v1907 = vsel %vm1906, %v1899, %v1903
  %v1908 = vand.u32 2147483647, %v1883
  %vm1909 = vcmp.eq.f32.partialorder %v1908, 8.507059e+37
  %v1910 = vand.u32 %v1883, 2147483648
  %v1911 = vor.u32 1.1754944e-38, %v1910
  %v1912 = vsel %vm1909, %v1911, %v1907
  %v1913 = vmul.f32 1.0, %v1912
  %v1914 = vtanh.pop %v1874
  %v1915 = vmul.f32 %v1898, %v1519
  %1917 = vrot.lane.b32.xlu0 %v1914, 64
  %v1918 = vpop.permute.xlu0 %1917
  %v1920 = vmul.f32 %v1898, %v1918
  %1922 = vrot.lane.b32.xlu0 %v1920, 64
  %v1923 = vpop.permute.xlu0 %1922
  %v1925 = vadd.f32 %v1915, %v1923
  %v1926 = vtanh.pop %v1925
  %1928 = vrot.lane.b32.xlu0 %v1926, 64
  %v1929 = vpop.permute.xlu0 %1928
  %v1931 = vmul.f32 %v1913, %v1929
  %1933 = vrot.lane.b32.xlu0 %v1626, 64
  %v1934 = vpop.permute.xlu0 %1933
  %v1936 = vsel %vm221, %v1525, %v1934
  %1937 = vmatpush.msra.mxu0 %v790
  %1938 = vmatpush.msra.mxu0 %v788
  %1939 = vmatpush.msra.mxu0 %v786
  %1940 = vmatpush.msra.mxu0 %v784
  %1941 = vmatpush.msra.mxu0 %v782
  %1942 = vmatpush.msra.mxu0 %v780
  %1943 = vmatpush.msra.mxu0 %v778
  %1944 = vmatpush.msra.mxu0 %v776
  %1945 = vmatpush.msra.mxu0 %v774
  %1946 = vmatpush.msra.mxu0 %v772
  %1947 = vmatpush.msra.mxu0 %v770
  %1948 = vmatpush.msra.mxu0 %v768
  %1949 = vmatpush.msra.mxu0 %v766
  %1950 = vmatpush.msra.mxu0 %v764
  %1951 = vmatpush.msra.mxu0 %v762
  %1952 = vmatpush.msra.mxu0 %v760
  %1953 = vmatmul.f32.gmra.mxu0 %v1936
  %v1954 = vpop.f32.mrf.mxu0
  %v1955 = vadd.f32 %v193, %v1954
  %1956 = vdwg.mxu0
  %1957 = vmatpush.msra.mxu0 %v791
  %1958 = vmatpush.msra.mxu0 %v789
  %1959 = vmatpush.msra.mxu0 %v787
  %1960 = vmatpush.msra.mxu0 %v785
  %1961 = vmatpush.msra.mxu0 %v783
  %1962 = vmatpush.msra.mxu0 %v781
  %1963 = vmatpush.msra.mxu0 %v779
  %1964 = vmatpush.msra.mxu0 %v777
  %1965 = vmatpush.msra.mxu0 %v775
  %1966 = vmatpush.msra.mxu0 %v773
  %1967 = vmatpush.msra.mxu0 %v771
  %1968 = vmatpush.msra.mxu0 %v769
  %1969 = vmatpush.msra.mxu0 %v767
  %1970 = vmatpush.msra.mxu0 %v765
  %1971 = vmatpush.msra.mxu0 %v763
  %1972 = vmatpush.msra.mxu0 %v761
  %1973 = vmatmul.f32.gmra.mxu0 %v1936
  %v1974 = vpop.f32.mrf.mxu0
  %v1975 = vadd.f32 %v194, %v1974
  %1976 = vdwg.mxu0
  %v1977 = vxor.u32 %v1955, 2147483648
  %v1978 = vxor.u32 %v1975, 2147483648
  %v1979 = vmul.f32 %v1977, 1.442695
  %v1980 = vpow.pop %v1979
  %v1981 = vmul.f32 %v1978, 1.442695
  %v1982 = vpow.pop %v1981
  %v1983 = vadd.f32 %v1980, 1.0
  %v1984 = vadd.f32 %v1982, 1.0
  %v1985 = vrcp.pop %v1983
  %v1986 = vmul.f32 %v1983, %v1985
  %v1987 = vsub.f32 1.0, %v1986
  %v1988 = vmul.f32 %v1985, %v1987
  %v1989 = vadd.f32 %v1985, %v1988
  %vm1990 = vweird.f32 %v1983
  %vm1991 = vweird.f32 %v1985
  %vm1992 = vmor %vm1990, %vm1991
  %v1993 = vsel %vm1992, %v1985, %v1989
  %v1994 = vand.u32 2147483647, %v1983
  %vm1995 = vcmp.eq.f32.partialorder %v1994, 8.507059e+37
  %v1996 = vand.u32 %v1983, 2147483648
  %v1997 = vor.u32 1.1754944e-38, %v1996
  %v1998 = vsel %vm1995, %v1997, %v1993
  %v1999 = vmul.f32 1.0, %v1998
  %v2000 = vrcp.pop %v1984
  %v2001 = vmul.f32 %v1984, %v2000
  %v2002 = vsub.f32 1.0, %v2001
  %v2003 = vmul.f32 %v2000, %v2002
  %v2004 = vadd.f32 %v2000, %v2003
  %vm2005 = vweird.f32 %v1984
  %vm2006 = vweird.f32 %v2000
  %vm2007 = vmor %vm2005, %vm2006
  %v2008 = vsel %vm2007, %v2000, %v2004
  %v2009 = vand.u32 2147483647, %v1984
  %vm2010 = vcmp.eq.f32.partialorder %v2009, 8.507059e+37
  %v2011 = vand.u32 %v1984, 2147483648
  %v2012 = vor.u32 1.1754944e-38, %v2011
  %v2013 = vsel %vm2010, %v2012, %v2008
  %v2014 = vmul.f32 1.0, %v2013
  %v2015 = vtanh.pop %v1975
  %v2016 = vmul.f32 %v1999, %v1620
  %2018 = vrot.lane.b32.xlu0 %v2015, 64
  %v2019 = vpop.permute.xlu0 %2018
  %v2021 = vmul.f32 %v1999, %v2019
  %2023 = vrot.lane.b32.xlu0 %v2021, 64
  %v2024 = vpop.permute.xlu0 %2023
  %v2026 = vadd.f32 %v2016, %v2024
  %v2027 = vtanh.pop %v2026
  %2029 = vrot.lane.b32.xlu0 %v2027, 64
  %v2030 = vpop.permute.xlu0 %2029
  %v2032 = vmul.f32 %v2014, %v2030
  %2034 = vrot.lane.b32.xlu0 %v1727, 64
  %v2035 = vpop.permute.xlu0 %2034
  %v2037 = vsel %vm221, %v1626, %v2035
  %2038 = vmatpush.msra.mxu0 %v1224
  %2039 = vmatpush.msra.mxu0 %v1222
  %2040 = vmatpush.msra.mxu0 %v1220
  %2041 = vmatpush.msra.mxu0 %v1218
  %2042 = vmatpush.msra.mxu0 %v1216
  %2043 = vmatpush.msra.mxu0 %v1214
  %2044 = vmatpush.msra.mxu0 %v1212
  %2045 = vmatpush.msra.mxu0 %v1210
  %2046 = vmatpush.msra.mxu0 %v1208
  %2047 = vmatpush.msra.mxu0 %v1206
  %2048 = vmatpush.msra.mxu0 %v1204
  %2049 = vmatpush.msra.mxu0 %v1202
  %2050 = vmatpush.msra.mxu0 %v1200
  %2051 = vmatpush.msra.mxu0 %v1198
  %2052 = vmatpush.msra.mxu0 %v1196
  %2053 = vmatpush.msra.mxu0 %v1194
  %2054 = vmatmul.f32.gmra.mxu0 %v2037
  %v2055 = vpop.f32.mrf.mxu0
  %v2056 = vadd.f32 %v199, %v2055
  %2057 = vdwg.mxu0
  %2058 = vmatpush.msra.mxu0 %v1225
  %2059 = vmatpush.msra.mxu0 %v1223
  %2060 = vmatpush.msra.mxu0 %v1221
  %2061 = vmatpush.msra.mxu0 %v1219
  %2062 = vmatpush.msra.mxu0 %v1217
  %2063 = vmatpush.msra.mxu0 %v1215
  %2064 = vmatpush.msra.mxu0 %v1213
  %2065 = vmatpush.msra.mxu0 %v1211
  %2066 = vmatpush.msra.mxu0 %v1209
  %2067 = vmatpush.msra.mxu0 %v1207
  %2068 = vmatpush.msra.mxu0 %v1205
  %2069 = vmatpush.msra.mxu0 %v1203
  %2070 = vmatpush.msra.mxu0 %v1201
  %2071 = vmatpush.msra.mxu0 %v1199
  %2072 = vmatpush.msra.mxu0 %v1197
  %2073 = vmatpush.msra.mxu0 %v1195
  %2074 = vmatmul.f32.gmra.mxu0 %v2037
  %v2075 = vpop.f32.mrf.mxu0
  %v2076 = vadd.f32 %v200, %v2075
  %2077 = vdwg.mxu0
  %v2078 = vxor.u32 %v2056, 2147483648
  %v2079 = vxor.u32 %v2076, 2147483648
  %v2080 = vmul.f32 %v2078, 1.442695
  %v2081 = vpow.pop %v2080
  %v2082 = vmul.f32 %v2079, 1.442695
  %v2083 = vpow.pop %v2082
  %v2084 = vadd.f32 %v2081, 1.0
  %v2085 = vadd.f32 %v2083, 1.0
  %v2086 = vrcp.pop %v2084
  %v2087 = vmul.f32 %v2084, %v2086
  %v2088 = vsub.f32 1.0, %v2087
  %v2089 = vmul.f32 %v2086, %v2088
  %v2090 = vadd.f32 %v2086, %v2089
  %vm2091 = vweird.f32 %v2084
  %vm2092 = vweird.f32 %v2086
  %vm2093 = vmor %vm2091, %vm2092
  %v2094 = vsel %vm2093, %v2086, %v2090
  %v2095 = vand.u32 2147483647, %v2084
  %vm2096 = vcmp.eq.f32.partialorder %v2095, 8.507059e+37
  %v2097 = vand.u32 %v2084, 2147483648
  %v2098 = vor.u32 1.1754944e-38, %v2097
  %v2099 = vsel %vm2096, %v2098, %v2094
  %v2100 = vmul.f32 1.0, %v2099
  %v2101 = vrcp.pop %v2085
  %v2102 = vmul.f32 %v2085, %v2101
  %v2103 = vsub.f32 1.0, %v2102
  %v2104 = vmul.f32 %v2101, %v2103
  %v2105 = vadd.f32 %v2101, %v2104
  %vm2106 = vweird.f32 %v2085
  %vm2107 = vweird.f32 %v2101
  %vm2108 = vmor %vm2106, %vm2107
  %v2109 = vsel %vm2108, %v2101, %v2105
  %v2110 = vand.u32 2147483647, %v2085
  %vm2111 = vcmp.eq.f32.partialorder %v2110, 8.507059e+37
  %v2112 = vand.u32 %v2085, 2147483648
  %v2113 = vor.u32 1.1754944e-38, %v2112
  %v2114 = vsel %vm2111, %v2113, %v2109
  %v2115 = vmul.f32 1.0, %v2114
  %v2116 = vtanh.pop %v2076
  %v2117 = vmul.f32 %v2100, %v1721
  %2119 = vrot.lane.b32.xlu0 %v2116, 64
  %v2120 = vpop.permute.xlu0 %2119
  %v2122 = vmul.f32 %v2100, %v2120
  %2124 = vrot.lane.b32.xlu0 %v2122, 64
  %v2125 = vpop.permute.xlu0 %2124
  %v2127 = vadd.f32 %v2117, %v2125
  %v2128 = vtanh.pop %v2127
  %2130 = vrot.lane.b32.xlu0 %v2128, 64
  %v2131 = vpop.permute.xlu0 %2130
  %v2133 = vmul.f32 %v2115, %v2131
  %v2134 = vld [vmem:[#allocation2 + $0x60] sm:$0xff]
  %v2135 = vld [vmem:[#allocation2 + $0x68] sm:$0xff]
  %v2137 = vsel %vm221, %v1830, 0
  %2139 = vmatpush.msra.mxu0 0.0
  %2140 = vmatpush.msra.mxu0 0.0
  %2141 = vmatpush.msra.mxu0 0.0
  %2142 = vmatpush.msra.mxu0 0.0
  %2143 = vmatpush.msra.mxu0 0.0
  %2144 = vmatpush.msra.mxu0 0.0
  %2145 = vmatpush.msra.mxu0 0.0
  %2146 = vmatpush.msra.mxu0 0.0
  %2147 = vmatpush.msra.mxu0 %v219
  %2148 = vmatpush.msra.mxu0 %v217
  %2149 = vmatpush.msra.mxu0 %v215
  %2150 = vmatpush.msra.mxu0 %v213
  %2151 = vmatpush.msra.mxu0 %v211
  %2152 = vmatpush.msra.mxu0 %v209
  %2153 = vmatpush.msra.mxu0 %v207
  %2154 = vmatpush.msra.mxu0 %v205
  %2155 = vmatmul.f32.gmra.mxu0 %v2137
  %v2156 = vpop.f32.mrf.mxu0
  %v2157 = vadd.f32 0.0, %v2156
  %2158 = vdwg.mxu0
  %2159 = vmatpush.msra.mxu0 0.0
  %2160 = vmatpush.msra.mxu0 0.0
  %2161 = vmatpush.msra.mxu0 0.0
  %2162 = vmatpush.msra.mxu0 0.0
  %2163 = vmatpush.msra.mxu0 0.0
  %2164 = vmatpush.msra.mxu0 0.0
  %2165 = vmatpush.msra.mxu0 0.0
  %2166 = vmatpush.msra.mxu0 0.0
  %2167 = vmatpush.msra.mxu0 %v220
  %2168 = vmatpush.msra.mxu0 %v218
  %2169 = vmatpush.msra.mxu0 %v216
  %2170 = vmatpush.msra.mxu0 %v214
  %2171 = vmatpush.msra.mxu0 %v212
  %2172 = vmatpush.msra.mxu0 %v210
  %2173 = vmatpush.msra.mxu0 %v208
  %2174 = vmatpush.msra.mxu0 %v206
  %2175 = vmatmul.f32.gmra.mxu0 %v2137
  %v2176 = vpop.f32.mrf.mxu0
  %v2177 = vadd.f32 0.0, %v2176
  %2178 = vdwg.mxu0
  %v2179 = vadd.f32 %v2134, %v2157
  %v2180 = vadd.f32 %v2135, %v2177
  %v2181 = vxor.u32 %v2179, 2147483648
  %v2182 = vxor.u32 %v2180, 2147483648
  %v2183 = vmul.f32 %v2181, 1.442695
  %v2184 = vpow.pop %v2183
  %v2185 = vmul.f32 %v2182, 1.442695
  %v2186 = vpow.pop %v2185
  %v2187 = vadd.f32 %v2184, 1.0
  %v2188 = vadd.f32 %v2186, 1.0
  %v2189 = vrcp.pop %v2187
  %v2190 = vmul.f32 %v2187, %v2189
  %v2191 = vsub.f32 1.0, %v2190
  %v2192 = vmul.f32 %v2189, %v2191
  %v2193 = vadd.f32 %v2189, %v2192
  %vm2194 = vweird.f32 %v2187
  %vm2195 = vweird.f32 %v2189
  %vm2196 = vmor %vm2194, %vm2195
  %v2197 = vsel %vm2196, %v2189, %v2193
  %v2198 = vand.u32 2147483647, %v2187
  %vm2199 = vcmp.eq.f32.partialorder %v2198, 8.507059e+37
  %v2200 = vand.u32 %v2187, 2147483648
  %v2201 = vor.u32 1.1754944e-38, %v2200
  %v2202 = vsel %vm2199, %v2201, %v2197
  %v2203 = vmul.f32 1.0, %v2202
  %v2204 = vrcp.pop %v2188
  %v2205 = vmul.f32 %v2188, %v2204
  %v2206 = vsub.f32 1.0, %v2205
  %v2207 = vmul.f32 %v2204, %v2206
  %v2208 = vadd.f32 %v2204, %v2207
  %vm2209 = vweird.f32 %v2188
  %vm2210 = vweird.f32 %v2204
  %vm2211 = vmor %vm2209, %vm2210
  %v2212 = vsel %vm2211, %v2204, %v2208
  %v2213 = vand.u32 2147483647, %v2188
  %vm2214 = vcmp.eq.f32.partialorder %v2213, 8.507059e+37
  %v2215 = vand.u32 %v2188, 2147483648
  %v2216 = vor.u32 1.1754944e-38, %v2215
  %v2217 = vsel %vm2214, %v2216, %v2212
  %v2218 = vmul.f32 1.0, %v2217
  %v2219 = vtanh.pop %v2180
  %v2220 = vmul.f32 %v2203, %v1824
  %2222 = vrot.lane.b32.xlu0 %v2219, 64
  %v2223 = vpop.permute.xlu0 %2222
  %v2225 = vmul.f32 %v2203, %v2223
  %2227 = vrot.lane.b32.xlu0 %v2225, 64
  %v2228 = vpop.permute.xlu0 %2227
  %v2230 = vadd.f32 %v2220, %v2228
  %v2231 = vtanh.pop %v2230
  %2233 = vrot.lane.b32.xlu0 %v2231, 64
  %v2234 = vpop.permute.xlu0 %2233
  %v2236 = vmul.f32 %v2218, %v2234
  %2238 = vrot.lane.b32.xlu0 %v1931, 64
  %v2239 = vpop.permute.xlu0 %2238
  %v2241 = vsel %vm221, %v1830, %v2239
  %2242 = vmatpush.msra.mxu0 %v457
  %2243 = vmatpush.msra.mxu0 %v455
  %2244 = vmatpush.msra.mxu0 %v453
  %2245 = vmatpush.msra.mxu0 %v451
  %2246 = vmatpush.msra.mxu0 %v449
  %2247 = vmatpush.msra.mxu0 %v447
  %2248 = vmatpush.msra.mxu0 %v445
  %2249 = vmatpush.msra.mxu0 %v443
  %2250 = vmatpush.msra.mxu0 %v441
  %2251 = vmatpush.msra.mxu0 %v439
  %2252 = vmatpush.msra.mxu0 %v437
  %2253 = vmatpush.msra.mxu0 %v435
  %2254 = vmatpush.msra.mxu0 %v433
  %2255 = vmatpush.msra.mxu0 %v431
  %2256 = vmatpush.msra.mxu0 %v429
  %2257 = vmatpush.msra.mxu0 %v427
  %2258 = vmatmul.f32.gmra.mxu0 %v2241
  %v2259 = vpop.f32.mrf.mxu0
  %v2260 = vadd.f32 %v187, %v2259
  %2261 = vdwg.mxu0
  %2262 = vmatpush.msra.mxu0 %v458
  %2263 = vmatpush.msra.mxu0 %v456
  %2264 = vmatpush.msra.mxu0 %v454
  %2265 = vmatpush.msra.mxu0 %v452
  %2266 = vmatpush.msra.mxu0 %v450
  %2267 = vmatpush.msra.mxu0 %v448
  %2268 = vmatpush.msra.mxu0 %v446
  %2269 = vmatpush.msra.mxu0 %v444
  %2270 = vmatpush.msra.mxu0 %v442
  %2271 = vmatpush.msra.mxu0 %v440
  %2272 = vmatpush.msra.mxu0 %v438
  %2273 = vmatpush.msra.mxu0 %v436
  %2274 = vmatpush.msra.mxu0 %v434
  %2275 = vmatpush.msra.mxu0 %v432
  %2276 = vmatpush.msra.mxu0 %v430
  %2277 = vmatpush.msra.mxu0 %v428
  %2278 = vmatmul.f32.gmra.mxu0 %v2241
  %v2279 = vpop.f32.mrf.mxu0
  %v2280 = vadd.f32 %v188, %v2279
  %2281 = vdwg.mxu0
  %v2282 = vxor.u32 %v2260, 2147483648
  %v2283 = vxor.u32 %v2280, 2147483648
  %v2284 = vmul.f32 %v2282, 1.442695
  %v2285 = vpow.pop %v2284
  %v2286 = vmul.f32 %v2283, 1.442695
  %v2287 = vpow.pop %v2286
  %v2288 = vadd.f32 %v2285, 1.0
  %v2289 = vadd.f32 %v2287, 1.0
  %v2290 = vrcp.pop %v2288
  %v2291 = vmul.f32 %v2288, %v2290
  %v2292 = vsub.f32 1.0, %v2291
  %v2293 = vmul.f32 %v2290, %v2292
  %v2294 = vadd.f32 %v2290, %v2293
  %vm2295 = vweird.f32 %v2288
  %vm2296 = vweird.f32 %v2290
  %vm2297 = vmor %vm2295, %vm2296
  %v2298 = vsel %vm2297, %v2290, %v2294
  %v2299 = vand.u32 2147483647, %v2288
  %vm2300 = vcmp.eq.f32.partialorder %v2299, 8.507059e+37
  %v2301 = vand.u32 %v2288, 2147483648
  %v2302 = vor.u32 1.1754944e-38, %v2301
  %v2303 = vsel %vm2300, %v2302, %v2298
  %v2304 = vmul.f32 1.0, %v2303
  %v2305 = vrcp.pop %v2289
  %v2306 = vmul.f32 %v2289, %v2305
  %v2307 = vsub.f32 1.0, %v2306
  %v2308 = vmul.f32 %v2305, %v2307
  %v2309 = vadd.f32 %v2305, %v2308
  %vm2310 = vweird.f32 %v2289
  %vm2311 = vweird.f32 %v2305
  %vm2312 = vmor %vm2310, %vm2311
  %v2313 = vsel %vm2312, %v2305, %v2309
  %v2314 = vand.u32 2147483647, %v2289
  %vm2315 = vcmp.eq.f32.partialorder %v2314, 8.507059e+37
  %v2316 = vand.u32 %v2289, 2147483648
  %v2317 = vor.u32 1.1754944e-38, %v2316
  %v2318 = vsel %vm2315, %v2317, %v2313
  %v2319 = vmul.f32 1.0, %v2318
  %v2320 = vtanh.pop %v2280
  %v2321 = vmul.f32 %v2304, %v1925
  %2323 = vrot.lane.b32.xlu0 %v2320, 64
  %v2324 = vpop.permute.xlu0 %2323
  %v2326 = vmul.f32 %v2304, %v2324
  %2328 = vrot.lane.b32.xlu0 %v2326, 64
  %v2329 = vpop.permute.xlu0 %2328
  %v2331 = vadd.f32 %v2321, %v2329
  %v2332 = vtanh.pop %v2331
  %2334 = vrot.lane.b32.xlu0 %v2332, 64
  %v2335 = vpop.permute.xlu0 %2334
  %v2337 = vmul.f32 %v2319, %v2335
  %2339 = vrot.lane.b32.xlu0 %v2032, 64
  %v2340 = vpop.permute.xlu0 %2339
  %v2342 = vsel %vm221, %v1931, %v2340
  %2343 = vmatpush.msra.mxu0 %v790
  %2344 = vmatpush.msra.mxu0 %v788
  %2345 = vmatpush.msra.mxu0 %v786
  %2346 = vmatpush.msra.mxu0 %v784
  %2347 = vmatpush.msra.mxu0 %v782
  %2348 = vmatpush.msra.mxu0 %v780
  %2349 = vmatpush.msra.mxu0 %v778
  %2350 = vmatpush.msra.mxu0 %v776
  %2351 = vmatpush.msra.mxu0 %v774
  %2352 = vmatpush.msra.mxu0 %v772
  %2353 = vmatpush.msra.mxu0 %v770
  %2354 = vmatpush.msra.mxu0 %v768
  %2355 = vmatpush.msra.mxu0 %v766
  %2356 = vmatpush.msra.mxu0 %v764
  %2357 = vmatpush.msra.mxu0 %v762
  %2358 = vmatpush.msra.mxu0 %v760
  %2359 = vmatmul.f32.gmra.mxu0 %v2342
  %v2360 = vpop.f32.mrf.mxu0
  %v2361 = vadd.f32 %v193, %v2360
  %2362 = vdwg.mxu0
  %2363 = vmatpush.msra.mxu0 %v791
  %2364 = vmatpush.msra.mxu0 %v789
  %2365 = vmatpush.msra.mxu0 %v787
  %2366 = vmatpush.msra.mxu0 %v785
  %2367 = vmatpush.msra.mxu0 %v783
  %2368 = vmatpush.msra.mxu0 %v781
  %2369 = vmatpush.msra.mxu0 %v779
  %2370 = vmatpush.msra.mxu0 %v777
  %2371 = vmatpush.msra.mxu0 %v775
  %2372 = vmatpush.msra.mxu0 %v773
  %2373 = vmatpush.msra.mxu0 %v771
  %2374 = vmatpush.msra.mxu0 %v769
  %2375 = vmatpush.msra.mxu0 %v767
  %2376 = vmatpush.msra.mxu0 %v765
  %2377 = vmatpush.msra.mxu0 %v763
  %2378 = vmatpush.msra.mxu0 %v761
  %2379 = vmatmul.f32.gmra.mxu0 %v2342
  %v2380 = vpop.f32.mrf.mxu0
  %v2381 = vadd.f32 %v194, %v2380
  %2382 = vdwg.mxu0
  %v2383 = vxor.u32 %v2361, 2147483648
  %v2384 = vxor.u32 %v2381, 2147483648
  %v2385 = vmul.f32 %v2383, 1.442695
  %v2386 = vpow.pop %v2385
  %v2387 = vmul.f32 %v2384, 1.442695
  %v2388 = vpow.pop %v2387
  %v2389 = vadd.f32 %v2386, 1.0
  %v2390 = vadd.f32 %v2388, 1.0
  %v2391 = vrcp.pop %v2389
  %v2392 = vmul.f32 %v2389, %v2391
  %v2393 = vsub.f32 1.0, %v2392
  %v2394 = vmul.f32 %v2391, %v2393
  %v2395 = vadd.f32 %v2391, %v2394
  %vm2396 = vweird.f32 %v2389
  %vm2397 = vweird.f32 %v2391
  %vm2398 = vmor %vm2396, %vm2397
  %v2399 = vsel %vm2398, %v2391, %v2395
  %v2400 = vand.u32 2147483647, %v2389
  %vm2401 = vcmp.eq.f32.partialorder %v2400, 8.507059e+37
  %v2402 = vand.u32 %v2389, 2147483648
  %v2403 = vor.u32 1.1754944e-38, %v2402
  %v2404 = vsel %vm2401, %v2403, %v2399
  %v2405 = vmul.f32 1.0, %v2404
  %v2406 = vrcp.pop %v2390
  %v2407 = vmul.f32 %v2390, %v2406
  %v2408 = vsub.f32 1.0, %v2407
  %v2409 = vmul.f32 %v2406, %v2408
  %v2410 = vadd.f32 %v2406, %v2409
  %vm2411 = vweird.f32 %v2390
  %vm2412 = vweird.f32 %v2406
  %vm2413 = vmor %vm2411, %vm2412
  %v2414 = vsel %vm2413, %v2406, %v2410
  %v2415 = vand.u32 2147483647, %v2390
  %vm2416 = vcmp.eq.f32.partialorder %v2415, 8.507059e+37
  %v2417 = vand.u32 %v2390, 2147483648
  %v2418 = vor.u32 1.1754944e-38, %v2417
  %v2419 = vsel %vm2416, %v2418, %v2414
  %v2420 = vmul.f32 1.0, %v2419
  %v2421 = vtanh.pop %v2381
  %v2422 = vmul.f32 %v2405, %v2026
  %2424 = vrot.lane.b32.xlu0 %v2421, 64
  %v2425 = vpop.permute.xlu0 %2424
  %v2427 = vmul.f32 %v2405, %v2425
  %2429 = vrot.lane.b32.xlu0 %v2427, 64
  %v2430 = vpop.permute.xlu0 %2429
  %v2432 = vadd.f32 %v2422, %v2430
  %v2433 = vtanh.pop %v2432
  %2435 = vrot.lane.b32.xlu0 %v2433, 64
  %v2436 = vpop.permute.xlu0 %2435
  %v2438 = vmul.f32 %v2420, %v2436
  %2440 = vrot.lane.b32.xlu0 %v2133, 64
  %v2441 = vpop.permute.xlu0 %2440
  %v2443 = vsel %vm221, %v2032, %v2441
  %2444 = vmatpush.msra.mxu0 %v1224
  %2445 = vmatpush.msra.mxu0 %v1222
  %2446 = vmatpush.msra.mxu0 %v1220
  %2447 = vmatpush.msra.mxu0 %v1218
  %2448 = vmatpush.msra.mxu0 %v1216
  %2449 = vmatpush.msra.mxu0 %v1214
  %2450 = vmatpush.msra.mxu0 %v1212
  %2451 = vmatpush.msra.mxu0 %v1210
  %2452 = vmatpush.msra.mxu0 %v1208
  %2453 = vmatpush.msra.mxu0 %v1206
  %2454 = vmatpush.msra.mxu0 %v1204
  %2455 = vmatpush.msra.mxu0 %v1202
  %2456 = vmatpush.msra.mxu0 %v1200
  %2457 = vmatpush.msra.mxu0 %v1198
  %2458 = vmatpush.msra.mxu0 %v1196
  %2459 = vmatpush.msra.mxu0 %v1194
  %2460 = vmatmul.f32.gmra.mxu0 %v2443
  %v2461 = vpop.f32.mrf.mxu0
  %v2462 = vadd.f32 %v199, %v2461
  %2463 = vdwg.mxu0
  %2464 = vmatpush.msra.mxu0 %v1225
  %2465 = vmatpush.msra.mxu0 %v1223
  %2466 = vmatpush.msra.mxu0 %v1221
  %2467 = vmatpush.msra.mxu0 %v1219
  %2468 = vmatpush.msra.mxu0 %v1217
  %2469 = vmatpush.msra.mxu0 %v1215
  %2470 = vmatpush.msra.mxu0 %v1213
  %2471 = vmatpush.msra.mxu0 %v1211
  %2472 = vmatpush.msra.mxu0 %v1209
  %2473 = vmatpush.msra.mxu0 %v1207
  %2474 = vmatpush.msra.mxu0 %v1205
  %2475 = vmatpush.msra.mxu0 %v1203
  %2476 = vmatpush.msra.mxu0 %v1201
  %2477 = vmatpush.msra.mxu0 %v1199
  %2478 = vmatpush.msra.mxu0 %v1197
  %2479 = vmatpush.msra.mxu0 %v1195
  %2480 = vmatmul.f32.gmra.mxu0 %v2443
  %v2481 = vpop.f32.mrf.mxu0
  %v2482 = vadd.f32 %v200, %v2481
  %2483 = vdwg.mxu0
  %v2484 = vxor.u32 %v2462, 2147483648
  %v2485 = vxor.u32 %v2482, 2147483648
  %v2486 = vmul.f32 %v2484, 1.442695
  %v2487 = vpow.pop %v2486
  %v2488 = vmul.f32 %v2485, 1.442695
  %v2489 = vpow.pop %v2488
  %v2490 = vadd.f32 %v2487, 1.0
  %v2491 = vadd.f32 %v2489, 1.0
  %v2492 = vrcp.pop %v2490
  %v2493 = vmul.f32 %v2490, %v2492
  %v2494 = vsub.f32 1.0, %v2493
  %v2495 = vmul.f32 %v2492, %v2494
  %v2496 = vadd.f32 %v2492, %v2495
  %vm2497 = vweird.f32 %v2490
  %vm2498 = vweird.f32 %v2492
  %vm2499 = vmor %vm2497, %vm2498
  %v2500 = vsel %vm2499, %v2492, %v2496
  %v2501 = vand.u32 2147483647, %v2490
  %vm2502 = vcmp.eq.f32.partialorder %v2501, 8.507059e+37
  %v2503 = vand.u32 %v2490, 2147483648
  %v2504 = vor.u32 1.1754944e-38, %v2503
  %v2505 = vsel %vm2502, %v2504, %v2500
  %v2506 = vmul.f32 1.0, %v2505
  %v2507 = vrcp.pop %v2491
  %v2508 = vmul.f32 %v2491, %v2507
  %v2509 = vsub.f32 1.0, %v2508
  %v2510 = vmul.f32 %v2507, %v2509
  %v2511 = vadd.f32 %v2507, %v2510
  %vm2512 = vweird.f32 %v2491
  %vm2513 = vweird.f32 %v2507
  %vm2514 = vmor %vm2512, %vm2513
  %v2515 = vsel %vm2514, %v2507, %v2511
  %v2516 = vand.u32 2147483647, %v2491
  %vm2517 = vcmp.eq.f32.partialorder %v2516, 8.507059e+37
  %v2518 = vand.u32 %v2491, 2147483648
  %v2519 = vor.u32 1.1754944e-38, %v2518
  %v2520 = vsel %vm2517, %v2519, %v2515
  %v2521 = vmul.f32 1.0, %v2520
  %v2522 = vtanh.pop %v2482
  %v2523 = vmul.f32 %v2506, %v2127
  %2525 = vrot.lane.b32.xlu0 %v2522, 64
  %v2526 = vpop.permute.xlu0 %2525
  %v2528 = vmul.f32 %v2506, %v2526
  %2530 = vrot.lane.b32.xlu0 %v2528, 64
  %v2531 = vpop.permute.xlu0 %2530
  %v2533 = vadd.f32 %v2523, %v2531
  %v2534 = vtanh.pop %v2533
  %2536 = vrot.lane.b32.xlu0 %v2534, 64
  %v2537 = vpop.permute.xlu0 %2536
  %v2539 = vmul.f32 %v2521, %v2537
  %v2540 = vld [vmem:[#allocation2 + $0x70] sm:$0xff]
  %v2541 = vld [vmem:[#allocation2 + $0x78] sm:$0xff]
  %v2543 = vsel %vm221, %v2236, 0
  %2545 = vmatpush.msra.mxu0 0.0
  %2546 = vmatpush.msra.mxu0 0.0
  %2547 = vmatpush.msra.mxu0 0.0
  %2548 = vmatpush.msra.mxu0 0.0
  %2549 = vmatpush.msra.mxu0 0.0
  %2550 = vmatpush.msra.mxu0 0.0
  %2551 = vmatpush.msra.mxu0 0.0
  %2552 = vmatpush.msra.mxu0 0.0
  %2553 = vmatpush.msra.mxu0 %v219
  %2554 = vmatpush.msra.mxu0 %v217
  %2555 = vmatpush.msra.mxu0 %v215
  %2556 = vmatpush.msra.mxu0 %v213
  %2557 = vmatpush.msra.mxu0 %v211
  %2558 = vmatpush.msra.mxu0 %v209
  %2559 = vmatpush.msra.mxu0 %v207
  %2560 = vmatpush.msra.mxu0 %v205
  %2561 = vmatmul.f32.gmra.mxu0 %v2543
  %v2562 = vpop.f32.mrf.mxu0
  %v2563 = vadd.f32 0.0, %v2562
  %2564 = vdwg.mxu0
  %2565 = vmatpush.msra.mxu0 0.0
  %2566 = vmatpush.msra.mxu0 0.0
  %2567 = vmatpush.msra.mxu0 0.0
  %2568 = vmatpush.msra.mxu0 0.0
  %2569 = vmatpush.msra.mxu0 0.0
  %2570 = vmatpush.msra.mxu0 0.0
  %2571 = vmatpush.msra.mxu0 0.0
  %2572 = vmatpush.msra.mxu0 0.0
  %2573 = vmatpush.msra.mxu0 %v220
  %2574 = vmatpush.msra.mxu0 %v218
  %2575 = vmatpush.msra.mxu0 %v216
  %2576 = vmatpush.msra.mxu0 %v214
  %2577 = vmatpush.msra.mxu0 %v212
  %2578 = vmatpush.msra.mxu0 %v210
  %2579 = vmatpush.msra.mxu0 %v208
  %2580 = vmatpush.msra.mxu0 %v206
  %2581 = vmatmul.f32.gmra.mxu0 %v2543
  %v2582 = vpop.f32.mrf.mxu0
  %v2583 = vadd.f32 0.0, %v2582
  %2584 = vdwg.mxu0
  %v2585 = vadd.f32 %v2540, %v2563
  %v2586 = vadd.f32 %v2541, %v2583
  %v2587 = vxor.u32 %v2585, 2147483648
  %v2588 = vxor.u32 %v2586, 2147483648
  %v2589 = vmul.f32 %v2587, 1.442695
  %v2590 = vpow.pop %v2589
  %v2591 = vmul.f32 %v2588, 1.442695
  %v2592 = vpow.pop %v2591
  %v2593 = vadd.f32 %v2590, 1.0
  %v2594 = vadd.f32 %v2592, 1.0
  %v2595 = vrcp.pop %v2593
  %v2596 = vmul.f32 %v2593, %v2595
  %v2597 = vsub.f32 1.0, %v2596
  %v2598 = vmul.f32 %v2595, %v2597
  %v2599 = vadd.f32 %v2595, %v2598
  %vm2600 = vweird.f32 %v2593
  %vm2601 = vweird.f32 %v2595
  %vm2602 = vmor %vm2600, %vm2601
  %v2603 = vsel %vm2602, %v2595, %v2599
  %v2604 = vand.u32 2147483647, %v2593
  %vm2605 = vcmp.eq.f32.partialorder %v2604, 8.507059e+37
  %v2606 = vand.u32 %v2593, 2147483648
  %v2607 = vor.u32 1.1754944e-38, %v2606
  %v2608 = vsel %vm2605, %v2607, %v2603
  %v2609 = vmul.f32 1.0, %v2608
  %v2610 = vrcp.pop %v2594
  %v2611 = vmul.f32 %v2594, %v2610
  %v2612 = vsub.f32 1.0, %v2611
  %v2613 = vmul.f32 %v2610, %v2612
  %v2614 = vadd.f32 %v2610, %v2613
  %vm2615 = vweird.f32 %v2594
  %vm2616 = vweird.f32 %v2610
  %vm2617 = vmor %vm2615, %vm2616
  %v2618 = vsel %vm2617, %v2610, %v2614
  %v2619 = vand.u32 2147483647, %v2594
  %vm2620 = vcmp.eq.f32.partialorder %v2619, 8.507059e+37
  %v2621 = vand.u32 %v2594, 2147483648
  %v2622 = vor.u32 1.1754944e-38, %v2621
  %v2623 = vsel %vm2620, %v2622, %v2618
  %v2624 = vmul.f32 1.0, %v2623
  %v2625 = vtanh.pop %v2586
  %v2626 = vmul.f32 %v2609, %v2230
  %2628 = vrot.lane.b32.xlu0 %v2625, 64
  %v2629 = vpop.permute.xlu0 %2628
  %v2631 = vmul.f32 %v2609, %v2629
  %2633 = vrot.lane.b32.xlu0 %v2631, 64
  %v2634 = vpop.permute.xlu0 %2633
  %v2636 = vadd.f32 %v2626, %v2634
  %v2637 = vtanh.pop %v2636
  %2639 = vrot.lane.b32.xlu0 %v2637, 64
  %v2640 = vpop.permute.xlu0 %2639
  %v2642 = vmul.f32 %v2624, %v2640
  %2644 = vrot.lane.b32.xlu0 %v2337, 64
  %v2645 = vpop.permute.xlu0 %2644
  %v2647 = vsel %vm221, %v2236, %v2645
  %2648 = vmatpush.msra.mxu0 %v457
  %2649 = vmatpush.msra.mxu0 %v455
  %2650 = vmatpush.msra.mxu0 %v453
  %2651 = vmatpush.msra.mxu0 %v451
  %2652 = vmatpush.msra.mxu0 %v449
  %2653 = vmatpush.msra.mxu0 %v447
  %2654 = vmatpush.msra.mxu0 %v445
  %2655 = vmatpush.msra.mxu0 %v443
  %2656 = vmatpush.msra.mxu0 %v441
  %2657 = vmatpush.msra.mxu0 %v439
  %2658 = vmatpush.msra.mxu0 %v437
  %2659 = vmatpush.msra.mxu0 %v435
  %2660 = vmatpush.msra.mxu0 %v433
  %2661 = vmatpush.msra.mxu0 %v431
  %2662 = vmatpush.msra.mxu0 %v429
  %2663 = vmatpush.msra.mxu0 %v427
  %2664 = vmatmul.f32.gmra.mxu0 %v2647
  %v2665 = vpop.f32.mrf.mxu0
  %v2666 = vadd.f32 %v187, %v2665
  %2667 = vdwg.mxu0
  %2668 = vmatpush.msra.mxu0 %v458
  %2669 = vmatpush.msra.mxu0 %v456
  %2670 = vmatpush.msra.mxu0 %v454
  %2671 = vmatpush.msra.mxu0 %v452
  %2672 = vmatpush.msra.mxu0 %v450
  %2673 = vmatpush.msra.mxu0 %v448
  %2674 = vmatpush.msra.mxu0 %v446
  %2675 = vmatpush.msra.mxu0 %v444
  %2676 = vmatpush.msra.mxu0 %v442
  %2677 = vmatpush.msra.mxu0 %v440
  %2678 = vmatpush.msra.mxu0 %v438
  %2679 = vmatpush.msra.mxu0 %v436
  %2680 = vmatpush.msra.mxu0 %v434
  %2681 = vmatpush.msra.mxu0 %v432
  %2682 = vmatpush.msra.mxu0 %v430
  %2683 = vmatpush.msra.mxu0 %v428
  %2684 = vmatmul.f32.gmra.mxu0 %v2647
  %v2685 = vpop.f32.mrf.mxu0
  %v2686 = vadd.f32 %v188, %v2685
  %2687 = vdwg.mxu0
  %v2688 = vxor.u32 %v2666, 2147483648
  %v2689 = vxor.u32 %v2686, 2147483648
  %v2690 = vmul.f32 %v2688, 1.442695
  %v2691 = vpow.pop %v2690
  %v2692 = vmul.f32 %v2689, 1.442695
  %v2693 = vpow.pop %v2692
  %v2694 = vadd.f32 %v2691, 1.0
  %v2695 = vadd.f32 %v2693, 1.0
  %v2696 = vrcp.pop %v2694
  %v2697 = vmul.f32 %v2694, %v2696
  %v2698 = vsub.f32 1.0, %v2697
  %v2699 = vmul.f32 %v2696, %v2698
  %v2700 = vadd.f32 %v2696, %v2699
  %vm2701 = vweird.f32 %v2694
  %vm2702 = vweird.f32 %v2696
  %vm2703 = vmor %vm2701, %vm2702
  %v2704 = vsel %vm2703, %v2696, %v2700
  %v2705 = vand.u32 2147483647, %v2694
  %vm2706 = vcmp.eq.f32.partialorder %v2705, 8.507059e+37
  %v2707 = vand.u32 %v2694, 2147483648
  %v2708 = vor.u32 1.1754944e-38, %v2707
  %v2709 = vsel %vm2706, %v2708, %v2704
  %v2710 = vmul.f32 1.0, %v2709
  %v2711 = vrcp.pop %v2695
  %v2712 = vmul.f32 %v2695, %v2711
  %v2713 = vsub.f32 1.0, %v2712
  %v2714 = vmul.f32 %v2711, %v2713
  %v2715 = vadd.f32 %v2711, %v2714
  %vm2716 = vweird.f32 %v2695
  %vm2717 = vweird.f32 %v2711
  %vm2718 = vmor %vm2716, %vm2717
  %v2719 = vsel %vm2718, %v2711, %v2715
  %v2720 = vand.u32 2147483647, %v2695
  %vm2721 = vcmp.eq.f32.partialorder %v2720, 8.507059e+37
  %v2722 = vand.u32 %v2695, 2147483648
  %v2723 = vor.u32 1.1754944e-38, %v2722
  %v2724 = vsel %vm2721, %v2723, %v2719
  %v2725 = vmul.f32 1.0, %v2724
  %v2726 = vtanh.pop %v2686
  %v2727 = vmul.f32 %v2710, %v2331
  %2729 = vrot.lane.b32.xlu0 %v2726, 64
  %v2730 = vpop.permute.xlu0 %2729
  %v2732 = vmul.f32 %v2710, %v2730
  %2734 = vrot.lane.b32.xlu0 %v2732, 64
  %v2735 = vpop.permute.xlu0 %2734
  %v2737 = vadd.f32 %v2727, %v2735
  %v2738 = vtanh.pop %v2737
  %2740 = vrot.lane.b32.xlu0 %v2738, 64
  %v2741 = vpop.permute.xlu0 %2740
  %v2743 = vmul.f32 %v2725, %v2741
  %2745 = vrot.lane.b32.xlu0 %v2438, 64
  %v2746 = vpop.permute.xlu0 %2745
  %v2748 = vsel %vm221, %v2337, %v2746
  %2749 = vmatpush.msra.mxu0 %v790
  %2750 = vmatpush.msra.mxu0 %v788
  %2751 = vmatpush.msra.mxu0 %v786
  %2752 = vmatpush.msra.mxu0 %v784
  %2753 = vmatpush.msra.mxu0 %v782
  %2754 = vmatpush.msra.mxu0 %v780
  %2755 = vmatpush.msra.mxu0 %v778
  %2756 = vmatpush.msra.mxu0 %v776
  %2757 = vmatpush.msra.mxu0 %v774
  %2758 = vmatpush.msra.mxu0 %v772
  %2759 = vmatpush.msra.mxu0 %v770
  %2760 = vmatpush.msra.mxu0 %v768
  %2761 = vmatpush.msra.mxu0 %v766
  %2762 = vmatpush.msra.mxu0 %v764
  %2763 = vmatpush.msra.mxu0 %v762
  %2764 = vmatpush.msra.mxu0 %v760
  %2765 = vmatmul.f32.gmra.mxu0 %v2748
  %v2766 = vpop.f32.mrf.mxu0
  %v2767 = vadd.f32 %v193, %v2766
  %2768 = vdwg.mxu0
  %2769 = vmatpush.msra.mxu0 %v791
  %2770 = vmatpush.msra.mxu0 %v789
  %2771 = vmatpush.msra.mxu0 %v787
  %2772 = vmatpush.msra.mxu0 %v785
  %2773 = vmatpush.msra.mxu0 %v783
  %2774 = vmatpush.msra.mxu0 %v781
  %2775 = vmatpush.msra.mxu0 %v779
  %2776 = vmatpush.msra.mxu0 %v777
  %2777 = vmatpush.msra.mxu0 %v775
  %2778 = vmatpush.msra.mxu0 %v773
  %2779 = vmatpush.msra.mxu0 %v771
  %2780 = vmatpush.msra.mxu0 %v769
  %2781 = vmatpush.msra.mxu0 %v767
  %2782 = vmatpush.msra.mxu0 %v765
  %2783 = vmatpush.msra.mxu0 %v763
  %2784 = vmatpush.msra.mxu0 %v761
  %2785 = vmatmul.f32.gmra.mxu0 %v2748
  %v2786 = vpop.f32.mrf.mxu0
  %v2787 = vadd.f32 %v194, %v2786
  %2788 = vdwg.mxu0
  %v2789 = vxor.u32 %v2767, 2147483648
  %v2790 = vxor.u32 %v2787, 2147483648
  %v2791 = vmul.f32 %v2789, 1.442695
  %v2792 = vpow.pop %v2791
  %v2793 = vmul.f32 %v2790, 1.442695
  %v2794 = vpow.pop %v2793
  %v2795 = vadd.f32 %v2792, 1.0
  %v2796 = vadd.f32 %v2794, 1.0
  %v2797 = vrcp.pop %v2795
  %v2798 = vmul.f32 %v2795, %v2797
  %v2799 = vsub.f32 1.0, %v2798
  %v2800 = vmul.f32 %v2797, %v2799
  %v2801 = vadd.f32 %v2797, %v2800
  %vm2802 = vweird.f32 %v2795
  %vm2803 = vweird.f32 %v2797
  %vm2804 = vmor %vm2802, %vm2803
  %v2805 = vsel %vm2804, %v2797, %v2801
  %v2806 = vand.u32 2147483647, %v2795
  %vm2807 = vcmp.eq.f32.partialorder %v2806, 8.507059e+37
  %v2808 = vand.u32 %v2795, 2147483648
  %v2809 = vor.u32 1.1754944e-38, %v2808
  %v2810 = vsel %vm2807, %v2809, %v2805
  %v2811 = vmul.f32 1.0, %v2810
  %v2812 = vrcp.pop %v2796
  %v2813 = vmul.f32 %v2796, %v2812
  %v2814 = vsub.f32 1.0, %v2813
  %v2815 = vmul.f32 %v2812, %v2814
  %v2816 = vadd.f32 %v2812, %v2815
  %vm2817 = vweird.f32 %v2796
  %vm2818 = vweird.f32 %v2812
  %vm2819 = vmor %vm2817, %vm2818
  %v2820 = vsel %vm2819, %v2812, %v2816
  %v2821 = vand.u32 2147483647, %v2796
  %vm2822 = vcmp.eq.f32.partialorder %v2821, 8.507059e+37
  %v2823 = vand.u32 %v2796, 2147483648
  %v2824 = vor.u32 1.1754944e-38, %v2823
  %v2825 = vsel %vm2822, %v2824, %v2820
  %v2826 = vmul.f32 1.0, %v2825
  %v2827 = vtanh.pop %v2787
  %v2828 = vmul.f32 %v2811, %v2432
  %2830 = vrot.lane.b32.xlu0 %v2827, 64
  %v2831 = vpop.permute.xlu0 %2830
  %v2833 = vmul.f32 %v2811, %v2831
  %2835 = vrot.lane.b32.xlu0 %v2833, 64
  %v2836 = vpop.permute.xlu0 %2835
  %v2838 = vadd.f32 %v2828, %v2836
  %v2839 = vtanh.pop %v2838
  %2841 = vrot.lane.b32.xlu0 %v2839, 64
  %v2842 = vpop.permute.xlu0 %2841
  %v2844 = vmul.f32 %v2826, %v2842
  %2846 = vrot.lane.b32.xlu0 %v2539, 64
  %v2847 = vpop.permute.xlu0 %2846
  %v2849 = vsel %vm221, %v2438, %v2847
  %2850 = vmatpush.msra.mxu0 %v1224
  %2851 = vmatpush.msra.mxu0 %v1222
  %2852 = vmatpush.msra.mxu0 %v1220
  %2853 = vmatpush.msra.mxu0 %v1218
  %2854 = vmatpush.msra.mxu0 %v1216
  %2855 = vmatpush.msra.mxu0 %v1214
  %2856 = vmatpush.msra.mxu0 %v1212
  %2857 = vmatpush.msra.mxu0 %v1210
  %2858 = vmatpush.msra.mxu0 %v1208
  %2859 = vmatpush.msra.mxu0 %v1206
  %2860 = vmatpush.msra.mxu0 %v1204
  %2861 = vmatpush.msra.mxu0 %v1202
  %2862 = vmatpush.msra.mxu0 %v1200
  %2863 = vmatpush.msra.mxu0 %v1198
  %2864 = vmatpush.msra.mxu0 %v1196
  %2865 = vmatpush.msra.mxu0 %v1194
  %2866 = vmatmul.f32.gmra.mxu0 %v2849
  %v2867 = vpop.f32.mrf.mxu0
  %v2868 = vadd.f32 %v199, %v2867
  %2869 = vdwg.mxu0
  %2870 = vmatpush.msra.mxu0 %v1225
  %2871 = vmatpush.msra.mxu0 %v1223
  %2872 = vmatpush.msra.mxu0 %v1221
  %2873 = vmatpush.msra.mxu0 %v1219
  %2874 = vmatpush.msra.mxu0 %v1217
  %2875 = vmatpush.msra.mxu0 %v1215
  %2876 = vmatpush.msra.mxu0 %v1213
  %2877 = vmatpush.msra.mxu0 %v1211
  %2878 = vmatpush.msra.mxu0 %v1209
  %2879 = vmatpush.msra.mxu0 %v1207
  %2880 = vmatpush.msra.mxu0 %v1205
  %2881 = vmatpush.msra.mxu0 %v1203
  %2882 = vmatpush.msra.mxu0 %v1201
  %2883 = vmatpush.msra.mxu0 %v1199
  %2884 = vmatpush.msra.mxu0 %v1197
  %2885 = vmatpush.msra.mxu0 %v1195
  %2886 = vmatmul.f32.gmra.mxu0 %v2849
  %v2887 = vpop.f32.mrf.mxu0
  %v2888 = vadd.f32 %v200, %v2887
  %2889 = vdwg.mxu0
  %v2890 = vxor.u32 %v2868, 2147483648
  %v2891 = vxor.u32 %v2888, 2147483648
  %v2892 = vmul.f32 %v2890, 1.442695
  %v2893 = vpow.pop %v2892
  %v2894 = vmul.f32 %v2891, 1.442695
  %v2895 = vpow.pop %v2894
  %v2896 = vadd.f32 %v2893, 1.0
  %v2897 = vadd.f32 %v2895, 1.0
  %v2898 = vrcp.pop %v2896
  %v2899 = vmul.f32 %v2896, %v2898
  %v2900 = vsub.f32 1.0, %v2899
  %v2901 = vmul.f32 %v2898, %v2900
  %v2902 = vadd.f32 %v2898, %v2901
  %vm2903 = vweird.f32 %v2896
  %vm2904 = vweird.f32 %v2898
  %vm2905 = vmor %vm2903, %vm2904
  %v2906 = vsel %vm2905, %v2898, %v2902
  %v2907 = vand.u32 2147483647, %v2896
  %vm2908 = vcmp.eq.f32.partialorder %v2907, 8.507059e+37
  %v2909 = vand.u32 %v2896, 2147483648
  %v2910 = vor.u32 1.1754944e-38, %v2909
  %v2911 = vsel %vm2908, %v2910, %v2906
  %v2912 = vmul.f32 1.0, %v2911
  %v2913 = vrcp.pop %v2897
  %v2914 = vmul.f32 %v2897, %v2913
  %v2915 = vsub.f32 1.0, %v2914
  %v2916 = vmul.f32 %v2913, %v2915
  %v2917 = vadd.f32 %v2913, %v2916
  %vm2918 = vweird.f32 %v2897
  %vm2919 = vweird.f32 %v2913
  %vm2920 = vmor %vm2918, %vm2919
  %v2921 = vsel %vm2920, %v2913, %v2917
  %v2922 = vand.u32 2147483647, %v2897
  %vm2923 = vcmp.eq.f32.partialorder %v2922, 8.507059e+37
  %v2924 = vand.u32 %v2897, 2147483648
  %v2925 = vor.u32 1.1754944e-38, %v2924
  %v2926 = vsel %vm2923, %v2925, %v2921
  %v2927 = vmul.f32 1.0, %v2926
  %v2928 = vtanh.pop %v2888
  %v2929 = vmul.f32 %v2912, %v2533
  %2931 = vrot.lane.b32.xlu0 %v2928, 64
  %v2932 = vpop.permute.xlu0 %2931
  %v2934 = vmul.f32 %v2912, %v2932
  %2936 = vrot.lane.b32.xlu0 %v2934, 64
  %v2937 = vpop.permute.xlu0 %2936
  %v2939 = vadd.f32 %v2929, %v2937
  %v2940 = vtanh.pop %v2939
  %2942 = vrot.lane.b32.xlu0 %v2940, 64
  %v2943 = vpop.permute.xlu0 %2942
  %v2945 = vmul.f32 %v2927, %v2943
  %2947 = vrot.lane.b32.xlu0 %v2743, 64
  %v2948 = vpop.permute.xlu0 %2947
  %v2950 = vsel %vm221, %v2642, %v2948
  %2951 = vmatpush.msra.mxu0 %v457
  %2952 = vmatpush.msra.mxu0 %v455
  %2953 = vmatpush.msra.mxu0 %v453
  %2954 = vmatpush.msra.mxu0 %v451
  %2955 = vmatpush.msra.mxu0 %v449
  %2956 = vmatpush.msra.mxu0 %v447
  %2957 = vmatpush.msra.mxu0 %v445
  %2958 = vmatpush.msra.mxu0 %v443
  %2959 = vmatpush.msra.mxu0 %v441
  %2960 = vmatpush.msra.mxu0 %v439
  %2961 = vmatpush.msra.mxu0 %v437
  %2962 = vmatpush.msra.mxu0 %v435
  %2963 = vmatpush.msra.mxu0 %v433
  %2964 = vmatpush.msra.mxu0 %v431
  %2965 = vmatpush.msra.mxu0 %v429
  %2966 = vmatpush.msra.mxu0 %v427
  %2967 = vmatmul.f32.gmra.mxu0 %v2950
  %v2968 = vpop.f32.mrf.mxu0
  %v2969 = vadd.f32 %v187, %v2968
  %2970 = vdwg.mxu0
  %2971 = vmatpush.msra.mxu0 %v458
  %2972 = vmatpush.msra.mxu0 %v456
  %2973 = vmatpush.msra.mxu0 %v454
  %2974 = vmatpush.msra.mxu0 %v452
  %2975 = vmatpush.msra.mxu0 %v450
  %2976 = vmatpush.msra.mxu0 %v448
  %2977 = vmatpush.msra.mxu0 %v446
  %2978 = vmatpush.msra.mxu0 %v444
  %2979 = vmatpush.msra.mxu0 %v442
  %2980 = vmatpush.msra.mxu0 %v440
  %2981 = vmatpush.msra.mxu0 %v438
  %2982 = vmatpush.msra.mxu0 %v436
  %2983 = vmatpush.msra.mxu0 %v434
  %2984 = vmatpush.msra.mxu0 %v432
  %2985 = vmatpush.msra.mxu0 %v430
  %2986 = vmatpush.msra.mxu0 %v428
  %2987 = vmatmul.f32.gmra.mxu0 %v2950
  %v2988 = vpop.f32.mrf.mxu0
  %v2989 = vadd.f32 %v188, %v2988
  %2990 = vdwg.mxu0
  %v2991 = vxor.u32 %v2969, 2147483648
  %v2992 = vxor.u32 %v2989, 2147483648
  %v2993 = vmul.f32 %v2991, 1.442695
  %v2994 = vpow.pop %v2993
  %v2995 = vmul.f32 %v2992, 1.442695
  %v2996 = vpow.pop %v2995
  %v2997 = vadd.f32 %v2994, 1.0
  %v2998 = vadd.f32 %v2996, 1.0
  %v2999 = vrcp.pop %v2997
  %v3000 = vmul.f32 %v2997, %v2999
  %v3001 = vsub.f32 1.0, %v3000
  %v3002 = vmul.f32 %v2999, %v3001
  %v3003 = vadd.f32 %v2999, %v3002
  %vm3004 = vweird.f32 %v2997
  %vm3005 = vweird.f32 %v2999
  %vm3006 = vmor %vm3004, %vm3005
  %v3007 = vsel %vm3006, %v2999, %v3003
  %v3008 = vand.u32 2147483647, %v2997
  %vm3009 = vcmp.eq.f32.partialorder %v3008, 8.507059e+37
  %v3010 = vand.u32 %v2997, 2147483648
  %v3011 = vor.u32 1.1754944e-38, %v3010
  %v3012 = vsel %vm3009, %v3011, %v3007
  %v3013 = vmul.f32 1.0, %v3012
  %v3014 = vrcp.pop %v2998
  %v3015 = vmul.f32 %v2998, %v3014
  %v3016 = vsub.f32 1.0, %v3015
  %v3017 = vmul.f32 %v3014, %v3016
  %v3018 = vadd.f32 %v3014, %v3017
  %vm3019 = vweird.f32 %v2998
  %vm3020 = vweird.f32 %v3014
  %vm3021 = vmor %vm3019, %vm3020
  %v3022 = vsel %vm3021, %v3014, %v3018
  %v3023 = vand.u32 2147483647, %v2998
  %vm3024 = vcmp.eq.f32.partialorder %v3023, 8.507059e+37
  %v3025 = vand.u32 %v2998, 2147483648
  %v3026 = vor.u32 1.1754944e-38, %v3025
  %v3027 = vsel %vm3024, %v3026, %v3022
  %v3028 = vmul.f32 1.0, %v3027
  %v3029 = vtanh.pop %v2989
  %v3030 = vmul.f32 %v3013, %v2737
  %3032 = vrot.lane.b32.xlu0 %v3029, 64
  %v3033 = vpop.permute.xlu0 %3032
  %v3035 = vmul.f32 %v3013, %v3033
  %3037 = vrot.lane.b32.xlu0 %v3035, 64
  %v3038 = vpop.permute.xlu0 %3037
  %v3040 = vadd.f32 %v3030, %v3038
  %v3041 = vtanh.pop %v3040
  %3043 = vrot.lane.b32.xlu0 %v3041, 64
  %v3044 = vpop.permute.xlu0 %3043
  %v3046 = vmul.f32 %v3028, %v3044
  %3048 = vrot.lane.b32.xlu0 %v2844, 64
  %v3049 = vpop.permute.xlu0 %3048
  %v3051 = vsel %vm221, %v2743, %v3049
  %3052 = vmatpush.msra.mxu0 %v790
  %3053 = vmatpush.msra.mxu0 %v788
  %3054 = vmatpush.msra.mxu0 %v786
  %3055 = vmatpush.msra.mxu0 %v784
  %3056 = vmatpush.msra.mxu0 %v782
  %3057 = vmatpush.msra.mxu0 %v780
  %3058 = vmatpush.msra.mxu0 %v778
  %3059 = vmatpush.msra.mxu0 %v776
  %3060 = vmatpush.msra.mxu0 %v774
  %3061 = vmatpush.msra.mxu0 %v772
  %3062 = vmatpush.msra.mxu0 %v770
  %3063 = vmatpush.msra.mxu0 %v768
  %3064 = vmatpush.msra.mxu0 %v766
  %3065 = vmatpush.msra.mxu0 %v764
  %3066 = vmatpush.msra.mxu0 %v762
  %3067 = vmatpush.msra.mxu0 %v760
  %3068 = vmatmul.f32.gmra.mxu0 %v3051
  %v3069 = vpop.f32.mrf.mxu0
  %v3070 = vadd.f32 %v193, %v3069
  %3071 = vdwg.mxu0
  %3072 = vmatpush.msra.mxu0 %v791
  %3073 = vmatpush.msra.mxu0 %v789
  %3074 = vmatpush.msra.mxu0 %v787
  %3075 = vmatpush.msra.mxu0 %v785
  %3076 = vmatpush.msra.mxu0 %v783
  %3077 = vmatpush.msra.mxu0 %v781
  %3078 = vmatpush.msra.mxu0 %v779
  %3079 = vmatpush.msra.mxu0 %v777
  %3080 = vmatpush.msra.mxu0 %v775
  %3081 = vmatpush.msra.mxu0 %v773
  %3082 = vmatpush.msra.mxu0 %v771
  %3083 = vmatpush.msra.mxu0 %v769
  %3084 = vmatpush.msra.mxu0 %v767
  %3085 = vmatpush.msra.mxu0 %v765
  %3086 = vmatpush.msra.mxu0 %v763
  %3087 = vmatpush.msra.mxu0 %v761
  %3088 = vmatmul.f32.gmra.mxu0 %v3051
  %v3089 = vpop.f32.mrf.mxu0
  %v3090 = vadd.f32 %v194, %v3089
  %3091 = vdwg.mxu0
  %v3092 = vxor.u32 %v3070, 2147483648
  %v3093 = vxor.u32 %v3090, 2147483648
  %v3094 = vmul.f32 %v3092, 1.442695
  %v3095 = vpow.pop %v3094
  %v3096 = vmul.f32 %v3093, 1.442695
  %v3097 = vpow.pop %v3096
  %v3098 = vadd.f32 %v3095, 1.0
  %v3099 = vadd.f32 %v3097, 1.0
  %v3100 = vrcp.pop %v3098
  %v3101 = vmul.f32 %v3098, %v3100
  %v3102 = vsub.f32 1.0, %v3101
  %v3103 = vmul.f32 %v3100, %v3102
  %v3104 = vadd.f32 %v3100, %v3103
  %vm3105 = vweird.f32 %v3098
  %vm3106 = vweird.f32 %v3100
  %vm3107 = vmor %vm3105, %vm3106
  %v3108 = vsel %vm3107, %v3100, %v3104
  %v3109 = vand.u32 2147483647, %v3098
  %vm3110 = vcmp.eq.f32.partialorder %v3109, 8.507059e+37
  %v3111 = vand.u32 %v3098, 2147483648
  %v3112 = vor.u32 1.1754944e-38, %v3111
  %v3113 = vsel %vm3110, %v3112, %v3108
  %v3114 = vmul.f32 1.0, %v3113
  %v3115 = vrcp.pop %v3099
  %v3116 = vmul.f32 %v3099, %v3115
  %v3117 = vsub.f32 1.0, %v3116
  %v3118 = vmul.f32 %v3115, %v3117
  %v3119 = vadd.f32 %v3115, %v3118
  %vm3120 = vweird.f32 %v3099
  %vm3121 = vweird.f32 %v3115
  %vm3122 = vmor %vm3120, %vm3121
  %v3123 = vsel %vm3122, %v3115, %v3119
  %v3124 = vand.u32 2147483647, %v3099
  %vm3125 = vcmp.eq.f32.partialorder %v3124, 8.507059e+37
  %v3126 = vand.u32 %v3099, 2147483648
  %v3127 = vor.u32 1.1754944e-38, %v3126
  %v3128 = vsel %vm3125, %v3127, %v3123
  %v3129 = vmul.f32 1.0, %v3128
  %v3130 = vtanh.pop %v3090
  %v3131 = vmul.f32 %v3114, %v2838
  %3133 = vrot.lane.b32.xlu0 %v3130, 64
  %v3134 = vpop.permute.xlu0 %3133
  %v3136 = vmul.f32 %v3114, %v3134
  %3138 = vrot.lane.b32.xlu0 %v3136, 64
  %v3139 = vpop.permute.xlu0 %3138
  %v3141 = vadd.f32 %v3131, %v3139
  %v3142 = vtanh.pop %v3141
  %3144 = vrot.lane.b32.xlu0 %v3142, 64
  %v3145 = vpop.permute.xlu0 %3144
  %v3147 = vmul.f32 %v3129, %v3145
  %3149 = vrot.lane.b32.xlu0 %v2945, 64
  %v3150 = vpop.permute.xlu0 %3149
  %v3152 = vsel %vm221, %v2844, %v3150
  %3153 = vmatpush.msra.mxu0 %v1224
  %3154 = vmatpush.msra.mxu0 %v1222
  %3155 = vmatpush.msra.mxu0 %v1220
  %3156 = vmatpush.msra.mxu0 %v1218
  %3157 = vmatpush.msra.mxu0 %v1216
  %3158 = vmatpush.msra.mxu0 %v1214
  %3159 = vmatpush.msra.mxu0 %v1212
  %3160 = vmatpush.msra.mxu0 %v1210
  %3161 = vmatpush.msra.mxu0 %v1208
  %3162 = vmatpush.msra.mxu0 %v1206
  %3163 = vmatpush.msra.mxu0 %v1204
  %3164 = vmatpush.msra.mxu0 %v1202
  %3165 = vmatpush.msra.mxu0 %v1200
  %3166 = vmatpush.msra.mxu0 %v1198
  %3167 = vmatpush.msra.mxu0 %v1196
  %3168 = vmatpush.msra.mxu0 %v1194
  %3169 = vmatmul.f32.gmra.mxu0 %v3152
  %v3170 = vpop.f32.mrf.mxu0
  %v3171 = vadd.f32 %v199, %v3170
  %3172 = vdwg.mxu0
  %3173 = vmatpush.msra.mxu0 %v1225
  %3174 = vmatpush.msra.mxu0 %v1223
  %3175 = vmatpush.msra.mxu0 %v1221
  %3176 = vmatpush.msra.mxu0 %v1219
  %3177 = vmatpush.msra.mxu0 %v1217
  %3178 = vmatpush.msra.mxu0 %v1215
  %3179 = vmatpush.msra.mxu0 %v1213
  %3180 = vmatpush.msra.mxu0 %v1211
  %3181 = vmatpush.msra.mxu0 %v1209
  %3182 = vmatpush.msra.mxu0 %v1207
  %3183 = vmatpush.msra.mxu0 %v1205
  %3184 = vmatpush.msra.mxu0 %v1203
  %3185 = vmatpush.msra.mxu0 %v1201
  %3186 = vmatpush.msra.mxu0 %v1199
  %3187 = vmatpush.msra.mxu0 %v1197
  %3188 = vmatpush.msra.mxu0 %v1195
  %3189 = vmatmul.f32.gmra.mxu0 %v3152
  %v3190 = vpop.f32.mrf.mxu0
  %v3191 = vadd.f32 %v200, %v3190
  %3192 = vdwg.mxu0
  %v3193 = vxor.u32 %v3171, 2147483648
  %v3194 = vxor.u32 %v3191, 2147483648
  %v3195 = vmul.f32 %v3193, 1.442695
  %v3196 = vpow.pop %v3195
  %v3197 = vmul.f32 %v3194, 1.442695
  %v3198 = vpow.pop %v3197
  %v3199 = vadd.f32 %v3196, 1.0
  %v3200 = vadd.f32 %v3198, 1.0
  %v3201 = vrcp.pop %v3199
  %v3202 = vmul.f32 %v3199, %v3201
  %v3203 = vsub.f32 1.0, %v3202
  %v3204 = vmul.f32 %v3201, %v3203
  %v3205 = vadd.f32 %v3201, %v3204
  %vm3206 = vweird.f32 %v3199
  %vm3207 = vweird.f32 %v3201
  %vm3208 = vmor %vm3206, %vm3207
  %v3209 = vsel %vm3208, %v3201, %v3205
  %v3210 = vand.u32 2147483647, %v3199
  %vm3211 = vcmp.eq.f32.partialorder %v3210, 8.507059e+37
  %v3212 = vand.u32 %v3199, 2147483648
  %v3213 = vor.u32 1.1754944e-38, %v3212
  %v3214 = vsel %vm3211, %v3213, %v3209
  %v3215 = vmul.f32 1.0, %v3214
  %v3216 = vrcp.pop %v3200
  %v3217 = vmul.f32 %v3200, %v3216
  %v3218 = vsub.f32 1.0, %v3217
  %v3219 = vmul.f32 %v3216, %v3218
  %v3220 = vadd.f32 %v3216, %v3219
  %vm3221 = vweird.f32 %v3200
  %vm3222 = vweird.f32 %v3216
  %vm3223 = vmor %vm3221, %vm3222
  %v3224 = vsel %vm3223, %v3216, %v3220
  %v3225 = vand.u32 2147483647, %v3200
  %vm3226 = vcmp.eq.f32.partialorder %v3225, 8.507059e+37
  %v3227 = vand.u32 %v3200, 2147483648
  %v3228 = vor.u32 1.1754944e-38, %v3227
  %v3229 = vsel %vm3226, %v3228, %v3224
  %v3230 = vmul.f32 1.0, %v3229
  %v3231 = vtanh.pop %v3191
  %v3232 = vmul.f32 %v3215, %v2939
  %3234 = vrot.lane.b32.xlu0 %v3231, 64
  %v3235 = vpop.permute.xlu0 %3234
  %v3237 = vmul.f32 %v3215, %v3235
  %3239 = vrot.lane.b32.xlu0 %v3237, 64
  %v3240 = vpop.permute.xlu0 %3239
  %v3242 = vadd.f32 %v3232, %v3240
  %v3243 = vtanh.pop %v3242
  %3245 = vrot.lane.b32.xlu0 %v3243, 64
  %v3246 = vpop.permute.xlu0 %3245
  %v3248 = vmul.f32 %v3230, %v3246
  %3250 = vrot.lane.b32.xlu0 %v3147, 64
  %v3251 = vpop.permute.xlu0 %3250
  %v3253 = vsel %vm221, %v3046, %v3251
  %3254 = vmatpush.msra.mxu0 %v790
  %3255 = vmatpush.msra.mxu0 %v788
  %3256 = vmatpush.msra.mxu0 %v786
  %3257 = vmatpush.msra.mxu0 %v784
  %3258 = vmatpush.msra.mxu0 %v782
  %3259 = vmatpush.msra.mxu0 %v780
  %3260 = vmatpush.msra.mxu0 %v778
  %3261 = vmatpush.msra.mxu0 %v776
  %3262 = vmatpush.msra.mxu0 %v774
  %3263 = vmatpush.msra.mxu0 %v772
  %3264 = vmatpush.msra.mxu0 %v770
  %3265 = vmatpush.msra.mxu0 %v768
  %3266 = vmatpush.msra.mxu0 %v766
  %3267 = vmatpush.msra.mxu0 %v764
  %3268 = vmatpush.msra.mxu0 %v762
  %3269 = vmatpush.msra.mxu0 %v760
  %3270 = vmatmul.f32.gmra.mxu0 %v3253
  %v3271 = vpop.f32.mrf.mxu0
  %v3272 = vadd.f32 %v193, %v3271
  %3273 = vdwg.mxu0
  %3274 = vmatpush.msra.mxu0 %v791
  %3275 = vmatpush.msra.mxu0 %v789
  %3276 = vmatpush.msra.mxu0 %v787
  %3277 = vmatpush.msra.mxu0 %v785
  %3278 = vmatpush.msra.mxu0 %v783
  %3279 = vmatpush.msra.mxu0 %v781
  %3280 = vmatpush.msra.mxu0 %v779
  %3281 = vmatpush.msra.mxu0 %v777
  %3282 = vmatpush.msra.mxu0 %v775
  %3283 = vmatpush.msra.mxu0 %v773
  %3284 = vmatpush.msra.mxu0 %v771
  %3285 = vmatpush.msra.mxu0 %v769
  %3286 = vmatpush.msra.mxu0 %v767
  %3287 = vmatpush.msra.mxu0 %v765
  %3288 = vmatpush.msra.mxu0 %v763
  %3289 = vmatpush.msra.mxu0 %v761
  %3290 = vmatmul.f32.gmra.mxu0 %v3253
  %v3291 = vpop.f32.mrf.mxu0
  %v3292 = vadd.f32 %v194, %v3291
  %3293 = vdwg.mxu0
  %v3294 = vxor.u32 %v3272, 2147483648
  %v3295 = vxor.u32 %v3292, 2147483648
  %v3296 = vmul.f32 %v3294, 1.442695
  %v3297 = vpow.pop %v3296
  %v3298 = vmul.f32 %v3295, 1.442695
  %v3299 = vpow.pop %v3298
  %v3300 = vadd.f32 %v3297, 1.0
  %v3301 = vadd.f32 %v3299, 1.0
  %v3302 = vrcp.pop %v3300
  %v3303 = vmul.f32 %v3300, %v3302
  %v3304 = vsub.f32 1.0, %v3303
  %v3305 = vmul.f32 %v3302, %v3304
  %v3306 = vadd.f32 %v3302, %v3305
  %vm3307 = vweird.f32 %v3300
  %vm3308 = vweird.f32 %v3302
  %vm3309 = vmor %vm3307, %vm3308
  %v3310 = vsel %vm3309, %v3302, %v3306
  %v3311 = vand.u32 2147483647, %v3300
  %vm3312 = vcmp.eq.f32.partialorder %v3311, 8.507059e+37
  %v3313 = vand.u32 %v3300, 2147483648
  %v3314 = vor.u32 1.1754944e-38, %v3313
  %v3315 = vsel %vm3312, %v3314, %v3310
  %v3316 = vmul.f32 1.0, %v3315
  %v3317 = vrcp.pop %v3301
  %v3318 = vmul.f32 %v3301, %v3317
  %v3319 = vsub.f32 1.0, %v3318
  %v3320 = vmul.f32 %v3317, %v3319
  %v3321 = vadd.f32 %v3317, %v3320
  %vm3322 = vweird.f32 %v3301
  %vm3323 = vweird.f32 %v3317
  %vm3324 = vmor %vm3322, %vm3323
  %v3325 = vsel %vm3324, %v3317, %v3321
  %v3326 = vand.u32 2147483647, %v3301
  %vm3327 = vcmp.eq.f32.partialorder %v3326, 8.507059e+37
  %v3328 = vand.u32 %v3301, 2147483648
  %v3329 = vor.u32 1.1754944e-38, %v3328
  %v3330 = vsel %vm3327, %v3329, %v3325
  %v3331 = vmul.f32 1.0, %v3330
  %v3332 = vtanh.pop %v3292
  %v3333 = vmul.f32 %v3316, %v3141
  %3335 = vrot.lane.b32.xlu0 %v3332, 64
  %v3336 = vpop.permute.xlu0 %3335
  %v3338 = vmul.f32 %v3316, %v3336
  %3340 = vrot.lane.b32.xlu0 %v3338, 64
  %v3341 = vpop.permute.xlu0 %3340
  %v3343 = vadd.f32 %v3333, %v3341
  %v3344 = vtanh.pop %v3343
  %3346 = vrot.lane.b32.xlu0 %v3344, 64
  %v3347 = vpop.permute.xlu0 %3346
  %v3349 = vmul.f32 %v3331, %v3347
  %3351 = vrot.lane.b32.xlu0 %v3248, 64
  %v3352 = vpop.permute.xlu0 %3351
  %v3354 = vsel %vm221, %v3147, %v3352
  %3355 = vmatpush.msra.mxu0 %v1224
  %3356 = vmatpush.msra.mxu0 %v1222
  %3357 = vmatpush.msra.mxu0 %v1220
  %3358 = vmatpush.msra.mxu0 %v1218
  %3359 = vmatpush.msra.mxu0 %v1216
  %3360 = vmatpush.msra.mxu0 %v1214
  %3361 = vmatpush.msra.mxu0 %v1212
  %3362 = vmatpush.msra.mxu0 %v1210
  %3363 = vmatpush.msra.mxu0 %v1208
  %3364 = vmatpush.msra.mxu0 %v1206
  %3365 = vmatpush.msra.mxu0 %v1204
  %3366 = vmatpush.msra.mxu0 %v1202
  %3367 = vmatpush.msra.mxu0 %v1200
  %3368 = vmatpush.msra.mxu0 %v1198
  %3369 = vmatpush.msra.mxu0 %v1196
  %3370 = vmatpush.msra.mxu0 %v1194
  %3371 = vmatmul.f32.gmra.mxu0 %v3354
  %v3372 = vpop.f32.mrf.mxu0
  %v3373 = vadd.f32 %v199, %v3372
  %3374 = vdwg.mxu0
  %3375 = vmatpush.msra.mxu0 %v1225
  %3376 = vmatpush.msra.mxu0 %v1223
  %3377 = vmatpush.msra.mxu0 %v1221
  %3378 = vmatpush.msra.mxu0 %v1219
  %3379 = vmatpush.msra.mxu0 %v1217
  %3380 = vmatpush.msra.mxu0 %v1215
  %3381 = vmatpush.msra.mxu0 %v1213
  %3382 = vmatpush.msra.mxu0 %v1211
  %3383 = vmatpush.msra.mxu0 %v1209
  %3384 = vmatpush.msra.mxu0 %v1207
  %3385 = vmatpush.msra.mxu0 %v1205
  %3386 = vmatpush.msra.mxu0 %v1203
  %3387 = vmatpush.msra.mxu0 %v1201
  %3388 = vmatpush.msra.mxu0 %v1199
  %3389 = vmatpush.msra.mxu0 %v1197
  %3390 = vmatpush.msra.mxu0 %v1195
  %3391 = vmatmul.f32.gmra.mxu0 %v3354
  %v3392 = vpop.f32.mrf.mxu0
  %v3393 = vadd.f32 %v200, %v3392
  %3394 = vdwg.mxu0
  %v3395 = vxor.u32 %v3373, 2147483648
  %v3396 = vxor.u32 %v3393, 2147483648
  %v3397 = vmul.f32 %v3395, 1.442695
  %v3398 = vpow.pop %v3397
  %v3399 = vmul.f32 %v3396, 1.442695
  %v3400 = vpow.pop %v3399
  %v3401 = vadd.f32 %v3398, 1.0
  %v3402 = vadd.f32 %v3400, 1.0
  %v3403 = vrcp.pop %v3401
  %v3404 = vmul.f32 %v3401, %v3403
  %v3405 = vsub.f32 1.0, %v3404
  %v3406 = vmul.f32 %v3403, %v3405
  %v3407 = vadd.f32 %v3403, %v3406
  %vm3408 = vweird.f32 %v3401
  %vm3409 = vweird.f32 %v3403
  %vm3410 = vmor %vm3408, %vm3409
  %v3411 = vsel %vm3410, %v3403, %v3407
  %v3412 = vand.u32 2147483647, %v3401
  %vm3413 = vcmp.eq.f32.partialorder %v3412, 8.507059e+37
  %v3414 = vand.u32 %v3401, 2147483648
  %v3415 = vor.u32 1.1754944e-38, %v3414
  %v3416 = vsel %vm3413, %v3415, %v3411
  %v3417 = vmul.f32 1.0, %v3416
  %v3418 = vrcp.pop %v3402
  %v3419 = vmul.f32 %v3402, %v3418
  %v3420 = vsub.f32 1.0, %v3419
  %v3421 = vmul.f32 %v3418, %v3420
  %v3422 = vadd.f32 %v3418, %v3421
  %vm3423 = vweird.f32 %v3402
  %vm3424 = vweird.f32 %v3418
  %vm3425 = vmor %vm3423, %vm3424
  %v3426 = vsel %vm3425, %v3418, %v3422
  %v3427 = vand.u32 2147483647, %v3402
  %vm3428 = vcmp.eq.f32.partialorder %v3427, 8.507059e+37
  %v3429 = vand.u32 %v3402, 2147483648
  %v3430 = vor.u32 1.1754944e-38, %v3429
  %v3431 = vsel %vm3428, %v3430, %v3426
  %v3432 = vmul.f32 1.0, %v3431
  %v3433 = vtanh.pop %v3393
  %v3434 = vmul.f32 %v3417, %v3242
  %3436 = vrot.lane.b32.xlu0 %v3433, 64
  %v3437 = vpop.permute.xlu0 %3436
  %v3439 = vmul.f32 %v3417, %v3437
  %3441 = vrot.lane.b32.xlu0 %v3439, 64
  %v3442 = vpop.permute.xlu0 %3441
  %v3444 = vadd.f32 %v3434, %v3442
  %v3445 = vtanh.pop %v3444
  %3447 = vrot.lane.b32.xlu0 %v3445, 64
  %v3448 = vpop.permute.xlu0 %3447
  %v3450 = vmul.f32 %v3432, %v3448
  %3452 = vrot.lane.b32.xlu0 %v3450, 64
  %v3453 = vpop.permute.xlu0 %3452
  %v3455 = vsel %vm221, %v3349, %v3453
  %3456 = vmatpush.msra.mxu0 %v1224
  %3457 = vmatpush.msra.mxu0 %v1222
  %3458 = vmatpush.msra.mxu0 %v1220
  %3459 = vmatpush.msra.mxu0 %v1218
  %3460 = vmatpush.msra.mxu0 %v1216
  %3461 = vmatpush.msra.mxu0 %v1214
  %3462 = vmatpush.msra.mxu0 %v1212
  %3463 = vmatpush.msra.mxu0 %v1210
  %3464 = vmatpush.msra.mxu0 %v1208
  %3465 = vmatpush.msra.mxu0 %v1206
  %3466 = vmatpush.msra.mxu0 %v1204
  %3467 = vmatpush.msra.mxu0 %v1202
  %3468 = vmatpush.msra.mxu0 %v1200
  %3469 = vmatpush.msra.mxu0 %v1198
  %3470 = vmatpush.msra.mxu0 %v1196
  %3471 = vmatpush.msra.mxu0 %v1194
  %3472 = vmatmul.f32.gmra.mxu0 %v3455
  %v3473 = vpop.f32.mrf.mxu0
  %v3474 = vadd.f32 %v199, %v3473
  %3475 = vdwg.mxu0
  %3476 = vmatpush.msra.mxu0 %v1225
  %3477 = vmatpush.msra.mxu0 %v1223
  %3478 = vmatpush.msra.mxu0 %v1221
  %3479 = vmatpush.msra.mxu0 %v1219
  %3480 = vmatpush.msra.mxu0 %v1217
  %3481 = vmatpush.msra.mxu0 %v1215
  %3482 = vmatpush.msra.mxu0 %v1213
  %3483 = vmatpush.msra.mxu0 %v1211
  %3484 = vmatpush.msra.mxu0 %v1209
  %3485 = vmatpush.msra.mxu0 %v1207
  %3486 = vmatpush.msra.mxu0 %v1205
  %3487 = vmatpush.msra.mxu0 %v1203
  %3488 = vmatpush.msra.mxu0 %v1201
  %3489 = vmatpush.msra.mxu0 %v1199
  %3490 = vmatpush.msra.mxu0 %v1197
  %3491 = vmatpush.msra.mxu0 %v1195
  %3492 = vmatmul.f32.gmra.mxu0 %v3455
  %v3493 = vpop.f32.mrf.mxu0
  %v3494 = vadd.f32 %v200, %v3493
  %3495 = vdwg.mxu0
  %v3496 = vxor.u32 %v3474, 2147483648
  %v3497 = vxor.u32 %v3494, 2147483648
  %v3498 = vmul.f32 %v3496, 1.442695
  %v3499 = vpow.pop %v3498
  %v3500 = vmul.f32 %v3497, 1.442695
  %v3501 = vpow.pop %v3500
  %v3502 = vadd.f32 %v3499, 1.0
  %v3503 = vadd.f32 %v3501, 1.0
  %v3504 = vrcp.pop %v3502
  %v3505 = vmul.f32 %v3502, %v3504
  %v3506 = vsub.f32 1.0, %v3505
  %v3507 = vmul.f32 %v3504, %v3506
  %v3508 = vadd.f32 %v3504, %v3507
  %vm3509 = vweird.f32 %v3502
  %vm3510 = vweird.f32 %v3504
  %vm3511 = vmor %vm3509, %vm3510
  %v3512 = vsel %vm3511, %v3504, %v3508
  %v3513 = vand.u32 2147483647, %v3502
  %vm3514 = vcmp.eq.f32.partialorder %v3513, 8.507059e+37
  %v3515 = vand.u32 %v3502, 2147483648
  %v3516 = vor.u32 1.1754944e-38, %v3515
  %v3517 = vsel %vm3514, %v3516, %v3512
  %v3518 = vmul.f32 1.0, %v3517
  %v3519 = vrcp.pop %v3503
  %v3520 = vmul.f32 %v3503, %v3519
  %v3521 = vsub.f32 1.0, %v3520
  %v3522 = vmul.f32 %v3519, %v3521
  %v3523 = vadd.f32 %v3519, %v3522
  %vm3524 = vweird.f32 %v3503
  %vm3525 = vweird.f32 %v3519
  %vm3526 = vmor %vm3524, %vm3525
  %v3527 = vsel %vm3526, %v3519, %v3523
  %v3528 = vand.u32 2147483647, %v3503
  %vm3529 = vcmp.eq.f32.partialorder %v3528, 8.507059e+37
  %v3530 = vand.u32 %v3503, 2147483648
  %v3531 = vor.u32 1.1754944e-38, %v3530
  %v3532 = vsel %vm3529, %v3531, %v3527
  %v3533 = vmul.f32 1.0, %v3532
  %v3534 = vtanh.pop %v3494
  %v3535 = vmul.f32 %v3518, %v3444
  %3537 = vrot.lane.b32.xlu0 %v3534, 64
  %v3538 = vpop.permute.xlu0 %3537
  %v3540 = vmul.f32 %v3518, %v3538
  %3542 = vrot.lane.b32.xlu0 %v3540, 64
  %v3543 = vpop.permute.xlu0 %3542
  %v3545 = vadd.f32 %v3535, %v3543
  %v3546 = vtanh.pop %v3545
  %3548 = vrot.lane.b32.xlu0 %v3546, 64
  %v3549 = vpop.permute.xlu0 %3548
  %v3551 = vmul.f32 %v3533, %v3549
  %v3552 = vld [vmem:[%s10] sm:$0xff]
  %v3553 = vld [vmem:[%s10 + $0x8] sm:$0xff]
  %v3554 = vld [vmem:[%s10 + $0x10] sm:$0xff]
  %v3555 = vld [vmem:[%s10 + $0x18] sm:$0xff]
  %v3556 = vld [vmem:[%s10 + $0x20] sm:$0xff]
  %v3557 = vld [vmem:[%s10 + $0x28] sm:$0xff]
  %v3558 = vld [vmem:[%s10 + $0x30] sm:$0xff]
  %v3559 = vld [vmem:[%s10 + $0x38] sm:$0xff]
  %v3560 = vld [vmem:[%s11] sm:$0x1]
  %v3562 = vperm.slane %v3560, 0
  %v3565 = vsel %vm221, %v3551, 0
  %3567 = vmatpush.msra.mxu0 0.0
  %3568 = vmatpush.msra.mxu0 0.0
  %3569 = vmatpush.msra.mxu0 0.0
  %3570 = vmatpush.msra.mxu0 0.0
  %3571 = vmatpush.msra.mxu0 0.0
  %3572 = vmatpush.msra.mxu0 0.0
  %3573 = vmatpush.msra.mxu0 0.0
  %3574 = vmatpush.msra.mxu0 0.0
  %3575 = vmatpush.msra.mxu0 %v3559
  %3576 = vmatpush.msra.mxu0 %v3558
  %3577 = vmatpush.msra.mxu0 %v3557
  %3578 = vmatpush.msra.mxu0 %v3556
  %3579 = vmatpush.msra.mxu0 %v3555
  %3580 = vmatpush.msra.mxu0 %v3554
  %3581 = vmatpush.msra.mxu0 %v3553
  %3582 = vmatpush.msra.mxu0 %v3552
  %3583 = vmatmul.f32.gmra.mxu0 %v3565
  %v3584 = vpop.f32.mrf.mxu0
  %v3585 = vadd.f32 %v3562, %v3584
  %3586 = vdwg.mxu0
  %3587 = vst [vmem:[%s12] sm:$0xff] %v3585
  // Predicated region
  $region50: #{_lstm_model_forward.1} parent=0 // pred_check
    _
  $region51: #{_lstm_model_forward.1} parent=0 // pred_check_branch
    %3589 = sbr.rel (0) target = $region53
  $region52: #{_lstm_model_forward.1} parent=0 // pred_region
    _
  $region53: #{_lstm_model_forward.1} parent=0 // pred_fallthru
    _
  // Predicated region
  $region54: #{_lstm_model_forward.1} parent=0 // pred_check
    _
  $region55: #{_lstm_model_forward.1} parent=0 // pred_check_branch
    %3591 = sbr.rel (0) target = $region57
  $region56: #{_lstm_model_forward.1} parent=0 // pred_region
    _
  $region57: #{_lstm_model_forward.1} parent=0 // pred_fallthru
    _

</llo_original>
